<compile_context>
chip_gen: v7x
topology: tpu7x:2x2x1
jax: 0.10.0
libtpu: 0.0.40
codegen_flags: <defaults>
</compile_context>

<pallas_src>
import jax
import jax.numpy as jnp
from jax.experimental import pallas as pl
from jax.experimental.pallas import tpu as pltpu

# ---------------- small synthetic configuration ----------------
IMG_SIZE = 16
PATCH = 8
IN_CHANS = 4
EMBED_DIM = 32
DEPTH = 4
NUM_HEADS = 4
MLP_RATIO = 4
ADAPTER_DIM = 8            # tuning_config.ffn_num
ADAPTER_SCALE = 0.1        # tuning_config.ffn_adapter_scalar
SELECT_OPEN = True         # select_config.open
KEEP_LAYERS = 2            # select_config.keep_layers
OUT_INDICES = (0, 1, 2, 3)
TOKEN_TARGET = 0.5
TOKEN_LOSS_RATIO = 2.0
TOKEN_MINIMAL = 0.1
TOKEN_MINIMAL_WEIGHT = 1.0
LN_EPS = 1e-6

CDT = jnp.bfloat16                 # matmul-operand dtype (accumulation stays f32)
VMEM_LIMIT = 32 * 1024 * 1024      # explicit scoped-VMEM budget (safe on v5e/v6e/v7x)


# ---------------- in-kernel helpers (traced inside Pallas bodies) ----------------
def _layernorm(x, w, b, eps=LN_EPS):
    mu = jnp.mean(x, axis=-1, keepdims=True)
    xc = x - mu
    var = jnp.mean(xc * xc, axis=-1, keepdims=True)
    return xc * jax.lax.rsqrt(var + eps) * w + b


def _gelu(x):
    # TODO(synk): nn.GELU defaults to exact erf; tanh approximation used for safe Mosaic lowering.
    return jax.nn.gelu(x, approximate=True)


# ---------------- generic fused linear (+optional GELU) kernel, M-tiled ----------------
def _make_linear_kernel(act):
    def kernel(x_ref, w_ref, b_ref, o_ref):
        y = jnp.dot(x_ref[...].astype(CDT), w_ref[...].astype(CDT),
                    preferred_element_type=jnp.float32)
        y = y + b_ref[...]
        if act == "gelu":
            y = _gelu(y)
        o_ref[...] = y.astype(o_ref.dtype)
    return kernel


def pallas_linear(x, w, b, act=None, tile_m=512):
    """x: (M, K) f32, w: (K, N) bf16, b: (1, N) f32 -> (M, N) f32."""
    M, K = x.shape
    N = w.shape[1]
    tm = M if M <= tile_m else tile_m           # tile_m multiple of 8; last block may be partial
    return pl.pallas_call(
        _make_linear_kernel(act),
        grid=(pl.cdiv(M, tm),),
        in_specs=[pl.BlockSpec((tm, K), lambda i: (i, 0)),
                  pl.BlockSpec((K, N), lambda i: (0, 0)),
                  pl.BlockSpec((1, N), lambda i: (0, 0))],
        out_specs=pl.BlockSpec((tm, N), lambda i: (i, 0)),
        out_shape=jax.ShapeDtypeStruct((M, N), jnp.float32),
        compiler_params=pltpu.CompilerParams(
            dimension_semantics=("parallel",),
            vmem_limit_bytes=VMEM_LIMIT),
    )(x, w, b)


# ---------------- fused depth-grid transformer kernel ----------------
_BLOCK_PARAM_NAMES = ("n1w", "n1b", "qkvw", "qkvb", "projw", "projb",
                      "n2w", "n2b", "fc1w", "fc1b", "fc2w", "fc2b",
                      "adw", "adb", "auw", "aub", "tsw", "tsb")


def _make_fused_blocks_kernel(B, N, D, num_heads):
    BN = B * N
    hd = D // num_heads
    scale = float(hd) ** -0.5

    def kernel(x_ref,
               n1w, n1b, qkvw, qkvb, projw, projb,
               n2w, n2b, fc1w, fc1b, fc2w, fc2b,
               adw, adb, auw, aub, tsw, tsb,
               feat_ref, ts_ref, xs_ref):
        layer = pl.program_id(0)

        # Activations live in VMEM scratch across all depth steps; load input once.
        @pl.when(layer == 0)
        def _():
            xs_ref[...] = x_ref[...]

        x = xs_ref[...]                                         # (BN, D) f32

        # ----- attention branch: x + proj(MHSA(LN1(x))) -----
        h = _layernorm(x, n1w[0], n1b[0])
        qkv = jnp.dot(h.astype(CDT), qkvw[0],                    # ONE wide QKV matmul
                      preferred_element_type=jnp.float32) + qkvb[0]   # (BN, 3D)

        rows_out = []
        for b in range(B):                                      # tiny static loops: N=5, hd=8
            qkv_b = qkv[b * N:(b + 1) * N, :]                   # (N, 3D)
            head_outs = []
            for hh in range(num_heads):
                q = qkv_b[:, hh * hd:(hh + 1) * hd] * scale
                k = qkv_b[:, D + hh * hd:D + (hh + 1) * hd]
                v = qkv_b[:, 2 * D + hh * hd:2 * D + (hh + 1) * hd]
                att = jnp.dot(q, k.T, preferred_element_type=jnp.float32)
                att = att - jnp.max(att, axis=-1, keepdims=True)
                p = jnp.exp(att)
                p = p * pl.reciprocal(jnp.sum(p, axis=-1, keepdims=True), approx=True)
                head_outs.append(jnp.dot(p, v, preferred_element_type=jnp.float32))
            rows_out.append(jnp.concatenate(head_outs, axis=-1))        # (N, D)
        o = jnp.concatenate(rows_out, axis=0)                           # (BN, D)
        attn = jnp.dot(o.astype(CDT), projw[0],                  # ONE output projection
                       preferred_element_type=jnp.float32) + projb[0]
        x = x + attn

        # ----- token select: VPU multiply-reduce (no (D,1) matmul) -----
        # TODO(synk): TokenSelect class body not given; hard-sigmoid threshold gating the
        #             MLP branch at inference is assumed.
        logits = jnp.sum(x * tsw[0], axis=-1, keepdims=True) + tsb[0]   # (BN, 1)
        sel = (logits >= 0.0).astype(jnp.float32)
        gate = (layer >= KEEP_LAYERS).astype(jnp.float32) if SELECT_OPEN else 0.0
        sel_eff = gate * sel + (1.0 - gate)                     # identity gate for keep-layers

        # ----- AdaptFormer adapter (down-ReLU-up, scaled, add_residual=False) -----
        down = jnp.maximum(
            jnp.dot(x.astype(CDT), adw[0], preferred_element_type=jnp.float32) + adb[0], 0.0)
        adapt = (jnp.dot(down.astype(CDT), auw[0],
                         preferred_element_type=jnp.float32) + aub[0]) * ADAPTER_SCALE

        # ----- MLP branch, gated by token select -----
        h2 = _layernorm(x, n2w[0], n2b[0])
        m = _gelu(jnp.dot(h2.astype(CDT), fc1w[0],
                          preferred_element_type=jnp.float32) + fc1b[0])
        m = jnp.dot(m.astype(CDT), fc2w[0],
                    preferred_element_type=jnp.float32) + fc2b[0]
        m = sel_eff * m

        x_new = x + m + adapt
        xs_ref[...] = x_new                                     # carry to next layer
        feat_ref[0] = x_new.astype(feat_ref.dtype)              # per-layer feature writeback

        # lane-dense (BN, 128) slab: lane 0 = logits, lane 1 = hard select mask
        lane = jax.lax.broadcasted_iota(jnp.int32, (BN, 128), 1)
        ts_tile = jnp.where(lane == 0, logits, 0.0) + jnp.where(lane == 1, sel, 0.0)
        ts_ref[0] = ts_tile.astype(ts_ref.dtype)

    return kernel


def run_blocks(xseq, blk):
    B, N, D = xseq.shape
    BN = B * N
    L = DEPTH
    xflat = xseq.reshape(BN, D)
    args = [blk[n] for n in _BLOCK_PARAM_NAMES]    # all stacked (L, a, b) arrays

    in_specs = [pl.BlockSpec((BN, D), lambda l: (0, 0))]        # resident across layers
    for a in args:
        in_specs.append(pl.BlockSpec((1,) + tuple(a.shape[1:]), lambda l: (l, 0, 0)))

    out_shape = (jax.ShapeDtypeStruct((L, BN, D), jnp.float32),
                 jax.ShapeDtypeStruct((L, BN, 128), jnp.float32))
    out_specs = (pl.BlockSpec((1, BN, D), lambda l: (l, 0, 0)),
                 pl.BlockSpec((1, BN, 128), lambda l: (l, 0, 0)))

    return pl.pallas_call(
        _make_fused_blocks_kernel(B, N, D, NUM_HEADS),
        grid=(L,),
        in_specs=in_specs,
        out_specs=out_specs,
        out_shape=out_shape,
        scratch_shapes=[pltpu.VMEM((BN, D), jnp.float32)],
        compiler_params=pltpu.CompilerParams(
            dimension_semantics=("arbitrary",),     # sequential: activations carried in scratch
            vmem_limit_bytes=VMEM_LIMIT),
    )(xflat, *args)


# ---------------- FPN pieces ----------------
def conv_transpose2x2(x, w2, b2, act=None):
    """ConvTranspose2d(k=2, s=2). x: (B, C_in, H, W); w2: (C_in, 4*C_out), cols = (kh, kw, cout)."""
    B, Din, H, W = x.shape
    Dout = w2.shape[1] // 4
    xm = jnp.transpose(x, (0, 2, 3, 1)).reshape(B * H * W, Din)
    y = pallas_linear(xm, w2, b2, act=act)                      # (B*H*W, 4*Dout), lane-dense 128
    y = y.reshape(B, H, W, 2, 2, Dout)
    y = jnp.transpose(y, (0, 5, 1, 3, 2, 4)).reshape(B, Dout, 2 * H, 2 * W)
    return y


def maxpool2x2(x):
    B, D, H, W = x.shape
    return x.reshape(B, D, H // 2, 2, W // 2, 2).max(axis=(3, 5))


def ada_token_loss(token_select):
    token_mean = token_select.mean()
    flops_loss = (token_mean - TOKEN_TARGET) ** 2
    tm = token_select.mean(-1)
    minimal_loss = jnp.maximum(TOKEN_MINIMAL - tm, 0.0).sum()
    return TOKEN_LOSS_RATIO * (flops_loss + TOKEN_MINIMAL_WEIGHT * minimal_loss)


# ---------------- parameters (deterministic synthetic init, matmul-ready layouts) ----------------
def init_params(key):
    D, P, C = EMBED_DIM, PATCH, IN_CHANS
    Dh = int(D * MLP_RATIO)
    r = ADAPTER_DIM
    L = DEPTH
    n_patches = (IMG_SIZE // P) ** 2
    N = n_patches + 1
    f32 = jnp.float32

    keys = jax.random.split(key, 12)

    def tn(k, shape, std=0.02):
        return (jax.random.normal(k, shape, f32) * std).astype(f32)

    params = {
        "patch_w": tn(keys[0], (C * P * P, D)).astype(CDT),
        "patch_b": jnp.zeros((1, D), f32),
        "cls_token": tn(keys[1], (1, 1, D), std=1e-6),
        "pos_embed": tn(keys[2], (1, N, D), std=0.02),
    }

    bk = jax.random.split(keys[3], 7)
    if SELECT_OPEN:
        sel_mask = (jnp.arange(L) >= KEEP_LAYERS).astype(f32)[:, None, None]
    else:
        sel_mask = jnp.zeros((L, 1, 1), f32)
    blk = dict(
        n1w=jnp.ones((L, 1, D), f32), n1b=jnp.zeros((L, 1, D), f32),
        qkvw=tn(bk[0], (L, D, 3 * D)).astype(CDT), qkvb=jnp.zeros((L, 1, 3 * D), f32),
        projw=tn(bk[1], (L, D, D)).astype(CDT), projb=jnp.zeros((L, 1, D), f32),
        n2w=jnp.ones((L, 1, D), f32), n2b=jnp.zeros((L, 1, D), f32),
        fc1w=tn(bk[2], (L, D, Dh)).astype(CDT), fc1b=jnp.zeros((L, 1, Dh), f32),
        fc2w=tn(bk[3], (L, Dh, D)).astype(CDT), fc2b=jnp.zeros((L, 1, D), f32),
        adw=tn(bk[4], (L, D, r)).astype(CDT), adb=jnp.zeros((L, 1, r), f32),
        auw=tn(bk[5], (L, r, D)).astype(CDT), aub=jnp.zeros((L, 1, D), f32),
        tsw=tn(bk[6], (L, 1, D)) * sel_mask, tsb=jnp.zeros((L, 1, 1), f32),
    )
    params["blk"] = blk

    # FPN ConvTranspose2d(k=2,s=2) weights pre-reshaped to (C_in, 4*C_out), cols = (kh, kw, cout)
    params["fpn1_w1"] = tn(keys[4], (D, 4 * D)).astype(CDT)
    params["fpn1_b1"] = jnp.zeros((1, 4 * D), f32)
    params["fpn1_w2"] = tn(keys[5], (D, 4 * D)).astype(CDT)
    params["fpn1_b2"] = jnp.zeros((1, 4 * D), f32)
    params["fpn2_w"] = tn(keys[6], (D, 4 * D)).astype(CDT)
    params["fpn2_b"] = jnp.zeros((1, 4 * D), f32)
    return params


# ---------------- VisionTransformer21K forward ----------------
def vit21k_forward(x, params):
    B, C, Himg, Wimg = x.shape
    P, D = PATCH, EMBED_DIM
    Hp, Wp = Himg // P, Wimg // P
    Np = Hp * Wp
    N = Np + 1

    # patch embed: conv(k=P, s=P)  ==  flatten patches (c, kh, kw) then project
    patches = x.reshape(B, C, Hp, P, Wp, P).transpose(0, 2, 4, 1, 3, 5).reshape(B * Np, C * P * P)
    tok = pallas_linear(patches, params["patch_w"], params["patch_b"]).reshape(B, Np, D)

    cls = jnp.broadcast_to(params["cls_token"], (B, 1, D))
    xseq = jnp.concatenate([cls, tok], axis=1) + params["pos_embed"]

    # all transformer blocks in one fused depth-grid kernel
    feat_all, ts_all = run_blocks(xseq, params["blk"])
    feat_all = feat_all.reshape(DEPTH, B, N, D)

    features = []
    for i in OUT_INDICES:
        xp = jnp.transpose(feat_all[i][:, 1:, :], (0, 2, 1)).reshape(B, D, Hp, Wp)
        features.append(xp)

    log_all = ts_all[:, :, 0].reshape(DEPTH, B, N)
    sel_all = ts_all[:, :, 1].reshape(DEPTH, B, N)
    token_select = jnp.transpose(sel_all[KEEP_LAYERS:], (1, 0, 2))[:, :, 1:, None]
    token_logits = jnp.transpose(log_all[KEEP_LAYERS:], (1, 0, 2))[..., None]

    # FPN heads (ops = [fpn1, fpn2, fpn3, fpn4])
    f0 = conv_transpose2x2(features[0], params["fpn1_w1"], params["fpn1_b1"], act="gelu")
    f0 = conv_transpose2x2(f0, params["fpn1_w2"], params["fpn1_b2"])
    f1 = conv_transpose2x2(features[1], params["fpn2_w"], params["fpn2_b"])
    f2 = features[2]
    f3 = maxpool2x2(features[3])

    loss = ada_token_loss(token_select)
    return (f0, f1, f2, f3), dict(token_select=token_select, token_logits=token_logits, loss=loss)


if __name__ == "__main__":
    key = jax.random.PRNGKey(0)
    kx, kp = jax.random.split(key)
    x = jax.random.normal(kx, (2, IN_CHANS, IMG_SIZE, IMG_SIZE), dtype=jnp.float32)
    params = init_params(kp)

    fwd = jax.jit(vit21k_forward)
    feats, aux = fwd(x, params)
    jax.block_until_ready((feats, aux))

    # sanity on shapes implied by the PyTorch module
    assert feats[0].shape == (2, EMBED_DIM, 8, 8)
    assert feats[1].shape == (2, EMBED_DIM, 4, 4)
    assert feats[2].shape == (2, EMBED_DIM, 2, 2)
    assert feats[3].shape == (2, EMBED_DIM, 1, 1)
    assert aux["token_select"].shape == (2, DEPTH - KEEP_LAYERS, 4, 1)
    assert aux["token_logits"].shape == (2, DEPTH - KEEP_LAYERS, 5, 1)
    assert bool(jnp.isfinite(aux["loss"]))
    print("KERNEL_OK")
</pallas_src>

<mosaic_0001>
module attributes {stable_mosaic.version = 11 : i64} {
  func.func @kernel(%arg0: i32, %arg1: memref<8x256xf32, #tpu.memory_space<vmem>>, %arg2: memref<256x32xbf16, #tpu.memory_space<vmem>>, %arg3: memref<1x32xf32, #tpu.memory_space<vmem>>, %arg4: memref<8x32xf32, #tpu.memory_space<vmem>>) attributes {dimension_semantics = [#tpu.dimension_semantics<parallel>], iteration_bounds = array<i64: 1>, scalar_prefetch = 0 : i64, scratch_operands = 0 : i64, tpu.core_type = #tpu.core_type<tc>, window_params = [{transform_indices = @transform_0, window_bounds = array<i64: 8, 256>}, {pipeline_mode = #tpu.pipeline_mode<synchronous>, transform_indices = @transform_1, window_bounds = array<i64: 256, 32>}, {pipeline_mode = #tpu.pipeline_mode<synchronous>, transform_indices = @transform_2, window_bounds = array<i64: 1, 32>}, {transform_indices = @transform_3, window_bounds = array<i64: 8, 32>}]} {
    %c0 = arith.constant 0 : index
    %c0_0 = arith.constant 0 : index
    %0 = vector.load %arg1[%c0, %c0_0] : memref<8x256xf32, #tpu.memory_space<vmem>>, vector<8x256xf32>
    %1 = arith.truncf %0 : vector<8x256xf32> to vector<8x256xbf16>
    %c0_1 = arith.constant 0 : index
    %c0_2 = arith.constant 0 : index
    %2 = vector.load %arg2[%c0_1, %c0_2] : memref<256x32xbf16, #tpu.memory_space<vmem>>, vector<256x32xbf16>
    %cst = arith.constant dense<0.000000e+00> : vector<8x32xf32>
    %3 = tpu.matmul %1, %2, %cst {dimension_numbers = #tpu.dot_dimension_numbers<[1], [0], [0], [1], [0, 0, 1, 1], [], []>} : vector<8x256xbf16>, vector<256x32xbf16>, vector<8x32xf32> -> vector<8x32xf32>
    %c0_3 = arith.constant 0 : index
    %c0_4 = arith.constant 0 : index
    %4 = vector.load %arg3[%c0_3, %c0_4] : memref<1x32xf32, #tpu.memory_space<vmem>>, vector<1x32xf32>
    %5 = vector.broadcast %4 : vector<1x32xf32> to vector<8x32xf32>
    %6 = arith.addf %3, %5 : vector<8x32xf32>
    %c0_5 = arith.constant 0 : index
    %c0_6 = arith.constant 0 : index
    %7 = vector.load %arg4[%c0_5, %c0_6] : memref<8x32xf32, #tpu.memory_space<vmem>>, vector<8x32xf32>
    tpu.vector_store %arg4[%c0_5, %c0_6], %6 {strides = array<i32>} : memref<8x32xf32, #tpu.memory_space<vmem>>, vector<8x32xf32>,
    return
  }
  func.func @transform_0(%arg0: i32) -> (i32, i32) {
    %c0_i32 = arith.constant 0 : i32
    %c0_i32_0 = arith.constant 0 : i32
    return %arg0, %c0_i32 : i32, i32
  }
  func.func @transform_1(%arg0: i32) -> (i32, i32) {
    %c0_i32 = arith.constant 0 : i32
    %c0_i32_0 = arith.constant 0 : i32
    %c0_i32_1 = arith.constant 0 : i32
    return %c0_i32, %c0_i32_0 : i32, i32
  }
  func.func @transform_2(%arg0: i32) -> (i32, i32) {
    %c0_i32 = arith.constant 0 : i32
    %c0_i32_0 = arith.constant 0 : i32
    %c0_i32_1 = arith.constant 0 : i32
    return %c0_i32, %c0_i32_0 : i32, i32
  }
  func.func @transform_3(%arg0: i32) -> (i32, i32) {
    %c0_i32 = arith.constant 0 : i32
    %c0_i32_0 = arith.constant 0 : i32
    return %arg0, %c0_i32 : i32, i32
  }
}

module attributes {stable_mosaic.version = 11 : i64} {
  func.func @kernel(%arg0: i32, %arg1: memref<10x32xf32, #tpu.memory_space<vmem>>, %arg2: memref<1x1x32xf32, #tpu.memory_space<vmem>>, %arg3: memref<1x1x32xf32, #tpu.memory_space<vmem>>, %arg4: memref<1x32x96xbf16, #tpu.memory_space<vmem>>, %arg5: memref<1x1x96xf32, #tpu.memory_space<vmem>>, %arg6: memref<1x32x32xbf16, #tpu.memory_space<vmem>>, %arg7: memref<1x1x32xf32, #tpu.memory_space<vmem>>, %arg8: memref<1x1x32xf32, #tpu.memory_space<vmem>>, %arg9: memref<1x1x32xf32, #tpu.memory_space<vmem>>, %arg10: memref<1x32x128xbf16, #tpu.memory_space<vmem>>, %arg11: memref<1x1x128xf32, #tpu.memory_space<vmem>>, %arg12: memref<1x128x32xbf16, #tpu.memory_space<vmem>>, %arg13: memref<1x1x32xf32, #tpu.memory_space<vmem>>, %arg14: memref<1x32x8xbf16, #tpu.memory_space<vmem>>, %arg15: memref<1x1x8xf32, #tpu.memory_space<vmem>>, %arg16: memref<1x8x32xbf16, #tpu.memory_space<vmem>>, %arg17: memref<1x1x32xf32, #tpu.memory_space<vmem>>, %arg18: memref<1x1x32xf32, #tpu.memory_space<vmem>>, %arg19: memref<1x1x1xf32, #tpu.memory_space<vmem>>, %arg20: memref<1x10x32xf32, #tpu.memory_space<vmem>>, %arg21: memref<1x10x128xf32, #tpu.memory_space<vmem>>, %arg22: memref<10x32xf32, #tpu.memory_space<vmem>>) attributes {dimension_semantics = [#tpu.dimension_semantics<arbitrary>], iteration_bounds = array<i64: 4>, scalar_prefetch = 0 : i64, scratch_operands = 1 : i64, tpu.core_type = #tpu.core_type<tc>, window_params = [{pipeline_mode = #tpu.pipeline_mode<synchronous>, transform_indices = @transform_0, window_bounds = array<i64: 10, 32>}, {transform_indices = @transform_1, window_bounds = array<i64: 1, 1, 32>}, {transform_indices = @transform_2, window_bounds = array<i64: 1, 1, 32>}, {transform_indices = @transform_3, window_bounds = array<i64: 1, 32, 96>}, {transform_indices = @transform_4, window_bounds = array<i64: 1, 1, 96>}, {transform_indices = @transform_5, window_bounds = array<i64: 1, 32, 32>}, {transform_indices = @transform_6, window_bounds = array<i64: 1, 1, 32>}, {transform_indices = @transform_7, window_bounds = array<i64: 1, 1, 32>}, {transform_indices = @transform_8, window_bounds = array<i64: 1, 1, 32>}, {transform_indices = @transform_9, window_bounds = array<i64: 1, 32, 128>}, {transform_indices = @transform_10, window_bounds = array<i64: 1, 1, 128>}, {transform_indices = @transform_11, window_bounds = array<i64: 1, 128, 32>}, {transform_indices = @transform_12, window_bounds = array<i64: 1, 1, 32>}, {transform_indices = @transform_13, window_bounds = array<i64: 1, 32, 8>}, {transform_indices = @transform_14, window_bounds = array<i64: 1, 1, 8>}, {transform_indices = @transform_15, window_bounds = array<i64: 1, 8, 32>}, {transform_indices = @transform_16, window_bounds = array<i64: 1, 1, 32>}, {transform_indices = @transform_17, window_bounds = array<i64: 1, 1, 32>}, {transform_indices = @transform_18, window_bounds = array<i64: 1, 1, 1>}, {transform_indices = @transform_19, window_bounds = array<i64: 1, 10, 32>}, {transform_indices = @transform_20, window_bounds = array<i64: 1, 10, 128>}]} {
    %c0_i32 = arith.constant 0 : i32
    %0 = arith.cmpi eq, %arg0, %c0_i32 : i32
    %1 = arith.extui %0 : i1 to i32
    %c0_i32_0 = arith.constant 0 : i32
    %2 = arith.cmpi ne, %1, %c0_i32_0 : i32
    scf.if %2 {
      %c0_131 = arith.constant 0 : index
      %c0_132 = arith.constant 0 : index
      %314 = vector.load %arg1[%c0_131, %c0_132] : memref<10x32xf32, #tpu.memory_space<vmem>>, vector<10x32xf32>
      %c0_133 = arith.constant 0 : index
      %c0_134 = arith.constant 0 : index
      %315 = vector.load %arg22[%c0_133, %c0_134] : memref<10x32xf32, #tpu.memory_space<vmem>>, vector<10x32xf32>
      tpu.vector_store %arg22[%c0_133, %c0_134], %314 {strides = array<i32>} : memref<10x32xf32, #tpu.memory_space<vmem>>, vector<10x32xf32>,
    } else {
    }
    %c0 = arith.constant 0 : index
    %c0_1 = arith.constant 0 : index
    %3 = vector.load %arg22[%c0, %c0_1] : memref<10x32xf32, #tpu.memory_space<vmem>>, vector<10x32xf32>
    %c0_2 = arith.constant 0 : index
    %c0_3 = arith.constant 0 : index
    %c0_4 = arith.constant 0 : index
    %4 = vector.load %arg2[%c0_2, %c0_3, %c0_4] : memref<1x1x32xf32, #tpu.memory_space<vmem>>, vector<1x1x32xf32>
    %5 = vector.shape_cast %4 : vector<1x1x32xf32> to vector<1x32xf32>
    %c0_5 = arith.constant 0 : index
    %c0_6 = arith.constant 0 : index
    %c0_7 = arith.constant 0 : index
    %6 = vector.load %arg3[%c0_5, %c0_6, %c0_7] : memref<1x1x32xf32, #tpu.memory_space<vmem>>, vector<1x1x32xf32>
    %7 = vector.shape_cast %6 : vector<1x1x32xf32> to vector<1x32xf32>
    %cst = arith.constant dense<0.000000e+00> : vector<10xf32>
    %8 = vector.multi_reduction <add>, %3, %cst [1] : vector<10x32xf32> to vector<10xf32>
    %9 = vector.shape_cast %8 : vector<10xf32> to vector<10x1xf32>
    %cst_8 = arith.constant 3.200000e+01 : f32
    %10 = vector.broadcast %cst_8 : f32 to vector<10x1xf32>
    %11 = arith.divf %9, %10 : vector<10x1xf32>
    %12 = vector.broadcast %11 : vector<10x1xf32> to vector<10x32xf32>
    %13 = arith.subf %3, %12 : vector<10x32xf32>
    %14 = arith.mulf %13, %13 : vector<10x32xf32>
    %cst_9 = arith.constant dense<0.000000e+00> : vector<10xf32>
    %15 = vector.multi_reduction <add>, %14, %cst_9 [1] : vector<10x32xf32> to vector<10xf32>
    %16 = vector.shape_cast %15 : vector<10xf32> to vector<10x1xf32>
    %cst_10 = arith.constant 3.200000e+01 : f32
    %17 = vector.broadcast %cst_10 : f32 to vector<10x1xf32>
    %18 = arith.divf %16, %17 : vector<10x1xf32>
    %cst_11 = arith.constant 9.99999997E-7 : f32
    %19 = vector.broadcast %cst_11 : f32 to vector<10x1xf32>
    %20 = arith.addf %18, %19 : vector<10x1xf32>
    %21 = math.rsqrt %20 : vector<10x1xf32>
    %22 = vector.broadcast %21 : vector<10x1xf32> to vector<10x32xf32>
    %23 = arith.mulf %13, %22 : vector<10x32xf32>
    %24 = vector.broadcast %5 : vector<1x32xf32> to vector<10x32xf32>
    %25 = arith.mulf %23, %24 : vector<10x32xf32>
    %26 = vector.broadcast %7 : vector<1x32xf32> to vector<10x32xf32>
    %27 = arith.addf %25, %26 : vector<10x32xf32>
    %28 = arith.truncf %27 : vector<10x32xf32> to vector<10x32xbf16>
    %c0_12 = arith.constant 0 : index
    %c0_13 = arith.constant 0 : index
    %c0_14 = arith.constant 0 : index
    %29 = vector.load %arg4[%c0_12, %c0_13, %c0_14] : memref<1x32x96xbf16, #tpu.memory_space<vmem>>, vector<1x32x96xbf16>
    %30 = vector.shape_cast %29 : vector<1x32x96xbf16> to vector<32x96xbf16>
    %cst_15 = arith.constant dense<0.000000e+00> : vector<10x96xf32>
    %31 = tpu.matmul %28, %30, %cst_15 {dimension_numbers = #tpu.dot_dimension_numbers<[1], [0], [0], [1], [0, 0, 1, 1], [], []>} : vector<10x32xbf16>, vector<32x96xbf16>, vector<10x96xf32> -> vector<10x96xf32>
    %c0_16 = arith.constant 0 : index
    %c0_17 = arith.constant 0 : index
    %c0_18 = arith.constant 0 : index
    %32 = vector.load %arg5[%c0_16, %c0_17, %c0_18] : memref<1x1x96xf32, #tpu.memory_space<vmem>>, vector<1x1x96xf32>
    %33 = vector.shape_cast %32 : vector<1x1x96xf32> to vector<1x96xf32>
    %34 = vector.broadcast %33 : vector<1x96xf32> to vector<10x96xf32>
    %35 = arith.addf %31, %34 : vector<10x96xf32>
    %36 = vector.extract_strided_slice %35 {offsets = [0, 0], sizes = [5, 96], strides = [1, 1]} : vector<10x96xf32> to vector<5x96xf32>
    %37 = vector.extract_strided_slice %36 {offsets = [0, 0], sizes = [5, 8], strides = [1, 1]} : vector<5x96xf32> to vector<5x8xf32>
    %cst_19 = arith.constant 0.353553385 : f32
    %38 = vector.broadcast %cst_19 : f32 to vector<5x8xf32>
    %39 = arith.mulf %37, %38 : vector<5x8xf32>
    %40 = vector.extract_strided_slice %36 {offsets = [0, 32], sizes = [5, 8], strides = [1, 1]} : vector<5x96xf32> to vector<5x8xf32>
    %41 = vector.extract_strided_slice %36 {offsets = [0, 64], sizes = [5, 8], strides = [1, 1]} : vector<5x96xf32> to vector<5x8xf32>
    %42 = tpu.transpose %40, [1, 0] : vector<5x8xf32> -> vector<8x5xf32>
    %cst_20 = arith.constant dense<0.000000e+00> : vector<5x5xf32>
    %43 = tpu.matmul %39, %42, %cst_20 {dimension_numbers = #tpu.dot_dimension_numbers<[1], [0], [0], [1], [0, 0, 1, 1], [], []>} : vector<5x8xf32>, vector<8x5xf32>, vector<5x5xf32> -> vector<5x5xf32>
    %cst_21 = arith.constant dense<0xFF800000> : vector<5xf32>
    %44 = vector.multi_reduction <maximumf>, %43, %cst_21 [1] : vector<5x5xf32> to vector<5xf32>
    %45 = vector.shape_cast %44 : vector<5xf32> to vector<5x1xf32>
    %46 = vector.broadcast %45 : vector<5x1xf32> to vector<5x5xf32>
    %47 = arith.subf %43, %46 : vector<5x5xf32>
    %48 = math.exp %47 : vector<5x5xf32>
    %cst_22 = arith.constant dense<0.000000e+00> : vector<5xf32>
    %49 = vector.multi_reduction <add>, %48, %cst_22 [1] : vector<5x5xf32> to vector<5xf32>
    %50 = vector.shape_cast %49 : vector<5xf32> to vector<5x1xf32>
    %51 = tpu.reciprocal %50 {approx = true} : vector<5x1xf32> -> vector<5x1xf32>
    %52 = vector.broadcast %51 : vector<5x1xf32> to vector<5x5xf32>
    %53 = arith.mulf %48, %52 : vector<5x5xf32>
    %cst_23 = arith.constant dense<0.000000e+00> : vector<5x8xf32>
    %54 = tpu.matmul %53, %41, %cst_23 {dimension_numbers = #tpu.dot_dimension_numbers<[1], [0], [0], [1], [0, 0, 1, 1], [], []>} : vector<5x5xf32>, vector<5x8xf32>, vector<5x8xf32> -> vector<5x8xf32>
    %55 = vector.extract_strided_slice %36 {offsets = [0, 8], sizes = [5, 8], strides = [1, 1]} : vector<5x96xf32> to vector<5x8xf32>
    %cst_24 = arith.constant 0.353553385 : f32
    %56 = vector.broadcast %cst_24 : f32 to vector<5x8xf32>
    %57 = arith.mulf %55, %56 : vector<5x8xf32>
    %58 = vector.extract_strided_slice %36 {offsets = [0, 40], sizes = [5, 8], strides = [1, 1]} : vector<5x96xf32> to vector<5x8xf32>
    %59 = vector.extract_strided_slice %36 {offsets = [0, 72], sizes = [5, 8], strides = [1, 1]} : vector<5x96xf32> to vector<5x8xf32>
    %60 = tpu.transpose %58, [1, 0] : vector<5x8xf32> -> vector<8x5xf32>
    %cst_25 = arith.constant dense<0.000000e+00> : vector<5x5xf32>
    %61 = tpu.matmul %57, %60, %cst_25 {dimension_numbers = #tpu.dot_dimension_numbers<[1], [0], [0], [1], [0, 0, 1, 1], [], []>} : vector<5x8xf32>, vector<8x5xf32>, vector<5x5xf32> -> vector<5x5xf32>
    %cst_26 = arith.constant dense<0xFF800000> : vector<5xf32>
    %62 = vector.multi_reduction <maximumf>, %61, %cst_26 [1] : vector<5x5xf32> to vector<5xf32>
    %63 = vector.shape_cast %62 : vector<5xf32> to vector<5x1xf32>
    %64 = vector.broadcast %63 : vector<5x1xf32> to vector<5x5xf32>
    %65 = arith.subf %61, %64 : vector<5x5xf32>
    %66 = math.exp %65 : vector<5x5xf32>
    %cst_27 = arith.constant dense<0.000000e+00> : vector<5xf32>
    %67 = vector.multi_reduction <add>, %66, %cst_27 [1] : vector<5x5xf32> to vector<5xf32>
    %68 = vector.shape_cast %67 : vector<5xf32> to vector<5x1xf32>
    %69 = tpu.reciprocal %68 {approx = true} : vector<5x1xf32> -> vector<5x1xf32>
    %70 = vector.broadcast %69 : vector<5x1xf32> to vector<5x5xf32>
    %71 = arith.mulf %66, %70 : vector<5x5xf32>
    %cst_28 = arith.constant dense<0.000000e+00> : vector<5x8xf32>
    %72 = tpu.matmul %71, %59, %cst_28 {dimension_numbers = #tpu.dot_dimension_numbers<[1], [0], [0], [1], [0, 0, 1, 1], [], []>} : vector<5x5xf32>, vector<5x8xf32>, vector<5x8xf32> -> vector<5x8xf32>
    %73 = vector.extract_strided_slice %36 {offsets = [0, 16], sizes = [5, 8], strides = [1, 1]} : vector<5x96xf32> to vector<5x8xf32>
    %cst_29 = arith.constant 0.353553385 : f32
    %74 = vector.broadcast %cst_29 : f32 to vector<5x8xf32>
    %75 = arith.mulf %73, %74 : vector<5x8xf32>
    %76 = vector.extract_strided_slice %36 {offsets = [0, 48], sizes = [5, 8], strides = [1, 1]} : vector<5x96xf32> to vector<5x8xf32>
    %77 = vector.extract_strided_slice %36 {offsets = [0, 80], sizes = [5, 8], strides = [1, 1]} : vector<5x96xf32> to vector<5x8xf32>
    %78 = tpu.transpose %76, [1, 0] : vector<5x8xf32> -> vector<8x5xf32>
    %cst_30 = arith.constant dense<0.000000e+00> : vector<5x5xf32>
    %79 = tpu.matmul %75, %78, %cst_30 {dimension_numbers = #tpu.dot_dimension_numbers<[1], [0], [0], [1], [0, 0, 1, 1], [], []>} : vector<5x8xf32>, vector<8x5xf32>, vector<5x5xf32> -> vector<5x5xf32>
    %cst_31 = arith.constant dense<0xFF800000> : vector<5xf32>
    %80 = vector.multi_reduction <maximumf>, %79, %cst_31 [1] : vector<5x5xf32> to vector<5xf32>
    %81 = vector.shape_cast %80 : vector<5xf32> to vector<5x1xf32>
    %82 = vector.broadcast %81 : vector<5x1xf32> to vector<5x5xf32>
    %83 = arith.subf %79, %82 : vector<5x5xf32>
    %84 = math.exp %83 : vector<5x5xf32>
    %cst_32 = arith.constant dense<0.000000e+00> : vector<5xf32>
    %85 = vector.multi_reduction <add>, %84, %cst_32 [1] : vector<5x5xf32> to vector<5xf32>
    %86 = vector.shape_cast %85 : vector<5xf32> to vector<5x1xf32>
    %87 = tpu.reciprocal %86 {approx = true} : vector<5x1xf32> -> vector<5x1xf32>
    %88 = vector.broadcast %87 : vector<5x1xf32> to vector<5x5xf32>
    %89 = arith.mulf %84, %88 : vector<5x5xf32>
    %cst_33 = arith.constant dense<0.000000e+00> : vector<5x8xf32>
    %90 = tpu.matmul %89, %77, %cst_33 {dimension_numbers = #tpu.dot_dimension_numbers<[1], [0], [0], [1], [0, 0, 1, 1], [], []>} : vector<5x5xf32>, vector<5x8xf32>, vector<5x8xf32> -> vector<5x8xf32>
    %91 = vector.extract_strided_slice %36 {offsets = [0, 24], sizes = [5, 8], strides = [1, 1]} : vector<5x96xf32> to vector<5x8xf32>
    %cst_34 = arith.constant 0.353553385 : f32
    %92 = vector.broadcast %cst_34 : f32 to vector<5x8xf32>
    %93 = arith.mulf %91, %92 : vector<5x8xf32>
    %94 = vector.extract_strided_slice %36 {offsets = [0, 56], sizes = [5, 8], strides = [1, 1]} : vector<5x96xf32> to vector<5x8xf32>
    %95 = vector.extract_strided_slice %36 {offsets = [0, 88], sizes = [5, 8], strides = [1, 1]} : vector<5x96xf32> to vector<5x8xf32>
    %96 = tpu.transpose %94, [1, 0] : vector<5x8xf32> -> vector<8x5xf32>
    %cst_35 = arith.constant dense<0.000000e+00> : vector<5x5xf32>
    %97 = tpu.matmul %93, %96, %cst_35 {dimension_numbers = #tpu.dot_dimension_numbers<[1], [0], [0], [1], [0, 0, 1, 1], [], []>} : vector<5x8xf32>, vector<8x5xf32>, vector<5x5xf32> -> vector<5x5xf32>
    %cst_36 = arith.constant dense<0xFF800000> : vector<5xf32>
    %98 = vector.multi_reduction <maximumf>, %97, %cst_36 [1] : vector<5x5xf32> to vector<5xf32>
    %99 = vector.shape_cast %98 : vector<5xf32> to vector<5x1xf32>
    %100 = vector.broadcast %99 : vector<5x1xf32> to vector<5x5xf32>
    %101 = arith.subf %97, %100 : vector<5x5xf32>
    %102 = math.exp %101 : vector<5x5xf32>
    %cst_37 = arith.constant dense<0.000000e+00> : vector<5xf32>
    %103 = vector.multi_reduction <add>, %102, %cst_37 [1] : vector<5x5xf32> to vector<5xf32>
    %104 = vector.shape_cast %103 : vector<5xf32> to vector<5x1xf32>
    %105 = tpu.reciprocal %104 {approx = true} : vector<5x1xf32> -> vector<5x1xf32>
    %106 = vector.broadcast %105 : vector<5x1xf32> to vector<5x5xf32>
    %107 = arith.mulf %102, %106 : vector<5x5xf32>
    %cst_38 = arith.constant dense<0.000000e+00> : vector<5x8xf32>
    %108 = tpu.matmul %107, %95, %cst_38 {dimension_numbers = #tpu.dot_dimension_numbers<[1], [0], [0], [1], [0, 0, 1, 1], [], []>} : vector<5x5xf32>, vector<5x8xf32>, vector<5x8xf32> -> vector<5x8xf32>
    %109 = tpu.concatenate %54, %72, %90, %108 in 1 : vector<5x8xf32>, vector<5x8xf32>, vector<5x8xf32>, vector<5x8xf32> -> vector<5x32xf32>
    %110 = vector.extract_strided_slice %35 {offsets = [5, 0], sizes = [5, 96], strides = [1, 1]} : vector<10x96xf32> to vector<5x96xf32>
    %111 = vector.extract_strided_slice %110 {offsets = [0, 0], sizes = [5, 8], strides = [1, 1]} : vector<5x96xf32> to vector<5x8xf32>
    %cst_39 = arith.constant 0.353553385 : f32
    %112 = vector.broadcast %cst_39 : f32 to vector<5x8xf32>
    %113 = arith.mulf %111, %112 : vector<5x8xf32>
    %114 = vector.extract_strided_slice %110 {offsets = [0, 32], sizes = [5, 8], strides = [1, 1]} : vector<5x96xf32> to vector<5x8xf32>
    %115 = vector.extract_strided_slice %110 {offsets = [0, 64], sizes = [5, 8], strides = [1, 1]} : vector<5x96xf32> to vector<5x8xf32>
    %116 = tpu.transpose %114, [1, 0] : vector<5x8xf32> -> vector<8x5xf32>
    %cst_40 = arith.constant dense<0.000000e+00> : vector<5x5xf32>
    %117 = tpu.matmul %113, %116, %cst_40 {dimension_numbers = #tpu.dot_dimension_numbers<[1], [0], [0], [1], [0, 0, 1, 1], [], []>} : vector<5x8xf32>, vector<8x5xf32>, vector<5x5xf32> -> vector<5x5xf32>
    %cst_41 = arith.constant dense<0xFF800000> : vector<5xf32>
    %118 = vector.multi_reduction <maximumf>, %117, %cst_41 [1] : vector<5x5xf32> to vector<5xf32>
    %119 = vector.shape_cast %118 : vector<5xf32> to vector<5x1xf32>
    %120 = vector.broadcast %119 : vector<5x1xf32> to vector<5x5xf32>
    %121 = arith.subf %117, %120 : vector<5x5xf32>
    %122 = math.exp %121 : vector<5x5xf32>
    %cst_42 = arith.constant dense<0.000000e+00> : vector<5xf32>
    %123 = vector.multi_reduction <add>, %122, %cst_42 [1] : vector<5x5xf32> to vector<5xf32>
    %124 = vector.shape_cast %123 : vector<5xf32> to vector<5x1xf32>
    %125 = tpu.reciprocal %124 {approx = true} : vector<5x1xf32> -> vector<5x1xf32>
    %126 = vector.broadcast %125 : vector<5x1xf32> to vector<5x5xf32>
    %127 = arith.mulf %122, %126 : vector<5x5xf32>
    %cst_43 = arith.constant dense<0.000000e+00> : vector<5x8xf32>
    %128 = tpu.matmul %127, %115, %cst_43 {dimension_numbers = #tpu.dot_dimension_numbers<[1], [0], [0], [1], [0, 0, 1, 1], [], []>} : vector<5x5xf32>, vector<5x8xf32>, vector<5x8xf32> -> vector<5x8xf32>
    %129 = vector.extract_strided_slice %110 {offsets = [0, 8], sizes = [5, 8], strides = [1, 1]} : vector<5x96xf32> to vector<5x8xf32>
    %cst_44 = arith.constant 0.353553385 : f32
    %130 = vector.broadcast %cst_44 : f32 to vector<5x8xf32>
    %131 = arith.mulf %129, %130 : vector<5x8xf32>
    %132 = vector.extract_strided_slice %110 {offsets = [0, 40], sizes = [5, 8], strides = [1, 1]} : vector<5x96xf32> to vector<5x8xf32>
    %133 = vector.extract_strided_slice %110 {offsets = [0, 72], sizes = [5, 8], strides = [1, 1]} : vector<5x96xf32> to vector<5x8xf32>
    %134 = tpu.transpose %132, [1, 0] : vector<5x8xf32> -> vector<8x5xf32>
    %cst_45 = arith.constant dense<0.000000e+00> : vector<5x5xf32>
    %135 = tpu.matmul %131, %134, %cst_45 {dimension_numbers = #tpu.dot_dimension_numbers<[1], [0], [0], [1], [0, 0, 1, 1], [], []>} : vector<5x8xf32>, vector<8x5xf32>, vector<5x5xf32> -> vector<5x5xf32>
    %cst_46 = arith.constant dense<0xFF800000> : vector<5xf32>
    %136 = vector.multi_reduction <maximumf>, %135, %cst_46 [1] : vector<5x5xf32> to vector<5xf32>
    %137 = vector.shape_cast %136 : vector<5xf32> to vector<5x1xf32>
    %138 = vector.broadcast %137 : vector<5x1xf32> to vector<5x5xf32>
    %139 = arith.subf %135, %138 : vector<5x5xf32>
    %140 = math.exp %139 : vector<5x5xf32>
    %cst_47 = arith.constant dense<0.000000e+00> : vector<5xf32>
    %141 = vector.multi_reduction <add>, %140, %cst_47 [1] : vector<5x5xf32> to vector<5xf32>
    %142 = vector.shape_cast %141 : vector<5xf32> to vector<5x1xf32>
    %143 = tpu.reciprocal %142 {approx = true} : vector<5x1xf32> -> vector<5x1xf32>
    %144 = vector.broadcast %143 : vector<5x1xf32> to vector<5x5xf32>
    %145 = arith.mulf %140, %144 : vector<5x5xf32>
    %cst_48 = arith.constant dense<0.000000e+00> : vector<5x8xf32>
    %146 = tpu.matmul %145, %133, %cst_48 {dimension_numbers = #tpu.dot_dimension_numbers<[1], [0], [0], [1], [0, 0, 1, 1], [], []>} : vector<5x5xf32>, vector<5x8xf32>, vector<5x8xf32> -> vector<5x8xf32>
    %147 = vector.extract_strided_slice %110 {offsets = [0, 16], sizes = [5, 8], strides = [1, 1]} : vector<5x96xf32> to vector<5x8xf32>
    %cst_49 = arith.constant 0.353553385 : f32
    %148 = vector.broadcast %cst_49 : f32 to vector<5x8xf32>
    %149 = arith.mulf %147, %148 : vector<5x8xf32>
    %150 = vector.extract_strided_slice %110 {offsets = [0, 48], sizes = [5, 8], strides = [1, 1]} : vector<5x96xf32> to vector<5x8xf32>
    %151 = vector.extract_strided_slice %110 {offsets = [0, 80], sizes = [5, 8], strides = [1, 1]} : vector<5x96xf32> to vector<5x8xf32>
    %152 = tpu.transpose %150, [1, 0] : vector<5x8xf32> -> vector<8x5xf32>
    %cst_50 = arith.constant dense<0.000000e+00> : vector<5x5xf32>
    %153 = tpu.matmul %149, %152, %cst_50 {dimension_numbers = #tpu.dot_dimension_numbers<[1], [0], [0], [1], [0, 0, 1, 1], [], []>} : vector<5x8xf32>, vector<8x5xf32>, vector<5x5xf32> -> vector<5x5xf32>
    %cst_51 = arith.constant dense<0xFF800000> : vector<5xf32>
    %154 = vector.multi_reduction <maximumf>, %153, %cst_51 [1] : vector<5x5xf32> to vector<5xf32>
    %155 = vector.shape_cast %154 : vector<5xf32> to vector<5x1xf32>
    %156 = vector.broadcast %155 : vector<5x1xf32> to vector<5x5xf32>
    %157 = arith.subf %153, %156 : vector<5x5xf32>
    %158 = math.exp %157 : vector<5x5xf32>
    %cst_52 = arith.constant dense<0.000000e+00> : vector<5xf32>
    %159 = vector.multi_reduction <add>, %158, %cst_52 [1] : vector<5x5xf32> to vector<5xf32>
    %160 = vector.shape_cast %159 : vector<5xf32> to vector<5x1xf32>
    %161 = tpu.reciprocal %160 {approx = true} : vector<5x1xf32> -> vector<5x1xf32>
    %162 = vector.broadcast %161 : vector<5x1xf32> to vector<5x5xf32>
    %163 = arith.mulf %158, %162 : vector<5x5xf32>
    %cst_53 = arith.constant dense<0.000000e+00> : vector<5x8xf32>
    %164 = tpu.matmul %163, %151, %cst_53 {dimension_numbers = #tpu.dot_dimension_numbers<[1], [0], [0], [1], [0, 0, 1, 1], [], []>} : vector<5x5xf32>, vector<5x8xf32>, vector<5x8xf32> -> vector<5x8xf32>
    %165 = vector.extract_strided_slice %110 {offsets = [0, 24], sizes = [5, 8], strides = [1, 1]} : vector<5x96xf32> to vector<5x8xf32>
    %cst_54 = arith.constant 0.353553385 : f32
    %166 = vector.broadcast %cst_54 : f32 to vector<5x8xf32>
    %167 = arith.mulf %165, %166 : vector<5x8xf32>
    %168 = vector.extract_strided_slice %110 {offsets = [0, 56], sizes = [5, 8], strides = [1, 1]} : vector<5x96xf32> to vector<5x8xf32>
    %169 = vector.extract_strided_slice %110 {offsets = [0, 88], sizes = [5, 8], strides = [1, 1]} : vector<5x96xf32> to vector<5x8xf32>
    %170 = tpu.transpose %168, [1, 0] : vector<5x8xf32> -> vector<8x5xf32>
    %cst_55 = arith.constant dense<0.000000e+00> : vector<5x5xf32>
    %171 = tpu.matmul %167, %170, %cst_55 {dimension_numbers = #tpu.dot_dimension_numbers<[1], [0], [0], [1], [0, 0, 1, 1], [], []>} : vector<5x8xf32>, vector<8x5xf32>, vector<5x5xf32> -> vector<5x5xf32>
    %cst_56 = arith.constant dense<0xFF800000> : vector<5xf32>
    %172 = vector.multi_reduction <maximumf>, %171, %cst_56 [1] : vector<5x5xf32> to vector<5xf32>
    %173 = vector.shape_cast %172 : vector<5xf32> to vector<5x1xf32>
    %174 = vector.broadcast %173 : vector<5x1xf32> to vector<5x5xf32>
    %175 = arith.subf %171, %174 : vector<5x5xf32>
    %176 = math.exp %175 : vector<5x5xf32>
    %cst_57 = arith.constant dense<0.000000e+00> : vector<5xf32>
    %177 = vector.multi_reduction <add>, %176, %cst_57 [1] : vector<5x5xf32> to vector<5xf32>
    %178 = vector.shape_cast %177 : vector<5xf32> to vector<5x1xf32>
    %179 = tpu.reciprocal %178 {approx = true} : vector<5x1xf32> -> vector<5x1xf32>
    %180 = vector.broadcast %179 : vector<5x1xf32> to vector<5x5xf32>
    %181 = arith.mulf %176, %180 : vector<5x5xf32>
    %cst_58 = arith.constant dense<0.000000e+00> : vector<5x8xf32>
    %182 = tpu.matmul %181, %169, %cst_58 {dimension_numbers = #tpu.dot_dimension_numbers<[1], [0], [0], [1], [0, 0, 1, 1], [], []>} : vector<5x5xf32>, vector<5x8xf32>, vector<5x8xf32> -> vector<5x8xf32>
    %183 = tpu.concatenate %128, %146, %164, %182 in 1 : vector<5x8xf32>, vector<5x8xf32>, vector<5x8xf32>, vector<5x8xf32> -> vector<5x32xf32>
    %184 = tpu.concatenate %109, %183 in 0 : vector<5x32xf32>, vector<5x32xf32> -> vector<10x32xf32>
    %185 = arith.truncf %184 : vector<10x32xf32> to vector<10x32xbf16>
    %c0_59 = arith.constant 0 : index
    %c0_60 = arith.constant 0 : index
    %c0_61 = arith.constant 0 : index
    %186 = vector.load %arg6[%c0_59, %c0_60, %c0_61] : memref<1x32x32xbf16, #tpu.memory_space<vmem>>, vector<1x32x32xbf16>
    %187 = vector.shape_cast %186 : vector<1x32x32xbf16> to vector<32x32xbf16>
    %cst_62 = arith.constant dense<0.000000e+00> : vector<10x32xf32>
    %188 = tpu.matmul %185, %187, %cst_62 {dimension_numbers = #tpu.dot_dimension_numbers<[1], [0], [0], [1], [0, 0, 1, 1], [], []>} : vector<10x32xbf16>, vector<32x32xbf16>, vector<10x32xf32> -> vector<10x32xf32>
    %c0_63 = arith.constant 0 : index
    %c0_64 = arith.constant 0 : index
    %c0_65 = arith.constant 0 : index
    %189 = vector.load %arg7[%c0_63, %c0_64, %c0_65] : memref<1x1x32xf32, #tpu.memory_space<vmem>>, vector<1x1x32xf32>
    %190 = vector.shape_cast %189 : vector<1x1x32xf32> to vector<1x32xf32>
    %191 = vector.broadcast %190 : vector<1x32xf32> to vector<10x32xf32>
    %192 = arith.addf %188, %191 : vector<10x32xf32>
    %193 = arith.addf %3, %192 : vector<10x32xf32>
    %c0_66 = arith.constant 0 : index
    %c0_67 = arith.constant 0 : index
    %c0_68 = arith.constant 0 : index
    %194 = vector.load %arg18[%c0_66, %c0_67, %c0_68] : memref<1x1x32xf32, #tpu.memory_space<vmem>>, vector<1x1x32xf32>
    %195 = vector.shape_cast %194 : vector<1x1x32xf32> to vector<1x32xf32>
    %196 = vector.broadcast %195 : vector<1x32xf32> to vector<10x32xf32>
    %197 = arith.mulf %193, %196 : vector<10x32xf32>
    %cst_69 = arith.constant dense<0.000000e+00> : vector<10xf32>
    %198 = vector.multi_reduction <add>, %197, %cst_69 [1] : vector<10x32xf32> to vector<10xf32>
    %199 = vector.shape_cast %198 : vector<10xf32> to vector<10x1xf32>
    %c0_70 = arith.constant 0 : index
    %c0_71 = arith.constant 0 : index
    %c0_72 = arith.constant 0 : index
    %200 = vector.load %arg19[%c0_70, %c0_71, %c0_72] : memref<1x1x1xf32, #tpu.memory_space<vmem>>, vector<1x1x1xf32>
    %201 = vector.shape_cast %200 : vector<1x1x1xf32> to vector<1x1xf32>
    %202 = vector.broadcast %201 : vector<1x1xf32> to vector<10x1xf32>
    %203 = arith.addf %199, %202 : vector<10x1xf32>
    %cst_73 = arith.constant 0.000000e+00 : f32
    %204 = vector.broadcast %cst_73 : f32 to vector<10x1xf32>
    %205 = arith.cmpf oge, %203, %204 : vector<10x1xf32>
    %206 = arith.extui %205 : vector<10x1xi1> to vector<10x1xi32>
    %207 = arith.sitofp %206 : vector<10x1xi32> to vector<10x1xf32>
    %c2_i32 = arith.constant 2 : i32
    %208 = arith.cmpi sge, %arg0, %c2_i32 : i32
    %209 = arith.extui %208 : i1 to i32
    %210 = arith.sitofp %209 : i32 to f32
    %211 = vector.broadcast %210 : f32 to vector<10x1xf32>
    %212 = arith.mulf %211, %207 : vector<10x1xf32>
    %cst_74 = arith.constant 1.000000e+00 : f32
    %213 = arith.subf %cst_74, %210 : f32
    %214 = vector.broadcast %213 : f32 to vector<10x1xf32>
    %215 = arith.addf %212, %214 : vector<10x1xf32>
    %216 = arith.truncf %193 : vector<10x32xf32> to vector<10x32xbf16>
    %c0_75 = arith.constant 0 : index
    %c0_76 = arith.constant 0 : index
    %c0_77 = arith.constant 0 : index
    %217 = vector.load %arg14[%c0_75, %c0_76, %c0_77] : memref<1x32x8xbf16, #tpu.memory_space<vmem>>, vector<1x32x8xbf16>
    %218 = vector.shape_cast %217 : vector<1x32x8xbf16> to vector<32x8xbf16>
    %cst_78 = arith.constant dense<0.000000e+00> : vector<10x8xf32>
    %219 = tpu.matmul %216, %218, %cst_78 {dimension_numbers = #tpu.dot_dimension_numbers<[1], [0], [0], [1], [0, 0, 1, 1], [], []>} : vector<10x32xbf16>, vector<32x8xbf16>, vector<10x8xf32> -> vector<10x8xf32>
    %c0_79 = arith.constant 0 : index
    %c0_80 = arith.constant 0 : index
    %c0_81 = arith.constant 0 : index
    %220 = vector.load %arg15[%c0_79, %c0_80, %c0_81] : memref<1x1x8xf32, #tpu.memory_space<vmem>>, vector<1x1x8xf32>
    %221 = vector.shape_cast %220 : vector<1x1x8xf32> to vector<1x8xf32>
    %222 = vector.broadcast %221 : vector<1x8xf32> to vector<10x8xf32>
    %223 = arith.addf %219, %222 : vector<10x8xf32>
    %cst_82 = arith.constant 0.000000e+00 : f32
    %224 = vector.broadcast %cst_82 : f32 to vector<10x8xf32>
    %225 = arith.maximumf %223, %224 : vector<10x8xf32>
    %226 = arith.truncf %225 : vector<10x8xf32> to vector<10x8xbf16>
    %c0_83 = arith.constant 0 : index
    %c0_84 = arith.constant 0 : index
    %c0_85 = arith.constant 0 : index
    %227 = vector.load %arg16[%c0_83, %c0_84, %c0_85] : memref<1x8x32xbf16, #tpu.memory_space<vmem>>, vector<1x8x32xbf16>
    %228 = vector.shape_cast %227 : vector<1x8x32xbf16> to vector<8x32xbf16>
    %cst_86 = arith.constant dense<0.000000e+00> : vector<10x32xf32>
    %229 = tpu.matmul %226, %228, %cst_86 {dimension_numbers = #tpu.dot_dimension_numbers<[1], [0], [0], [1], [0, 0, 1, 1], [], []>} : vector<10x8xbf16>, vector<8x32xbf16>, vector<10x32xf32> -> vector<10x32xf32>
    %c0_87 = arith.constant 0 : index
    %c0_88 = arith.constant 0 : index
    %c0_89 = arith.constant 0 : index
    %230 = vector.load %arg17[%c0_87, %c0_88, %c0_89] : memref<1x1x32xf32, #tpu.memory_space<vmem>>, vector<1x1x32xf32>
    %231 = vector.shape_cast %230 : vector<1x1x32xf32> to vector<1x32xf32>
    %232 = vector.broadcast %231 : vector<1x32xf32> to vector<10x32xf32>
    %233 = arith.addf %229, %232 : vector<10x32xf32>
    %cst_90 = arith.constant 1.000000e-01 : f32
    %234 = vector.broadcast %cst_90 : f32 to vector<10x32xf32>
    %235 = arith.mulf %233, %234 : vector<10x32xf32>
    %c0_91 = arith.constant 0 : index
    %c0_92 = arith.constant 0 : index
    %c0_93 = arith.constant 0 : index
    %236 = vector.load %arg8[%c0_91, %c0_92, %c0_93] : memref<1x1x32xf32, #tpu.memory_space<vmem>>, vector<1x1x32xf32>
    %237 = vector.shape_cast %236 : vector<1x1x32xf32> to vector<1x32xf32>
    %c0_94 = arith.constant 0 : index
    %c0_95 = arith.constant 0 : index
    %c0_96 = arith.constant 0 : index
    %238 = vector.load %arg9[%c0_94, %c0_95, %c0_96] : memref<1x1x32xf32, #tpu.memory_space<vmem>>, vector<1x1x32xf32>
    %239 = vector.shape_cast %238 : vector<1x1x32xf32> to vector<1x32xf32>
    %cst_97 = arith.constant dense<0.000000e+00> : vector<10xf32>
    %240 = vector.multi_reduction <add>, %193, %cst_97 [1] : vector<10x32xf32> to vector<10xf32>
    %241 = vector.shape_cast %240 : vector<10xf32> to vector<10x1xf32>
    %cst_98 = arith.constant 3.200000e+01 : f32
    %242 = vector.broadcast %cst_98 : f32 to vector<10x1xf32>
    %243 = arith.divf %241, %242 : vector<10x1xf32>
    %244 = vector.broadcast %243 : vector<10x1xf32> to vector<10x32xf32>
    %245 = arith.subf %193, %244 : vector<10x32xf32>
    %246 = arith.mulf %245, %245 : vector<10x32xf32>
    %cst_99 = arith.constant dense<0.000000e+00> : vector<10xf32>
    %247 = vector.multi_reduction <add>, %246, %cst_99 [1] : vector<10x32xf32> to vector<10xf32>
    %248 = vector.shape_cast %247 : vector<10xf32> to vector<10x1xf32>
    %cst_100 = arith.constant 3.200000e+01 : f32
    %249 = vector.broadcast %cst_100 : f32 to vector<10x1xf32>
    %250 = arith.divf %248, %249 : vector<10x1xf32>
    %cst_101 = arith.constant 9.99999997E-7 : f32
    %251 = vector.broadcast %cst_101 : f32 to vector<10x1xf32>
    %252 = arith.addf %250, %251 : vector<10x1xf32>
    %253 = math.rsqrt %252 : vector<10x1xf32>
    %254 = vector.broadcast %253 : vector<10x1xf32> to vector<10x32xf32>
    %255 = arith.mulf %245, %254 : vector<10x32xf32>
    %256 = vector.broadcast %237 : vector<1x32xf32> to vector<10x32xf32>
    %257 = arith.mulf %255, %256 : vector<10x32xf32>
    %258 = vector.broadcast %239 : vector<1x32xf32> to vector<10x32xf32>
    %259 = arith.addf %257, %258 : vector<10x32xf32>
    %260 = arith.truncf %259 : vector<10x32xf32> to vector<10x32xbf16>
    %c0_102 = arith.constant 0 : index
    %c0_103 = arith.constant 0 : index
    %c0_104 = arith.constant 0 : index
    %261 = vector.load %arg10[%c0_102, %c0_103, %c0_104] : memref<1x32x128xbf16, #tpu.memory_space<vmem>>, vector<1x32x128xbf16>
    %262 = vector.shape_cast %261 : vector<1x32x128xbf16> to vector<32x128xbf16>
    %cst_105 = arith.constant dense<0.000000e+00> : vector<10x128xf32>
    %263 = tpu.matmul %260, %262, %cst_105 {dimension_numbers = #tpu.dot_dimension_numbers<[1], [0], [0], [1], [0, 0, 1, 1], [], []>} : vector<10x32xbf16>, vector<32x128xbf16>, vector<10x128xf32> -> vector<10x128xf32>
    %c0_106 = arith.constant 0 : index
    %c0_107 = arith.constant 0 : index
    %c0_108 = arith.constant 0 : index
    %264 = vector.load %arg11[%c0_106, %c0_107, %c0_108] : memref<1x1x128xf32, #tpu.memory_space<vmem>>, vector<1x1x128xf32>
    %265 = vector.shape_cast %264 : vector<1x1x128xf32> to vector<1x128xf32>
    %266 = vector.broadcast %265 : vector<1x128xf32> to vector<10x128xf32>
    %267 = arith.addf %263, %266 : vector<10x128xf32>
    %268 = arith.mulf %267, %267 : vector<10x128xf32>
    %269 = arith.mulf %267, %268 : vector<10x128xf32>
    %cst_109 = arith.constant 4.471500e-02 : f32
    %270 = vector.broadcast %cst_109 : f32 to vector<10x128xf32>
    %271 = arith.mulf %270, %269 : vector<10x128xf32>
    %272 = arith.addf %267, %271 : vector<10x128xf32>
    %cst_110 = arith.constant 0.797884583 : f32
    %273 = vector.broadcast %cst_110 : f32 to vector<10x128xf32>
    %274 = arith.mulf %273, %272 : vector<10x128xf32>
    %275 = math.tanh %274 : vector<10x128xf32>
    %cst_111 = arith.constant 1.000000e+00 : f32
    %276 = vector.broadcast %cst_111 : f32 to vector<10x128xf32>
    %277 = arith.addf %276, %275 : vector<10x128xf32>
    %cst_112 = arith.constant 5.000000e-01 : f32
    %278 = vector.broadcast %cst_112 : f32 to vector<10x128xf32>
    %279 = arith.mulf %278, %277 : vector<10x128xf32>
    %280 = arith.mulf %267, %279 : vector<10x128xf32>
    %281 = arith.truncf %280 : vector<10x128xf32> to vector<10x128xbf16>
    %c0_113 = arith.constant 0 : index
    %c0_114 = arith.constant 0 : index
    %c0_115 = arith.constant 0 : index
    %282 = vector.load %arg12[%c0_113, %c0_114, %c0_115] : memref<1x128x32xbf16, #tpu.memory_space<vmem>>, vector<1x128x32xbf16>
    %283 = vector.shape_cast %282 : vector<1x128x32xbf16> to vector<128x32xbf16>
    %cst_116 = arith.constant dense<0.000000e+00> : vector<10x32xf32>
    %284 = tpu.matmul %281, %283, %cst_116 {dimension_numbers = #tpu.dot_dimension_numbers<[1], [0], [0], [1], [0, 0, 1, 1], [], []>} : vector<10x128xbf16>, vector<128x32xbf16>, vector<10x32xf32> -> vector<10x32xf32>
    %c0_117 = arith.constant 0 : index
    %c0_118 = arith.constant 0 : index
    %c0_119 = arith.constant 0 : index
    %285 = vector.load %arg13[%c0_117, %c0_118, %c0_119] : memref<1x1x32xf32, #tpu.memory_space<vmem>>, vector<1x1x32xf32>
    %286 = vector.shape_cast %285 : vector<1x1x32xf32> to vector<1x32xf32>
    %287 = vector.broadcast %286 : vector<1x32xf32> to vector<10x32xf32>
    %288 = arith.addf %284, %287 : vector<10x32xf32>
    %289 = vector.broadcast %215 : vector<10x1xf32> to vector<10x32xf32>
    %290 = arith.mulf %289, %288 : vector<10x32xf32>
    %291 = arith.addf %193, %290 : vector<10x32xf32>
    %292 = arith.addf %291, %235 : vector<10x32xf32>
    %c0_120 = arith.constant 0 : index
    %c0_121 = arith.constant 0 : index
    %293 = vector.load %arg22[%c0_120, %c0_121] : memref<10x32xf32, #tpu.memory_space<vmem>>, vector<10x32xf32>
    tpu.vector_store %arg22[%c0_120, %c0_121], %292 {strides = array<i32>} : memref<10x32xf32, #tpu.memory_space<vmem>>, vector<10x32xf32>,
    %c0_122 = arith.constant 0 : index
    %c0_123 = arith.constant 0 : index
    %c0_124 = arith.constant 0 : index
    %294 = vector.load %arg20[%c0_122, %c0_123, %c0_124] : memref<1x10x32xf32, #tpu.memory_space<vmem>>, vector<1x10x32xf32>
    %295 = vector.shape_cast %294 : vector<1x10x32xf32> to vector<10x32xf32>
    %296 = vector.shape_cast %292 : vector<10x32xf32> to vector<1x10x32xf32>
    tpu.vector_store %arg20[%c0_122, %c0_123, %c0_124], %296 {strides = array<i32>} : memref<1x10x32xf32, #tpu.memory_space<vmem>>, vector<1x10x32xf32>,
    %297 = tpu.iota {dimensions = array<i32: 1>} : vector<10x128xi32>
    %c0_i32_125 = arith.constant 0 : i32
    %298 = vector.broadcast %c0_i32_125 : i32 to vector<10x128xi32>
    %299 = arith.cmpi eq, %297, %298 : vector<10x128xi32>
    %cst_126 = arith.constant 0.000000e+00 : f32
    %300 = vector.shape_cast %203 : vector<10x1xf32> to vector<10x1xf32>
    %301 = vector.broadcast %300 : vector<10x1xf32> to vector<10x128xf32>
    %302 = vector.broadcast %cst_126 : f32 to vector<10x128xf32>
    %303 = arith.select %299, %301, %302 : vector<10x128xi1>, vector<10x128xf32>
    %c1_i32 = arith.constant 1 : i32
    %304 = vector.broadcast %c1_i32 : i32 to vector<10x128xi32>
    %305 = arith.cmpi eq, %297, %304 : vector<10x128xi32>
    %cst_127 = arith.constant 0.000000e+00 : f32
    %306 = vector.shape_cast %207 : vector<10x1xf32> to vector<10x1xf32>
    %307 = vector.broadcast %306 : vector<10x1xf32> to vector<10x128xf32>
    %308 = vector.broadcast %cst_127 : f32 to vector<10x128xf32>
    %309 = arith.select %305, %307, %308 : vector<10x128xi1>, vector<10x128xf32>
    %310 = arith.addf %303, %309 : vector<10x128xf32>
    %c0_128 = arith.constant 0 : index
    %c0_129 = arith.constant 0 : index
    %c0_130 = arith.constant 0 : index
    %311 = vector.load %arg21[%c0_128, %c0_129, %c0_130] : memref<1x10x128xf32, #tpu.memory_space<vmem>>, vector<1x10x128xf32>
    %312 = vector.shape_cast %311 : vector<1x10x128xf32> to vector<10x128xf32>
    %313 = vector.shape_cast %310 : vector<10x128xf32> to vector<1x10x128xf32>
    tpu.vector_store %arg21[%c0_128, %c0_129, %c0_130], %313 {strides = array<i32>} : memref<1x10x128xf32, #tpu.memory_space<vmem>>, vector<1x10x128xf32>,
    return
  }
  func.func @transform_0(%arg0: i32) -> (i32, i32) {
    %c0_i32 = arith.constant 0 : i32
    %c0_i32_0 = arith.constant 0 : i32
    %c0_i32_1 = arith.constant 0 : i32
    return %c0_i32, %c0_i32_0 : i32, i32
  }
  func.func @transform_1(%arg0: i32) -> (i32, i32, i32) {
    %c0_i32 = arith.constant 0 : i32
    %c0_i32_0 = arith.constant 0 : i32
    %c0_i32_1 = arith.constant 0 : i32
    return %arg0, %c0_i32, %c0_i32_0 : i32, i32, i32
  }
  func.func @transform_2(%arg0: i32) -> (i32, i32, i32) {
    %c0_i32 = arith.constant 0 : i32
    %c0_i32_0 = arith.constant 0 : i32
    %c0_i32_1 = arith.constant 0 : i32
    return %arg0, %c0_i32, %c0_i32_0 : i32, i32, i32
  }
  func.func @transform_3(%arg0: i32) -> (i32, i32, i32) {
    %c0_i32 = arith.constant 0 : i32
    %c0_i32_0 = arith.constant 0 : i32
    %c0_i32_1 = arith.constant 0 : i32
    return %arg0, %c0_i32, %c0_i32_0 : i32, i32, i32
  }
  func.func @transform_4(%arg0: i32) -> (i32, i32, i32) {
    %c0_i32 = arith.constant 0 : i32
    %c0_i32_0 = arith.constant 0 : i32
    %c0_i32_1 = arith.constant 0 : i32
    return %arg0, %c0_i32, %c0_i32_0 : i32, i32, i32
  }
  func.func @transform_5(%arg0: i32) -> (i32, i32, i32) {
    %c0_i32 = arith.constant 0 : i32
    %c0_i32_0 = arith.constant 0 : i32
    %c0_i32_1 = arith.constant 0 : i32
    return %arg0, %c0_i32, %c0_i32_0 : i32, i32, i32
  }
  func.func @transform_6(%arg0: i32) -> (i32, i32, i32) {
    %c0_i32 = arith.constant 0 : i32
    %c0_i32_0 = arith.constant 0 : i32
    %c0_i32_1 = arith.constant 0 : i32
    return %arg0, %c0_i32, %c0_i32_0 : i32, i32, i32
  }
  func.func @transform_7(%arg0: i32) -> (i32, i32, i32) {
    %c0_i32 = arith.constant 0 : i32
    %c0_i32_0 = arith.constant 0 : i32
    %c0_i32_1 = arith.constant 0 : i32
    return %arg0, %c0_i32, %c0_i32_0 : i32, i32, i32
  }
  func.func @transform_8(%arg0: i32) -> (i32, i32, i32) {
    %c0_i32 = arith.constant 0 : i32
    %c0_i32_0 = arith.constant 0 : i32
    %c0_i32_1 = arith.constant 0 : i32
    return %arg0, %c0_i32, %c0_i32_0 : i32, i32, i32
  }
  func.func @transform_9(%arg0: i32) -> (i32, i32, i32) {
    %c0_i32 = arith.constant 0 : i32
    %c0_i32_0 = arith.constant 0 : i32
    %c0_i32_1 = arith.constant 0 : i32
    return %arg0, %c0_i32, %c0_i32_0 : i32, i32, i32
  }
  func.func @transform_10(%arg0: i32) -> (i32, i32, i32) {
    %c0_i32 = arith.constant 0 : i32
    %c0_i32_0 = arith.constant 0 : i32
    %c0_i32_1 = arith.constant 0 : i32
    return %arg0, %c0_i32, %c0_i32_0 : i32, i32, i32
  }
  func.func @transform_11(%arg0: i32) -> (i32, i32, i32) {
    %c0_i32 = arith.constant 0 : i32
    %c0_i32_0 = arith.constant 0 : i32
    %c0_i32_1 = arith.constant 0 : i32
    return %arg0, %c0_i32, %c0_i32_0 : i32, i32, i32
  }
  func.func @transform_12(%arg0: i32) -> (i32, i32, i32) {
    %c0_i32 = arith.constant 0 : i32
    %c0_i32_0 = arith.constant 0 : i32
    %c0_i32_1 = arith.constant 0 : i32
    return %arg0, %c0_i32, %c0_i32_0 : i32, i32, i32
  }
  func.func @transform_13(%arg0: i32) -> (i32, i32, i32) {
    %c0_i32 = arith.constant 0 : i32
    %c0_i32_0 = arith.constant 0 : i32
    %c0_i32_1 = arith.constant 0 : i32
    return %arg0, %c0_i32, %c0_i32_0 : i32, i32, i32
  }
  func.func @transform_14(%arg0: i32) -> (i32, i32, i32) {
    %c0_i32 = arith.constant 0 : i32
    %c0_i32_0 = arith.constant 0 : i32
    %c0_i32_1 = arith.constant 0 : i32
    return %arg0, %c0_i32, %c0_i32_0 : i32, i32, i32
  }
  func.func @transform_15(%arg0: i32) -> (i32, i32, i32) {
    %c0_i32 = arith.constant 0 : i32
    %c0_i32_0 = arith.constant 0 : i32
    %c0_i32_1 = arith.constant 0 : i32
    return %arg0, %c0_i32, %c0_i32_0 : i32, i32, i32
  }
  func.func @transform_16(%arg0: i32) -> (i32, i32, i32) {
    %c0_i32 = arith.constant 0 : i32
    %c0_i32_0 = arith.constant 0 : i32
    %c0_i32_1 = arith.constant 0 : i32
    return %arg0, %c0_i32, %c0_i32_0 : i32, i32, i32
  }
  func.func @transform_17(%arg0: i32) -> (i32, i32, i32) {
    %c0_i32 = arith.constant 0 : i32
    %c0_i32_0 = arith.constant 0 : i32
    %c0_i32_1 = arith.constant 0 : i32
    return %arg0, %c0_i32, %c0_i32_0 : i32, i32, i32
  }
  func.func @transform_18(%arg0: i32) -> (i32, i32, i32) {
    %c0_i32 = arith.constant 0 : i32
    %c0_i32_0 = arith.constant 0 : i32
    %c0_i32_1 = arith.constant 0 : i32
    return %arg0, %c0_i32, %c0_i32_0 : i32, i32, i32
  }
  func.func @transform_19(%arg0: i32) -> (i32, i32, i32) {
    %c0_i32 = arith.constant 0 : i32
    %c0_i32_0 = arith.constant 0 : i32
    %c0_i32_1 = arith.constant 0 : i32
    return %arg0, %c0_i32, %c0_i32_0 : i32, i32, i32
  }
  func.func @transform_20(%arg0: i32) -> (i32, i32, i32) {
    %c0_i32 = arith.constant 0 : i32
    %c0_i32_0 = arith.constant 0 : i32
    %c0_i32_1 = arith.constant 0 : i32
    return %arg0, %c0_i32, %c0_i32_0 : i32, i32, i32
  }
}

module attributes {stable_mosaic.version = 11 : i64} {
  func.func @kernel(%arg0: i32, %arg1: memref<8x32xf32, #tpu.memory_space<vmem>>, %arg2: memref<32x128xbf16, #tpu.memory_space<vmem>>, %arg3: memref<1x128xf32, #tpu.memory_space<vmem>>, %arg4: memref<8x128xf32, #tpu.memory_space<vmem>>) attributes {dimension_semantics = [#tpu.dimension_semantics<parallel>], iteration_bounds = array<i64: 1>, scalar_prefetch = 0 : i64, scratch_operands = 0 : i64, tpu.core_type = #tpu.core_type<tc>, window_params = [{transform_indices = @transform_0, window_bounds = array<i64: 8, 32>}, {pipeline_mode = #tpu.pipeline_mode<synchronous>, transform_indices = @transform_1, window_bounds = array<i64: 32, 128>}, {pipeline_mode = #tpu.pipeline_mode<synchronous>, transform_indices = @transform_2, window_bounds = array<i64: 1, 128>}, {transform_indices = @transform_3, window_bounds = array<i64: 8, 128>}]} {
    %c0 = arith.constant 0 : index
    %c0_0 = arith.constant 0 : index
    %0 = vector.load %arg1[%c0, %c0_0] : memref<8x32xf32, #tpu.memory_space<vmem>>, vector<8x32xf32>
    %1 = arith.truncf %0 : vector<8x32xf32> to vector<8x32xbf16>
    %c0_1 = arith.constant 0 : index
    %c0_2 = arith.constant 0 : index
    %2 = vector.load %arg2[%c0_1, %c0_2] : memref<32x128xbf16, #tpu.memory_space<vmem>>, vector<32x128xbf16>
    %cst = arith.constant dense<0.000000e+00> : vector<8x128xf32>
    %3 = tpu.matmul %1, %2, %cst {dimension_numbers = #tpu.dot_dimension_numbers<[1], [0], [0], [1], [0, 0, 1, 1], [], []>} : vector<8x32xbf16>, vector<32x128xbf16>, vector<8x128xf32> -> vector<8x128xf32>
    %c0_3 = arith.constant 0 : index
    %c0_4 = arith.constant 0 : index
    %4 = vector.load %arg3[%c0_3, %c0_4] : memref<1x128xf32, #tpu.memory_space<vmem>>, vector<1x128xf32>
    %5 = vector.broadcast %4 : vector<1x128xf32> to vector<8x128xf32>
    %6 = arith.addf %3, %5 : vector<8x128xf32>
    %c0_5 = arith.constant 0 : index
    %c0_6 = arith.constant 0 : index
    %7 = vector.load %arg4[%c0_5, %c0_6] : memref<8x128xf32, #tpu.memory_space<vmem>>, vector<8x128xf32>
    tpu.vector_store %arg4[%c0_5, %c0_6], %6 {strides = array<i32>} : memref<8x128xf32, #tpu.memory_space<vmem>>, vector<8x128xf32>,
    return
  }
  func.func @transform_0(%arg0: i32) -> (i32, i32) {
    %c0_i32 = arith.constant 0 : i32
    %c0_i32_0 = arith.constant 0 : i32
    return %arg0, %c0_i32 : i32, i32
  }
  func.func @transform_1(%arg0: i32) -> (i32, i32) {
    %c0_i32 = arith.constant 0 : i32
    %c0_i32_0 = arith.constant 0 : i32
    %c0_i32_1 = arith.constant 0 : i32
    return %c0_i32, %c0_i32_0 : i32, i32
  }
  func.func @transform_2(%arg0: i32) -> (i32, i32) {
    %c0_i32 = arith.constant 0 : i32
    %c0_i32_0 = arith.constant 0 : i32
    %c0_i32_1 = arith.constant 0 : i32
    return %c0_i32, %c0_i32_0 : i32, i32
  }
  func.func @transform_3(%arg0: i32) -> (i32, i32) {
    %c0_i32 = arith.constant 0 : i32
    %c0_i32_0 = arith.constant 0 : i32
    return %arg0, %c0_i32 : i32, i32
  }
}

module attributes {stable_mosaic.version = 11 : i64} {
  func.func @kernel(%arg0: i32, %arg1: memref<32x32xf32, #tpu.memory_space<vmem>>, %arg2: memref<32x128xbf16, #tpu.memory_space<vmem>>, %arg3: memref<1x128xf32, #tpu.memory_space<vmem>>, %arg4: memref<32x128xf32, #tpu.memory_space<vmem>>) attributes {dimension_semantics = [#tpu.dimension_semantics<parallel>], iteration_bounds = array<i64: 1>, scalar_prefetch = 0 : i64, scratch_operands = 0 : i64, tpu.core_type = #tpu.core_type<tc>, window_params = [{transform_indices = @transform_0, window_bounds = array<i64: 32, 32>}, {pipeline_mode = #tpu.pipeline_mode<synchronous>, transform_indices = @transform_1, window_bounds = array<i64: 32, 128>}, {pipeline_mode = #tpu.pipeline_mode<synchronous>, transform_indices = @transform_2, window_bounds = array<i64: 1, 128>}, {transform_indices = @transform_3, window_bounds = array<i64: 32, 128>}]} {
    %c0 = arith.constant 0 : index
    %c0_0 = arith.constant 0 : index
    %0 = vector.load %arg1[%c0, %c0_0] : memref<32x32xf32, #tpu.memory_space<vmem>>, vector<32x32xf32>
    %1 = arith.truncf %0 : vector<32x32xf32> to vector<32x32xbf16>
    %c0_1 = arith.constant 0 : index
    %c0_2 = arith.constant 0 : index
    %2 = vector.load %arg2[%c0_1, %c0_2] : memref<32x128xbf16, #tpu.memory_space<vmem>>, vector<32x128xbf16>
    %cst = arith.constant dense<0.000000e+00> : vector<32x128xf32>
    %3 = tpu.matmul %1, %2, %cst {dimension_numbers = #tpu.dot_dimension_numbers<[1], [0], [0], [1], [0, 0, 1, 1], [], []>} : vector<32x32xbf16>, vector<32x128xbf16>, vector<32x128xf32> -> vector<32x128xf32>
    %c0_3 = arith.constant 0 : index
    %c0_4 = arith.constant 0 : index
    %4 = vector.load %arg3[%c0_3, %c0_4] : memref<1x128xf32, #tpu.memory_space<vmem>>, vector<1x128xf32>
    %5 = vector.broadcast %4 : vector<1x128xf32> to vector<32x128xf32>
    %6 = arith.addf %3, %5 : vector<32x128xf32>
    %c0_5 = arith.constant 0 : index
    %c0_6 = arith.constant 0 : index
    %7 = vector.load %arg4[%c0_5, %c0_6] : memref<32x128xf32, #tpu.memory_space<vmem>>, vector<32x128xf32>
    tpu.vector_store %arg4[%c0_5, %c0_6], %6 {strides = array<i32>} : memref<32x128xf32, #tpu.memory_space<vmem>>, vector<32x128xf32>,
    return
  }
  func.func @transform_0(%arg0: i32) -> (i32, i32) {
    %c0_i32 = arith.constant 0 : i32
    %c0_i32_0 = arith.constant 0 : i32
    return %arg0, %c0_i32 : i32, i32
  }
  func.func @transform_1(%arg0: i32) -> (i32, i32) {
    %c0_i32 = arith.constant 0 : i32
    %c0_i32_0 = arith.constant 0 : i32
    %c0_i32_1 = arith.constant 0 : i32
    return %c0_i32, %c0_i32_0 : i32, i32
  }
  func.func @transform_2(%arg0: i32) -> (i32, i32) {
    %c0_i32 = arith.constant 0 : i32
    %c0_i32_0 = arith.constant 0 : i32
    %c0_i32_1 = arith.constant 0 : i32
    return %c0_i32, %c0_i32_0 : i32, i32
  }
  func.func @transform_3(%arg0: i32) -> (i32, i32) {
    %c0_i32 = arith.constant 0 : i32
    %c0_i32_0 = arith.constant 0 : i32
    return %arg0, %c0_i32 : i32, i32
  }
}

module attributes {stable_mosaic.version = 11 : i64} {
  func.func @kernel(%arg0: i32, %arg1: memref<8x32xf32, #tpu.memory_space<vmem>>, %arg2: memref<32x128xbf16, #tpu.memory_space<vmem>>, %arg3: memref<1x128xf32, #tpu.memory_space<vmem>>, %arg4: memref<8x128xf32, #tpu.memory_space<vmem>>) attributes {dimension_semantics = [#tpu.dimension_semantics<parallel>], iteration_bounds = array<i64: 1>, scalar_prefetch = 0 : i64, scratch_operands = 0 : i64, tpu.core_type = #tpu.core_type<tc>, window_params = [{transform_indices = @transform_0, window_bounds = array<i64: 8, 32>}, {pipeline_mode = #tpu.pipeline_mode<synchronous>, transform_indices = @transform_1, window_bounds = array<i64: 32, 128>}, {pipeline_mode = #tpu.pipeline_mode<synchronous>, transform_indices = @transform_2, window_bounds = array<i64: 1, 128>}, {transform_indices = @transform_3, window_bounds = array<i64: 8, 128>}]} {
    %c0 = arith.constant 0 : index
    %c0_0 = arith.constant 0 : index
    %0 = vector.load %arg1[%c0, %c0_0] : memref<8x32xf32, #tpu.memory_space<vmem>>, vector<8x32xf32>
    %1 = arith.truncf %0 : vector<8x32xf32> to vector<8x32xbf16>
    %c0_1 = arith.constant 0 : index
    %c0_2 = arith.constant 0 : index
    %2 = vector.load %arg2[%c0_1, %c0_2] : memref<32x128xbf16, #tpu.memory_space<vmem>>, vector<32x128xbf16>
    %cst = arith.constant dense<0.000000e+00> : vector<8x128xf32>
    %3 = tpu.matmul %1, %2, %cst {dimension_numbers = #tpu.dot_dimension_numbers<[1], [0], [0], [1], [0, 0, 1, 1], [], []>} : vector<8x32xbf16>, vector<32x128xbf16>, vector<8x128xf32> -> vector<8x128xf32>
    %c0_3 = arith.constant 0 : index
    %c0_4 = arith.constant 0 : index
    %4 = vector.load %arg3[%c0_3, %c0_4] : memref<1x128xf32, #tpu.memory_space<vmem>>, vector<1x128xf32>
    %5 = vector.broadcast %4 : vector<1x128xf32> to vector<8x128xf32>
    %6 = arith.addf %3, %5 : vector<8x128xf32>
    %7 = arith.mulf %6, %6 : vector<8x128xf32>
    %8 = arith.mulf %6, %7 : vector<8x128xf32>
    %cst_5 = arith.constant 4.471500e-02 : f32
    %9 = vector.broadcast %cst_5 : f32 to vector<8x128xf32>
    %10 = arith.mulf %9, %8 : vector<8x128xf32>
    %11 = arith.addf %6, %10 : vector<8x128xf32>
    %cst_6 = arith.constant 0.797884583 : f32
    %12 = vector.broadcast %cst_6 : f32 to vector<8x128xf32>
    %13 = arith.mulf %12, %11 : vector<8x128xf32>
    %14 = math.tanh %13 : vector<8x128xf32>
    %cst_7 = arith.constant 1.000000e+00 : f32
    %15 = vector.broadcast %cst_7 : f32 to vector<8x128xf32>
    %16 = arith.addf %15, %14 : vector<8x128xf32>
    %cst_8 = arith.constant 5.000000e-01 : f32
    %17 = vector.broadcast %cst_8 : f32 to vector<8x128xf32>
    %18 = arith.mulf %17, %16 : vector<8x128xf32>
    %19 = arith.mulf %6, %18 : vector<8x128xf32>
    %c0_9 = arith.constant 0 : index
    %c0_10 = arith.constant 0 : index
    %20 = vector.load %arg4[%c0_9, %c0_10] : memref<8x128xf32, #tpu.memory_space<vmem>>, vector<8x128xf32>
    tpu.vector_store %arg4[%c0_9, %c0_10], %19 {strides = array<i32>} : memref<8x128xf32, #tpu.memory_space<vmem>>, vector<8x128xf32>,
    return
  }
  func.func @transform_0(%arg0: i32) -> (i32, i32) {
    %c0_i32 = arith.constant 0 : i32
    %c0_i32_0 = arith.constant 0 : i32
    return %arg0, %c0_i32 : i32, i32
  }
  func.func @transform_1(%arg0: i32) -> (i32, i32) {
    %c0_i32 = arith.constant 0 : i32
    %c0_i32_0 = arith.constant 0 : i32
    %c0_i32_1 = arith.constant 0 : i32
    return %c0_i32, %c0_i32_0 : i32, i32
  }
  func.func @transform_2(%arg0: i32) -> (i32, i32) {
    %c0_i32 = arith.constant 0 : i32
    %c0_i32_0 = arith.constant 0 : i32
    %c0_i32_1 = arith.constant 0 : i32
    return %c0_i32, %c0_i32_0 : i32, i32
  }
  func.func @transform_3(%arg0: i32) -> (i32, i32) {
    %c0_i32 = arith.constant 0 : i32
    %c0_i32_0 = arith.constant 0 : i32
    return %arg0, %c0_i32 : i32, i32
  }
}

</mosaic_0001>

<llo_original>
// kernel: squeeze.11
$region0: #{squeeze.11}
  %s0 = inlined_call_operand.vmem [shape: f32[4,10], index: 0, kind: input, shape index: {}]
  %s1 = inlined_call_operand.vmem [shape: f32[4,2,5], index: 1, kind: output, shape index: {}]
  $region1: #{squeeze.11} parent=0
    #allocation0 [shape = 'u8[16384]{0}', space=vmem, size = 0x4000, scoped, tag = 'scoped mem for output reshape']
    #allocation1 [shape = 'u8[4096]{0}', space=vmem, size = 0x1000, scoped, tag = 'scoped mem for input reshape']
    %s3 = sshllo.u32 0, 4
    %v4 = vld [vmem:[%s0] sm:%s3]
    %5 = vst [vmem:[#allocation1] sm:%s3] %v4
    %v6 = vld [vmem:[#allocation1] sm:$0xf]
    %vm7 = vcmask 39936
    %8 = vst.msk [vmem:[#allocation0] ss:$8 sm:$0xf] %vm7, %v6
    %v9 = vld [vmem:[#allocation1] sm:$0xf]
    %10 = vrot.lane.b32.xlu0 %v9, 123
    %v11 = vpop.permute.xlu0 %10
    %vm12 = vcmask 39936
    %s13 = scalar_lea.vmem [#allocation0], 1
    %14 = vst.msk [vmem:[%s13] ss:$8 sm:$0xf] %vm12, %v11
    %s16 = sshllo.u32 0, 2
    %v18 = vld [vmem:[#allocation0] sm:%s16]
    %s19 = sshllo.u32 0, 2
    %20 = vst [vmem:[%s1] sm:%s19] %v18
    %s21 = scalar_lea.vmem [#allocation0], 8
    %v22 = vld [vmem:[%s21] sm:%s16]
    %s23 = sshllo.u32 0, 2
    %s24 = scalar_lea.vmem %s1, 2
    %25 = vst [vmem:[%s24] sm:%s23] %v22
    %s26 = scalar_lea.vmem [#allocation0], 16
    %v27 = vld [vmem:[%s26] sm:%s16]
    %s28 = sshllo.u32 0, 2
    %s29 = smul.addr 2, 2
    %s30 = scalar_lea.vmem %s1, %s29
    %31 = vst [vmem:[%s30] sm:%s28] %v27
    %s32 = scalar_lea.vmem [#allocation0], 24
    %v33 = vld [vmem:[%s32] sm:%s16]
    %s34 = sshllo.u32 0, 2
    %s35 = smul.addr 2, 3
    %s36 = scalar_lea.vmem %s1, %s35
    %37 = vst [vmem:[%s36] sm:%s34] %v33

// kernel: squeeze.6
$region0: #{squeeze.6}
  %s0 = inlined_call_operand.vmem [shape: f32[1,10,32], index: 0, kind: input, shape index: {}]
  %s1 = inlined_call_operand.vmem [shape: f32[2,5,32], index: 1, kind: output, shape index: {}]
  %v2 = vld [vmem:[%s0] sm:$0xff]
  %vm3 = vcmask 261120
  %4 = vst.msk [vmem:[%s1] sm:$0x1f] %vm3, %v2
  %s5 = scalar_lea.vmem %s1, 3
  %6 = vst.msk [vmem:[%s5] sm:$0xe0] %vm3, %v2
  %s7 = scalar_lea.vmem %s0, 8
  %v8 = vld [vmem:[%s7] sm:$0x3]
  %vm9 = vcmask 261120
  %s10 = scalar_lea.vmem %s1, 11
  %11 = vst.msk [vmem:[%s10] sm:$0x3] %vm9, %v8

// kernel: vit21k_forward.9
$region0: #{vit21k_forward.9}
  #allocation0 [shape = 'u32[]', space=smem, size = 0x4, offset = 0x4, fixed_abs, tag = 'smem constant byte address 0x4 - core index']
  #allocation1 [shape = 'u32[144,128]{1,0:T(1,128)}', space=vmem, size = 0x12000, scoped, tag = 'internal scratch']
  %s0 = inlined_call_operand.vmem [shape: f32[8,32], index: 0, kind: input, shape index: {}]
  %s1 = inlined_call_operand.vmem [shape: bf16[32,128], index: 1, kind: input, shape index: {}]
  %s2 = inlined_call_operand.vmem [shape: f32[1,128], index: 2, kind: input, shape index: {}]
  %s3 = inlined_call_operand.vmem [shape: f32[8,128], index: 3, kind: output, shape index: {}]
  %s4 = sld [smem:[#allocation0]]
  $region22: #{vit21k_forward.9} parent=0
    _
  %s6 = ssub.s32 1, %s4
  %s7 = scalar_select 0, %s6, %s4
  // Predicated region
  $region2: #{vit21k_forward.9} parent=0 // pred_check
    _
  $region3: #{vit21k_forward.9} parent=0 // pred_check_branch
    %9 = sbr.rel (0) target = $region5
  $region4: #{vit21k_forward.9} parent=0 // pred_region
    _
  $region5: #{vit21k_forward.9} parent=0 // pred_fallthru
    _
  // Predicated region
  $region6: #{vit21k_forward.9} parent=0 // pred_check
    _
  $region7: #{vit21k_forward.9} parent=0 // pred_check_branch
    %11 = sbr.rel (0) target = $region9
  $region8: #{vit21k_forward.9} parent=0 // pred_region
    _
  $region9: #{vit21k_forward.9} parent=0 // pred_fallthru
    _
  // Predicated region
  $region10: #{vit21k_forward.9} parent=0 // pred_check
    _
  $region11: #{vit21k_forward.9} parent=0 // pred_check_branch
    %13 = sbr.rel (0) target = $region13
  $region12: #{vit21k_forward.9} parent=0 // pred_region
    _
  $region13: #{vit21k_forward.9} parent=0 // pred_fallthru
    _
  %v15 = vld [vmem:[%s0] sm:$0xff]
  %v16 = vpack.c.bf16 %v15, %v15
  %v17 = vld [vmem:[%s1] sm:$0xf]
  %v18 = vld [vmem:[%s1 + $0x4] sm:$0xf]
  %v19 = vld [vmem:[%s1 + $0x8] sm:$0xf]
  %v20 = vld [vmem:[%s1 + $0xc] sm:$0xf]
  %v21 = vld [vmem:[%s2] sm:$0x1]
  %v23 = vlaneseq
  %v24 = vshrl.u32 %v23, 7
  %v25 = vsub.s32 0, %v24
  %v26 = vrot.slane %v21, %v25
  %v32 = vunpack.c.l.b16 %v17
  %v33 = vunpack.c.l.b16 %v18
  %v34 = vunpack.c.l.b16 %v19
  %v35 = vunpack.c.l.b16 %v20
  %v36 = vpack.c.b16 %v33, %v32
  %v37 = vpack.c.b16 %v35, %v34
  %vm40 = vcmask 261120
  %v42 = vsel %vm40, %v16, 0
  %44 = vmatprep.subr.bf16.mxu0 0
  %45 = vmatpush1.bf16.msra.mxu0 %v36
  %46 = vmatprep.subr.bf16.mxu0 0
  %47 = vmatpush1.bf16.msra.mxu0 %v37
  %48 = vmatprep.subr.bf16.mxu0 0
  %49 = vmatpush1.bf16.msra.mxu0 0
  %50 = vmatprep.subr.bf16.mxu0 0
  %51 = vmatpush1.bf16.msra.mxu0 0
  %52 = vmatprep.subr.bf16.mxu0 0
  %53 = vmatpush1.bf16.msra.mxu0 0
  %54 = vmatprep.subr.bf16.mxu0 0
  %55 = vmatpush1.bf16.msra.mxu0 0
  %56 = vmatprep.subr.bf16.mxu0 0
  %57 = vmatpush1.bf16.msra.mxu0 0
  %58 = vmatprep.subr.bf16.mxu0 0
  %59 = vmatpush1.bf16.msra.mxu0 0
  %60 = vmatprep.subr.bf16.mxu0 0
  %61 = vmatpush1.bf16.msra.mxu0 0
  %62 = vmatprep.subr.bf16.mxu0 0
  %63 = vmatpush1.bf16.msra.mxu0 0
  %64 = vmatprep.subr.bf16.mxu0 0
  %65 = vmatpush1.bf16.msra.mxu0 0
  %66 = vmatprep.subr.bf16.mxu0 0
  %67 = vmatpush1.bf16.msra.mxu0 0
  %68 = vmatprep.subr.bf16.mxu0 0
  %69 = vmatpush1.bf16.msra.mxu0 0
  %70 = vmatprep.subr.bf16.mxu0 0
  %71 = vmatpush1.bf16.msra.mxu0 0
  %72 = vmatprep.subr.bf16.mxu0 0
  %73 = vmatpush1.bf16.msra.mxu0 0
  %74 = vmatprep.subr.bf16.mxu0 0
  %75 = vmatpush1.bf16.msra.mxu0 0
  %76 = vmatprep.mubr.bf16.mxu0 0
  %77 = vmatmul.mubr.bf16.gmra.mrb[0].mxu0 %v42
  %v78 = vpop.f32.mrb[0].mxu0
  %v79 = vadd.f32 %v26, %v78
  %v80 = vpop.f32.mrb[0].mxu0
  %v81 = vpop.f32.mrb[0].mxu0
  %v82 = vpop.f32.mrb[0].mxu0
  %83 = vdwg.mxu0
  %84 = vst [vmem:[%s3] sm:$0xff] %v79
  // Predicated region
  $region14: #{vit21k_forward.9} parent=0 // pred_check
    _
  $region15: #{vit21k_forward.9} parent=0 // pred_check_branch
    %86 = sbr.rel (0) target = $region17
  $region16: #{vit21k_forward.9} parent=0 // pred_region
    _
  $region17: #{vit21k_forward.9} parent=0 // pred_fallthru
    _
  // Predicated region
  $region18: #{vit21k_forward.9} parent=0 // pred_check
    _
  $region19: #{vit21k_forward.9} parent=0 // pred_check_branch
    %88 = sbr.rel (0) target = $region21
  $region20: #{vit21k_forward.9} parent=0 // pred_region
    _
  $region21: #{vit21k_forward.9} parent=0 // pred_fallthru
    _

// kernel: vit21k_forward.5
$region0: #{vit21k_forward.5}
  #allocation0 [shape = 'u32[]', space=smem, size = 0x4, offset = 0x4, fixed_abs, tag = 'smem constant byte address 0x4 - core index']
  #allocation1 [shape = 'u32[144,128]{1,0:T(1,128)}', space=vmem, size = 0x12000, scoped, tag = 'internal scratch']
  %s0 = inlined_call_operand.vmem [shape: f32[8,256], index: 0, kind: input, shape index: {}]
  %s1 = inlined_call_operand.vmem [shape: bf16[256,32], index: 1, kind: input, shape index: {}]
  %s2 = inlined_call_operand.vmem [shape: f32[1,32], index: 2, kind: input, shape index: {}]
  %s3 = inlined_call_operand.vmem [shape: f32[8,32], index: 3, kind: output, shape index: {}]
  %s4 = sld [smem:[#allocation0]]
  $region22: #{vit21k_forward.5} parent=0
    _
  %s6 = ssub.s32 1, %s4
  %s7 = scalar_select 0, %s6, %s4
  // Predicated region
  $region2: #{vit21k_forward.5} parent=0 // pred_check
    _
  $region3: #{vit21k_forward.5} parent=0 // pred_check_branch
    %9 = sbr.rel (0) target = $region5
  $region4: #{vit21k_forward.5} parent=0 // pred_region
    _
  $region5: #{vit21k_forward.5} parent=0 // pred_fallthru
    _
  // Predicated region
  $region6: #{vit21k_forward.5} parent=0 // pred_check
    _
  $region7: #{vit21k_forward.5} parent=0 // pred_check_branch
    %11 = sbr.rel (0) target = $region9
  $region8: #{vit21k_forward.5} parent=0 // pred_region
    _
  $region9: #{vit21k_forward.5} parent=0 // pred_fallthru
    _
  // Predicated region
  $region10: #{vit21k_forward.5} parent=0 // pred_check
    _
  $region11: #{vit21k_forward.5} parent=0 // pred_check_branch
    %13 = sbr.rel (0) target = $region13
  $region12: #{vit21k_forward.5} parent=0 // pred_region
    _
  $region13: #{vit21k_forward.5} parent=0 // pred_fallthru
    _
  %v15 = vld [vmem:[%s0] sm:$0xff]
  %v16 = vld [vmem:[%s0 + $0x8] sm:$0xff]
  %v17 = vpack.c.bf16 %v15, %v15
  %v18 = vpack.c.bf16 %v16, %v16
  %v19 = vld [vmem:[%s1] sm:$0xf]
  %v20 = vld [vmem:[%s1 + $0x4] sm:$0xf]
  %v21 = vld [vmem:[%s1 + $0x8] sm:$0xf]
  %v22 = vld [vmem:[%s1 + $0xc] sm:$0xf]
  %v23 = vld [vmem:[%s1 + $0x10] sm:$0xf]
  %v24 = vld [vmem:[%s1 + $0x14] sm:$0xf]
  %v25 = vld [vmem:[%s1 + $0x18] sm:$0xf]
  %v26 = vld [vmem:[%s1 + $0x1c] sm:$0xf]
  %v27 = vld [vmem:[%s1 + $0x20] sm:$0xf]
  %v28 = vld [vmem:[%s1 + $0x24] sm:$0xf]
  %v29 = vld [vmem:[%s1 + $0x28] sm:$0xf]
  %v30 = vld [vmem:[%s1 + $0x2c] sm:$0xf]
  %v31 = vld [vmem:[%s1 + $0x30] sm:$0xf]
  %v32 = vld [vmem:[%s1 + $0x34] sm:$0xf]
  %v33 = vld [vmem:[%s1 + $0x38] sm:$0xf]
  %v34 = vld [vmem:[%s1 + $0x3c] sm:$0xf]
  %v35 = vld [vmem:[%s1 + $0x40] sm:$0xf]
  %v36 = vld [vmem:[%s1 + $0x44] sm:$0xf]
  %v37 = vld [vmem:[%s1 + $0x48] sm:$0xf]
  %v38 = vld [vmem:[%s1 + $0x4c] sm:$0xf]
  %v39 = vld [vmem:[%s1 + $0x50] sm:$0xf]
  %v40 = vld [vmem:[%s1 + $0x54] sm:$0xf]
  %v41 = vld [vmem:[%s1 + $0x58] sm:$0xf]
  %v42 = vld [vmem:[%s1 + $0x5c] sm:$0xf]
  %v43 = vld [vmem:[%s1 + $0x60] sm:$0xf]
  %v44 = vld [vmem:[%s1 + $0x64] sm:$0xf]
  %v45 = vld [vmem:[%s1 + $0x68] sm:$0xf]
  %v46 = vld [vmem:[%s1 + $0x6c] sm:$0xf]
  %v47 = vld [vmem:[%s1 + $0x70] sm:$0xf]
  %v48 = vld [vmem:[%s1 + $0x74] sm:$0xf]
  %v49 = vld [vmem:[%s1 + $0x78] sm:$0xf]
  %v50 = vld [vmem:[%s1 + $0x7c] sm:$0xf]
  %v51 = vld [vmem:[%s2] sm:$0x1]
  %v53 = vlaneseq
  %v54 = vshrl.u32 %v53, 7
  %v55 = vsub.s32 0, %v54
  %v56 = vrot.slane %v51, %v55
  %v90 = vunpack.c.l.b16 %v19
  %v91 = vunpack.c.l.b16 %v20
  %v92 = vunpack.c.l.b16 %v21
  %v93 = vunpack.c.l.b16 %v22
  %v94 = vunpack.c.l.b16 %v23
  %v95 = vunpack.c.l.b16 %v24
  %v96 = vunpack.c.l.b16 %v25
  %v97 = vunpack.c.l.b16 %v26
  %v98 = vunpack.c.l.b16 %v27
  %v99 = vunpack.c.l.b16 %v28
  %v100 = vunpack.c.l.b16 %v29
  %v101 = vunpack.c.l.b16 %v30
  %v102 = vunpack.c.l.b16 %v31
  %v103 = vunpack.c.l.b16 %v32
  %v104 = vunpack.c.l.b16 %v33
  %v105 = vunpack.c.l.b16 %v34
  %v106 = vunpack.c.l.b16 %v35
  %v107 = vunpack.c.l.b16 %v36
  %v108 = vunpack.c.l.b16 %v37
  %v109 = vunpack.c.l.b16 %v38
  %v110 = vunpack.c.l.b16 %v39
  %v111 = vunpack.c.l.b16 %v40
  %v112 = vunpack.c.l.b16 %v41
  %v113 = vunpack.c.l.b16 %v42
  %v114 = vunpack.c.l.b16 %v43
  %v115 = vunpack.c.l.b16 %v44
  %v116 = vunpack.c.l.b16 %v45
  %v117 = vunpack.c.l.b16 %v46
  %v118 = vunpack.c.l.b16 %v47
  %v119 = vunpack.c.l.b16 %v48
  %v120 = vunpack.c.l.b16 %v49
  %v121 = vunpack.c.l.b16 %v50
  %v122 = vpack.c.b16 %v91, %v90
  %v123 = vpack.c.b16 %v93, %v92
  %v124 = vpack.c.b16 %v95, %v94
  %v125 = vpack.c.b16 %v97, %v96
  %v126 = vpack.c.b16 %v99, %v98
  %v127 = vpack.c.b16 %v101, %v100
  %v128 = vpack.c.b16 %v103, %v102
  %v129 = vpack.c.b16 %v105, %v104
  %v130 = vpack.c.b16 %v107, %v106
  %v131 = vpack.c.b16 %v109, %v108
  %v132 = vpack.c.b16 %v111, %v110
  %v133 = vpack.c.b16 %v113, %v112
  %v134 = vpack.c.b16 %v115, %v114
  %v135 = vpack.c.b16 %v117, %v116
  %v136 = vpack.c.b16 %v119, %v118
  %v137 = vpack.c.b16 %v121, %v120
  %154 = vmatprep.subr.bf16.mxu0 0
  %155 = vmatpush1.bf16.msra.mxu0 %v122
  %156 = vmatprep.subr.bf16.mxu0 0
  %157 = vmatpush1.bf16.msra.mxu0 %v123
  %158 = vmatprep.subr.bf16.mxu0 0
  %159 = vmatpush1.bf16.msra.mxu0 %v124
  %160 = vmatprep.subr.bf16.mxu0 0
  %161 = vmatpush1.bf16.msra.mxu0 %v125
  %162 = vmatprep.subr.bf16.mxu0 0
  %163 = vmatpush1.bf16.msra.mxu0 %v126
  %164 = vmatprep.subr.bf16.mxu0 0
  %165 = vmatpush1.bf16.msra.mxu0 %v127
  %166 = vmatprep.subr.bf16.mxu0 0
  %167 = vmatpush1.bf16.msra.mxu0 %v128
  %168 = vmatprep.subr.bf16.mxu0 0
  %169 = vmatpush1.bf16.msra.mxu0 %v129
  %170 = vmatprep.subr.bf16.mxu0 0
  %171 = vmatpush1.bf16.msra.mxu0 %v130
  %172 = vmatprep.subr.bf16.mxu0 0
  %173 = vmatpush1.bf16.msra.mxu0 %v131
  %174 = vmatprep.subr.bf16.mxu0 0
  %175 = vmatpush1.bf16.msra.mxu0 %v132
  %176 = vmatprep.subr.bf16.mxu0 0
  %177 = vmatpush1.bf16.msra.mxu0 %v133
  %178 = vmatprep.subr.bf16.mxu0 0
  %179 = vmatpush1.bf16.msra.mxu0 %v134
  %180 = vmatprep.subr.bf16.mxu0 0
  %181 = vmatpush1.bf16.msra.mxu0 %v135
  %182 = vmatprep.subr.bf16.mxu0 0
  %183 = vmatpush1.bf16.msra.mxu0 %v136
  %184 = vmatprep.subr.bf16.mxu0 0
  %185 = vmatpush1.bf16.msra.mxu0 %v137
  %186 = vmatprep.mubr.bf16.mxu0 %v18
  %187 = vmatmul.mubr.bf16.gmra.mrb[0].mxu0 %v17
  %v188 = vpop.f32.mrb[0].mxu0
  %v189 = vadd.f32 %v56, %v188
  %v190 = vpop.f32.mrb[0].mxu0
  %v191 = vpop.f32.mrb[0].mxu0
  %v192 = vpop.f32.mrb[0].mxu0
  %193 = vdwg.mxu0
  %vm194 = vcmask 261120
  %195 = vst.msk [vmem:[%s3] sm:$0xff] %vm194, %v189
  // Predicated region
  $region14: #{vit21k_forward.5} parent=0 // pred_check
    _
  $region15: #{vit21k_forward.5} parent=0 // pred_check_branch
    %197 = sbr.rel (0) target = $region17
  $region16: #{vit21k_forward.5} parent=0 // pred_region
    _
  $region17: #{vit21k_forward.5} parent=0 // pred_fallthru
    _
  // Predicated region
  $region18: #{vit21k_forward.5} parent=0 // pred_check
    _
  $region19: #{vit21k_forward.5} parent=0 // pred_check_branch
    %199 = sbr.rel (0) target = $region21
  $region20: #{vit21k_forward.5} parent=0 // pred_region
    _
  $region21: #{vit21k_forward.5} parent=0 // pred_fallthru
    _

// kernel: vit21k_forward.8
$region0: #{vit21k_forward.8}
  #allocation0 [shape = 'u32[]', space=smem, size = 0x4, offset = 0x4, fixed_abs, tag = 'smem constant byte address 0x4 - core index']
  #allocation1 [shape = 'u32[144,128]{1,0:T(1,128)}', space=vmem, size = 0x12000, scoped, tag = 'internal scratch']
  %s0 = inlined_call_operand.vmem [shape: f32[32,32], index: 0, kind: input, shape index: {}]
  %s1 = inlined_call_operand.vmem [shape: bf16[32,128], index: 1, kind: input, shape index: {}]
  %s2 = inlined_call_operand.vmem [shape: f32[1,128], index: 2, kind: input, shape index: {}]
  %s3 = inlined_call_operand.vmem [shape: f32[32,128], index: 3, kind: output, shape index: {}]
  %s4 = sld [smem:[#allocation0]]
  $region22: #{vit21k_forward.8} parent=0
    _
  %s6 = ssub.s32 1, %s4
  %s7 = scalar_select 0, %s6, %s4
  // Predicated region
  $region2: #{vit21k_forward.8} parent=0 // pred_check
    _
  $region3: #{vit21k_forward.8} parent=0 // pred_check_branch
    %9 = sbr.rel (0) target = $region5
  $region4: #{vit21k_forward.8} parent=0 // pred_region
    _
  $region5: #{vit21k_forward.8} parent=0 // pred_fallthru
    _
  // Predicated region
  $region6: #{vit21k_forward.8} parent=0 // pred_check
    _
  $region7: #{vit21k_forward.8} parent=0 // pred_check_branch
    %11 = sbr.rel (0) target = $region9
  $region8: #{vit21k_forward.8} parent=0 // pred_region
    _
  $region9: #{vit21k_forward.8} parent=0 // pred_fallthru
    _
  // Predicated region
  $region10: #{vit21k_forward.8} parent=0 // pred_check
    _
  $region11: #{vit21k_forward.8} parent=0 // pred_check_branch
    %13 = sbr.rel (0) target = $region13
  $region12: #{vit21k_forward.8} parent=0 // pred_region
    _
  $region13: #{vit21k_forward.8} parent=0 // pred_fallthru
    _
  %v15 = vld [vmem:[%s0] sm:$0xff]
  %v16 = vld [vmem:[%s0 + $0x8] sm:$0xff]
  %v17 = vld [vmem:[%s0 + $0x10] sm:$0xff]
  %v18 = vld [vmem:[%s0 + $0x18] sm:$0xff]
  %v19 = vpack.c.bf16 %v16, %v15
  %v20 = vpack.c.bf16 %v18, %v17
  %v21 = vld [vmem:[%s1] sm:$0xf]
  %v22 = vld [vmem:[%s1 + $0x4] sm:$0xf]
  %v23 = vld [vmem:[%s1 + $0x8] sm:$0xf]
  %v24 = vld [vmem:[%s1 + $0xc] sm:$0xf]
  %v25 = vld [vmem:[%s2] sm:$0x1]
  %v27 = vlaneseq
  %v28 = vshrl.u32 %v27, 7
  %v29 = vsub.s32 0, %v28
  %v30 = vrot.slane %v25, %v29
  %v36 = vunpack.c.l.b16 %v21
  %v37 = vunpack.c.l.b16 %v22
  %v38 = vunpack.c.l.b16 %v23
  %v39 = vunpack.c.l.b16 %v24
  %v40 = vpack.c.b16 %v37, %v36
  %v41 = vpack.c.b16 %v39, %v38
  %vm44 = vcmask 261120
  %v46 = vsel %vm44, %v19, 0
  %v49 = vsel %vm44, %v20, 0
  %51 = vmatprep.subr.bf16.mxu0 0
  %52 = vmatpush1.bf16.msra.mxu0 %v40
  %53 = vmatprep.subr.bf16.mxu0 0
  %54 = vmatpush1.bf16.msra.mxu0 %v41
  %55 = vmatprep.subr.bf16.mxu0 0
  %56 = vmatpush1.bf16.msra.mxu0 0
  %57 = vmatprep.subr.bf16.mxu0 0
  %58 = vmatpush1.bf16.msra.mxu0 0
  %59 = vmatprep.subr.bf16.mxu0 0
  %60 = vmatpush1.bf16.msra.mxu0 0
  %61 = vmatprep.subr.bf16.mxu0 0
  %62 = vmatpush1.bf16.msra.mxu0 0
  %63 = vmatprep.subr.bf16.mxu0 0
  %64 = vmatpush1.bf16.msra.mxu0 0
  %65 = vmatprep.subr.bf16.mxu0 0
  %66 = vmatpush1.bf16.msra.mxu0 0
  %67 = vmatprep.subr.bf16.mxu0 0
  %68 = vmatpush1.bf16.msra.mxu0 0
  %69 = vmatprep.subr.bf16.mxu0 0
  %70 = vmatpush1.bf16.msra.mxu0 0
  %71 = vmatprep.subr.bf16.mxu0 0
  %72 = vmatpush1.bf16.msra.mxu0 0
  %73 = vmatprep.subr.bf16.mxu0 0
  %74 = vmatpush1.bf16.msra.mxu0 0
  %75 = vmatprep.subr.bf16.mxu0 0
  %76 = vmatpush1.bf16.msra.mxu0 0
  %77 = vmatprep.subr.bf16.mxu0 0
  %78 = vmatpush1.bf16.msra.mxu0 0
  %79 = vmatprep.subr.bf16.mxu0 0
  %80 = vmatpush1.bf16.msra.mxu0 0
  %81 = vmatprep.subr.bf16.mxu0 0
  %82 = vmatpush1.bf16.msra.mxu0 0
  %83 = vmatprep.mubr.bf16.mxu0 0
  %84 = vmatmul.mubr.bf16.gmra.mrb[0].mxu0 %v46
  %v85 = vpop.f32.mrb[0].mxu0
  %v86 = vadd.f32 %v30, %v85
  %v87 = vpop.f32.mrb[0].mxu0
  %v88 = vpop.f32.mrb[0].mxu0
  %v89 = vadd.f32 %v30, %v88
  %v90 = vpop.f32.mrb[0].mxu0
  %91 = vmatprep.mubr.bf16.mxu0 0
  %92 = vmatmul.mubr.bf16.gmra.mrb[0].mxu0 %v49
  %v93 = vpop.f32.mrb[0].mxu0
  %v94 = vadd.f32 %v30, %v93
  %v95 = vpop.f32.mrb[0].mxu0
  %v96 = vpop.f32.mrb[0].mxu0
  %v97 = vadd.f32 %v30, %v96
  %v98 = vpop.f32.mrb[0].mxu0
  %99 = vdwg.mxu0
  %100 = vst [vmem:[%s3] sm:$0xff] %v86
  %101 = vst [vmem:[%s3 + $0x8] sm:$0xff] %v89
  %102 = vst [vmem:[%s3 + $0x10] sm:$0xff] %v94
  %103 = vst [vmem:[%s3 + $0x18] sm:$0xff] %v97
  // Predicated region
  $region14: #{vit21k_forward.8} parent=0 // pred_check
    _
  $region15: #{vit21k_forward.8} parent=0 // pred_check_branch
    %105 = sbr.rel (0) target = $region17
  $region16: #{vit21k_forward.8} parent=0 // pred_region
    _
  $region17: #{vit21k_forward.8} parent=0 // pred_fallthru
    _
  // Predicated region
  $region18: #{vit21k_forward.8} parent=0 // pred_check
    _
  $region19: #{vit21k_forward.8} parent=0 // pred_check_branch
    %107 = sbr.rel (0) target = $region21
  $region20: #{vit21k_forward.8} parent=0 // pred_region
    _
  $region21: #{vit21k_forward.8} parent=0 // pred_fallthru
    _

// kernel: vit21k_forward.7
$region0: #{vit21k_forward.7}
  #allocation0 [shape = 'u32[]', space=smem, size = 0x4, offset = 0x4, fixed_abs, tag = 'smem constant byte address 0x4 - core index']
  #allocation1 [shape = 'u32[144,128]{1,0:T(1,128)}', space=vmem, size = 0x12000, scoped, tag = 'internal scratch']
  %s0 = inlined_call_operand.vmem [shape: f32[8,32], index: 0, kind: input, shape index: {}]
  %s1 = inlined_call_operand.vmem [shape: bf16[32,128], index: 1, kind: input, shape index: {}]
  %s2 = inlined_call_operand.vmem [shape: f32[1,128], index: 2, kind: input, shape index: {}]
  %s3 = inlined_call_operand.vmem [shape: f32[8,128], index: 3, kind: output, shape index: {}]
  %s4 = sld [smem:[#allocation0]]
  $region22: #{vit21k_forward.7} parent=0
    _
  %s6 = ssub.s32 1, %s4
  %s7 = scalar_select 0, %s6, %s4
  // Predicated region
  $region2: #{vit21k_forward.7} parent=0 // pred_check
    _
  $region3: #{vit21k_forward.7} parent=0 // pred_check_branch
    %9 = sbr.rel (0) target = $region5
  $region4: #{vit21k_forward.7} parent=0 // pred_region
    _
  $region5: #{vit21k_forward.7} parent=0 // pred_fallthru
    _
  // Predicated region
  $region6: #{vit21k_forward.7} parent=0 // pred_check
    _
  $region7: #{vit21k_forward.7} parent=0 // pred_check_branch
    %11 = sbr.rel (0) target = $region9
  $region8: #{vit21k_forward.7} parent=0 // pred_region
    _
  $region9: #{vit21k_forward.7} parent=0 // pred_fallthru
    _
  // Predicated region
  $region10: #{vit21k_forward.7} parent=0 // pred_check
    _
  $region11: #{vit21k_forward.7} parent=0 // pred_check_branch
    %13 = sbr.rel (0) target = $region13
  $region12: #{vit21k_forward.7} parent=0 // pred_region
    _
  $region13: #{vit21k_forward.7} parent=0 // pred_fallthru
    _
  %v15 = vld [vmem:[%s0] sm:$0xff]
  %v16 = vpack.c.bf16 %v15, %v15
  %v17 = vld [vmem:[%s1] sm:$0xf]
  %v18 = vld [vmem:[%s1 + $0x4] sm:$0xf]
  %v19 = vld [vmem:[%s1 + $0x8] sm:$0xf]
  %v20 = vld [vmem:[%s1 + $0xc] sm:$0xf]
  %v21 = vld [vmem:[%s2] sm:$0x1]
  %v23 = vlaneseq
  %v24 = vshrl.u32 %v23, 7
  %v25 = vsub.s32 0, %v24
  %v26 = vrot.slane %v21, %v25
  %v32 = vunpack.c.l.b16 %v17
  %v33 = vunpack.c.l.b16 %v18
  %v34 = vunpack.c.l.b16 %v19
  %v35 = vunpack.c.l.b16 %v20
  %v36 = vpack.c.b16 %v33, %v32
  %v37 = vpack.c.b16 %v35, %v34
  %vm40 = vcmask 261120
  %v42 = vsel %vm40, %v16, 0
  %44 = vmatprep.subr.bf16.mxu0 0
  %45 = vmatpush1.bf16.msra.mxu0 %v36
  %46 = vmatprep.subr.bf16.mxu0 0
  %47 = vmatpush1.bf16.msra.mxu0 %v37
  %48 = vmatprep.subr.bf16.mxu0 0
  %49 = vmatpush1.bf16.msra.mxu0 0
  %50 = vmatprep.subr.bf16.mxu0 0
  %51 = vmatpush1.bf16.msra.mxu0 0
  %52 = vmatprep.subr.bf16.mxu0 0
  %53 = vmatpush1.bf16.msra.mxu0 0
  %54 = vmatprep.subr.bf16.mxu0 0
  %55 = vmatpush1.bf16.msra.mxu0 0
  %56 = vmatprep.subr.bf16.mxu0 0
  %57 = vmatpush1.bf16.msra.mxu0 0
  %58 = vmatprep.subr.bf16.mxu0 0
  %59 = vmatpush1.bf16.msra.mxu0 0
  %60 = vmatprep.subr.bf16.mxu0 0
  %61 = vmatpush1.bf16.msra.mxu0 0
  %62 = vmatprep.subr.bf16.mxu0 0
  %63 = vmatpush1.bf16.msra.mxu0 0
  %64 = vmatprep.subr.bf16.mxu0 0
  %65 = vmatpush1.bf16.msra.mxu0 0
  %66 = vmatprep.subr.bf16.mxu0 0
  %67 = vmatpush1.bf16.msra.mxu0 0
  %68 = vmatprep.subr.bf16.mxu0 0
  %69 = vmatpush1.bf16.msra.mxu0 0
  %70 = vmatprep.subr.bf16.mxu0 0
  %71 = vmatpush1.bf16.msra.mxu0 0
  %72 = vmatprep.subr.bf16.mxu0 0
  %73 = vmatpush1.bf16.msra.mxu0 0
  %74 = vmatprep.subr.bf16.mxu0 0
  %75 = vmatpush1.bf16.msra.mxu0 0
  %76 = vmatprep.mubr.bf16.mxu0 0
  %77 = vmatmul.mubr.bf16.gmra.mrb[0].mxu0 %v42
  %v78 = vpop.f32.mrb[0].mxu0
  %v79 = vadd.f32 %v26, %v78
  %v80 = vpop.f32.mrb[0].mxu0
  %v81 = vpop.f32.mrb[0].mxu0
  %v82 = vpop.f32.mrb[0].mxu0
  %83 = vdwg.mxu0
  %v84 = vmul.f32 %v79, %v79
  %v85 = vmul.f32 %v79, %v84
  %v86 = vmul.f32 %v85, 0.044715
  %v87 = vadd.f32 %v79, %v86
  %v88 = vmul.f32 %v87, 0.7978846
  %v89 = vtanh.pop %v88
  %v90 = vadd.f32 %v89, 1.0
  %v91 = vmul.f32 %v90, 0.5
  %v92 = vmul.f32 %v79, %v91
  %93 = vst [vmem:[%s3] sm:$0xff] %v92
  // Predicated region
  $region14: #{vit21k_forward.7} parent=0 // pred_check
    _
  $region15: #{vit21k_forward.7} parent=0 // pred_check_branch
    %95 = sbr.rel (0) target = $region17
  $region16: #{vit21k_forward.7} parent=0 // pred_region
    _
  $region17: #{vit21k_forward.7} parent=0 // pred_fallthru
    _
  // Predicated region
  $region18: #{vit21k_forward.7} parent=0 // pred_check
    _
  $region19: #{vit21k_forward.7} parent=0 // pred_check_branch
    %97 = sbr.rel (0) target = $region21
  $region20: #{vit21k_forward.7} parent=0 // pred_region
    _
  $region21: #{vit21k_forward.7} parent=0 // pred_fallthru
    _

// kernel: vit21k_forward.6
$region0: #{vit21k_forward.6}
  #allocation0 [shape = 'u32[]', space=smem, size = 0x4, offset = 0x4, fixed_abs, tag = 'smem constant byte address 0x4 - core index']
  #allocation1 [shape = 'u32[144,128]{1,0:T(1,128)}', space=vmem, size = 0x12000, scoped, tag = 'internal scratch']
  #allocation2 [shape = 'f32[10,32]{1,0:T(8,128)}', space=vmem, size = 0x2000, scoped, tag = 'scratch operand']
  %s0 = inlined_call_operand.vmem [shape: f32[10,32], index: 0, kind: input, shape index: {}]
  %s1 = inlined_call_operand.vmem [shape: f32[4,1,32], index: 1, kind: input, shape index: {}]
  %s2 = inlined_call_operand.vmem [shape: f32[4,1,32], index: 2, kind: input, shape index: {}]
  %s3 = inlined_call_operand.vmem [shape: bf16[4,32,96], index: 3, kind: input, shape index: {}]
  %s4 = inlined_call_operand.vmem [shape: f32[4,1,96], index: 4, kind: input, shape index: {}]
  %s5 = inlined_call_operand.vmem [shape: bf16[4,32,32], index: 5, kind: input, shape index: {}]
  %s6 = inlined_call_operand.vmem [shape: f32[4,1,32], index: 6, kind: input, shape index: {}]
  %s7 = inlined_call_operand.vmem [shape: f32[4,1,32], index: 7, kind: input, shape index: {}]
  %s8 = inlined_call_operand.vmem [shape: f32[4,1,32], index: 8, kind: input, shape index: {}]
  %s9 = inlined_call_operand.vmem [shape: bf16[4,32,128], index: 9, kind: input, shape index: {}]
  %s10 = inlined_call_operand.vmem [shape: f32[4,1,128], index: 10, kind: input, shape index: {}]
  %s11 = inlined_call_operand.vmem [shape: bf16[4,128,32], index: 11, kind: input, shape index: {}]
  %s12 = inlined_call_operand.vmem [shape: f32[4,1,32], index: 12, kind: input, shape index: {}]
  %s13 = inlined_call_operand.vmem [shape: bf16[4,32,8], index: 13, kind: input, shape index: {}]
  %s14 = inlined_call_operand.vmem [shape: f32[4,1,8], index: 14, kind: input, shape index: {}]
  %s15 = inlined_call_operand.vmem [shape: bf16[4,8,32], index: 15, kind: input, shape index: {}]
  %s16 = inlined_call_operand.vmem [shape: f32[4,1,32], index: 16, kind: input, shape index: {}]
  %s17 = inlined_call_operand.vmem [shape: f32[4,1,32], index: 17, kind: input, shape index: {}]
  %s18 = inlined_call_operand.vmem [shape: f32[4,1,1], index: 18, kind: input, shape index: {}]
  %s19 = inlined_call_operand.vmem [shape: f32[4,10,32], index: 19, kind: output, shape index: {0}]
  %s20 = inlined_call_operand.vmem [shape: f32[4,10,128], index: 20, kind: output, shape index: {1}]
  %21 = xla_tuple %s19, %s20
  %s22 = sld [smem:[#allocation0]]
  $region121: #{vit21k_forward.6} parent=0
    _
  %s24 = ssub.s32 1, %s22
  %s25 = scalar_select 0, %s24, %s22
  loop: start=0, step=1, limit=6
  $region2: #{vit21k_forward.6} parent=0 // loop_pre_header
    _
  $region3: #{vit21k_forward.6} parent=0 // loop_header
    %s27 = sphi 0, %s31
    %p28 = scmp.ge.s32.totalorder %s27, 6
    %s35 = sphi 0, %s35
    %s37 = sphi 0, %s35
    %s38 = sphi 0, %s37
    %s52 = sphi 0, %s38
    %s58 = sphi 0, %s60
    %s61 = sphi 0, %s58
    %s62 = sphi 0, %s61
    %s78 = sphi 0, %s62
    %s84 = sphi 0, %s86
    %s87 = sphi 0, %s84
    %s88 = sphi 0, %s87
    %s104 = sphi 0, %s88
    %s110 = sphi 0, %s112
    %s113 = sphi 0, %s110
    %s114 = sphi 0, %s113
    %s130 = sphi 0, %s114
    %s136 = sphi 0, %s138
    %s139 = sphi 0, %s136
    %s140 = sphi 0, %s139
    %s156 = sphi 0, %s140
    %s162 = sphi 0, %s164
    %s165 = sphi 0, %s162
    %s166 = sphi 0, %s165
    %s182 = sphi 0, %s166
    %s188 = sphi 0, %s190
    %s191 = sphi 0, %s188
    %s192 = sphi 0, %s191
    %s208 = sphi 0, %s192
    %s214 = sphi 0, %s216
    %s217 = sphi 0, %s214
    %s218 = sphi 0, %s217
    %s234 = sphi 0, %s218
    %s240 = sphi 0, %s242
    %s243 = sphi 0, %s240
    %s244 = sphi 0, %s243
    %s260 = sphi 0, %s244
    %s266 = sphi 0, %s268
    %s269 = sphi 0, %s266
    %s270 = sphi 0, %s269
    %s286 = sphi 0, %s270
    %s292 = sphi 0, %s294
    %s295 = sphi 0, %s292
    %s296 = sphi 0, %s295
    %s312 = sphi 0, %s296
    %s318 = sphi 0, %s320
    %s321 = sphi 0, %s318
    %s322 = sphi 0, %s321
    %s338 = sphi 0, %s322
    %s344 = sphi 0, %s346
    %s347 = sphi 0, %s344
    %s348 = sphi 0, %s347
    %s364 = sphi 0, %s348
    %s370 = sphi 0, %s372
    %s373 = sphi 0, %s370
    %s374 = sphi 0, %s373
    %s390 = sphi 0, %s374
    %s396 = sphi 0, %s398
    %s399 = sphi 0, %s396
    %s400 = sphi 0, %s399
    %s416 = sphi 0, %s400
    %s422 = sphi 0, %s424
    %s425 = sphi 0, %s422
    %s426 = sphi 0, %s425
    %s442 = sphi 0, %s426
    %s448 = sphi 0, %s450
    %s451 = sphi 0, %s448
    %s452 = sphi 0, %s451
    %s468 = sphi 0, %s452
    %s474 = sphi 0, %s476
    %s477 = sphi 0, %s474
    %s478 = sphi 0, %s477
    %s494 = sphi 0, %s478
    %s500 = sphi 0, %s502
    %s503 = sphi 0, %s500
    %s504 = sphi 0, %s503
    %s520 = sphi 0, %s504
    %s526 = sphi 0, %s528
    %s529 = sphi 0, %s526
    %s530 = sphi 0, %s529
    %s546 = sphi 0, %s530
    %s552 = sphi 0, %s554
    %s555 = sphi 0, %s552
    %s556 = sphi 0, %s555
    %s572 = sphi 0, %s556
  $region4: #{vit21k_forward.6} parent=0 // loop_header_branch
    %30 = sbr.rel (%p28) target = $region8
  $region5: #{vit21k_forward.6} parent=0 // loop_body
    %s32 = ssub.s32 %s27, 1
    %s33 = ssub.s32 %s27, 2
    %s34 = sadd.s32 %s27, 1
    %s36 = sadd.s32 %s35, 1
    %p39 = scmp.eq.s32.totalorder %s27, 3
    %p40 = scmp.ne.s32.totalorder %s35, %s37
    %p41 = scmp.eq.s32.totalorder %s27, 0
    %p42 = por %p40, %p41
    %p43 = scmp.ne.s32.totalorder %s35, %s37
    %p44 = scmp.eq.s32.totalorder %s32, 3
    %p45 = por %p43, %p44
    %p46 = scmp.ne.s32.totalorder %s37, %s38
    %p47 = scmp.eq.s32.totalorder %s32, 0
    %p48 = por %p46, %p47
    %p49 = scmp.ne.s32.totalorder %s37, %s38
    %p50 = scmp.eq.s32.totalorder %s33, 3
    %p51 = por %p49, %p50
    %p53 = scmp.ne.s32.totalorder %s38, %s52
    %p54 = scmp.eq.s32.totalorder %s33, 0
    %p55 = por %p53, %p54
    %s56 = ssub.s32 %s27, %s34
    %p57 = scmp.eq.s32.totalorder %s56, 0
    %s59 = sadd.s32 %s58, 1
    %s60 = scalar_select %p57, %s58, %s59
    %p63 = pneg %p57
    %p64 = scmp.eq.s32.totalorder %s27, 3
    %p65 = por %p63, %p64
    %p66 = scmp.ne.s32.totalorder %s58, %s61
    %p67 = scmp.eq.s32.totalorder %s27, 0
    %p68 = por %p66, %p67
    %p69 = scmp.ne.s32.totalorder %s58, %s61
    %p70 = scmp.eq.s32.totalorder %s32, 3
    %p71 = por %p69, %p70
    %p72 = scmp.ne.s32.totalorder %s61, %s62
    %p73 = scmp.eq.s32.totalorder %s32, 0
    %p74 = por %p72, %p73
    %p75 = scmp.ne.s32.totalorder %s61, %s62
    %p76 = scmp.eq.s32.totalorder %s33, 3
    %p77 = por %p75, %p76
    %p79 = scmp.ne.s32.totalorder %s62, %s78
    %p80 = scmp.eq.s32.totalorder %s33, 0
    %p81 = por %p79, %p80
    %s82 = ssub.s32 %s27, %s34
    %p83 = scmp.eq.s32.totalorder %s82, 0
    %s85 = sadd.s32 %s84, 1
    %s86 = scalar_select %p83, %s84, %s85
    %p89 = pneg %p83
    %p90 = scmp.eq.s32.totalorder %s27, 3
    %p91 = por %p89, %p90
    %p92 = scmp.ne.s32.totalorder %s84, %s87
    %p93 = scmp.eq.s32.totalorder %s27, 0
    %p94 = por %p92, %p93
    %p95 = scmp.ne.s32.totalorder %s84, %s87
    %p96 = scmp.eq.s32.totalorder %s32, 3
    %p97 = por %p95, %p96
    %p98 = scmp.ne.s32.totalorder %s87, %s88
    %p99 = scmp.eq.s32.totalorder %s32, 0
    %p100 = por %p98, %p99
    %p101 = scmp.ne.s32.totalorder %s87, %s88
    %p102 = scmp.eq.s32.totalorder %s33, 3
    %p103 = por %p101, %p102
    %p105 = scmp.ne.s32.totalorder %s88, %s104
    %p106 = scmp.eq.s32.totalorder %s33, 0
    %p107 = por %p105, %p106
    %s108 = ssub.s32 %s27, %s34
    %p109 = scmp.eq.s32.totalorder %s108, 0
    %s111 = sadd.s32 %s110, 1
    %s112 = scalar_select %p109, %s110, %s111
    %p115 = pneg %p109
    %p116 = scmp.eq.s32.totalorder %s27, 3
    %p117 = por %p115, %p116
    %p118 = scmp.ne.s32.totalorder %s110, %s113
    %p119 = scmp.eq.s32.totalorder %s27, 0
    %p120 = por %p118, %p119
    %p121 = scmp.ne.s32.totalorder %s110, %s113
    %p122 = scmp.eq.s32.totalorder %s32, 3
    %p123 = por %p121, %p122
    %p124 = scmp.ne.s32.totalorder %s113, %s114
    %p125 = scmp.eq.s32.totalorder %s32, 0
    %p126 = por %p124, %p125
    %p127 = scmp.ne.s32.totalorder %s113, %s114
    %p128 = scmp.eq.s32.totalorder %s33, 3
    %p129 = por %p127, %p128
    %p131 = scmp.ne.s32.totalorder %s114, %s130
    %p132 = scmp.eq.s32.totalorder %s33, 0
    %p133 = por %p131, %p132
    %s134 = ssub.s32 %s27, %s34
    %p135 = scmp.eq.s32.totalorder %s134, 0
    %s137 = sadd.s32 %s136, 1
    %s138 = scalar_select %p135, %s136, %s137
    %p141 = pneg %p135
    %p142 = scmp.eq.s32.totalorder %s27, 3
    %p143 = por %p141, %p142
    %p144 = scmp.ne.s32.totalorder %s136, %s139
    %p145 = scmp.eq.s32.totalorder %s27, 0
    %p146 = por %p144, %p145
    %p147 = scmp.ne.s32.totalorder %s136, %s139
    %p148 = scmp.eq.s32.totalorder %s32, 3
    %p149 = por %p147, %p148
    %p150 = scmp.ne.s32.totalorder %s139, %s140
    %p151 = scmp.eq.s32.totalorder %s32, 0
    %p152 = por %p150, %p151
    %p153 = scmp.ne.s32.totalorder %s139, %s140
    %p154 = scmp.eq.s32.totalorder %s33, 3
    %p155 = por %p153, %p154
    %p157 = scmp.ne.s32.totalorder %s140, %s156
    %p158 = scmp.eq.s32.totalorder %s33, 0
    %p159 = por %p157, %p158
    %s160 = ssub.s32 %s27, %s34
    %p161 = scmp.eq.s32.totalorder %s160, 0
    %s163 = sadd.s32 %s162, 1
    %s164 = scalar_select %p161, %s162, %s163
    %p167 = pneg %p161
    %p168 = scmp.eq.s32.totalorder %s27, 3
    %p169 = por %p167, %p168
    %p170 = scmp.ne.s32.totalorder %s162, %s165
    %p171 = scmp.eq.s32.totalorder %s27, 0
    %p172 = por %p170, %p171
    %p173 = scmp.ne.s32.totalorder %s162, %s165
    %p174 = scmp.eq.s32.totalorder %s32, 3
    %p175 = por %p173, %p174
    %p176 = scmp.ne.s32.totalorder %s165, %s166
    %p177 = scmp.eq.s32.totalorder %s32, 0
    %p178 = por %p176, %p177
    %p179 = scmp.ne.s32.totalorder %s165, %s166
    %p180 = scmp.eq.s32.totalorder %s33, 3
    %p181 = por %p179, %p180
    %p183 = scmp.ne.s32.totalorder %s166, %s182
    %p184 = scmp.eq.s32.totalorder %s33, 0
    %p185 = por %p183, %p184
    %s186 = ssub.s32 %s27, %s34
    %p187 = scmp.eq.s32.totalorder %s186, 0
    %s189 = sadd.s32 %s188, 1
    %s190 = scalar_select %p187, %s188, %s189
    %p193 = pneg %p187
    %p194 = scmp.eq.s32.totalorder %s27, 3
    %p195 = por %p193, %p194
    %p196 = scmp.ne.s32.totalorder %s188, %s191
    %p197 = scmp.eq.s32.totalorder %s27, 0
    %p198 = por %p196, %p197
    %p199 = scmp.ne.s32.totalorder %s188, %s191
    %p200 = scmp.eq.s32.totalorder %s32, 3
    %p201 = por %p199, %p200
    %p202 = scmp.ne.s32.totalorder %s191, %s192
    %p203 = scmp.eq.s32.totalorder %s32, 0
    %p204 = por %p202, %p203
    %p205 = scmp.ne.s32.totalorder %s191, %s192
    %p206 = scmp.eq.s32.totalorder %s33, 3
    %p207 = por %p205, %p206
    %p209 = scmp.ne.s32.totalorder %s192, %s208
    %p210 = scmp.eq.s32.totalorder %s33, 0
    %p211 = por %p209, %p210
    %s212 = ssub.s32 %s27, %s34
    %p213 = scmp.eq.s32.totalorder %s212, 0
    %s215 = sadd.s32 %s214, 1
    %s216 = scalar_select %p213, %s214, %s215
    %p219 = pneg %p213
    %p220 = scmp.eq.s32.totalorder %s27, 3
    %p221 = por %p219, %p220
    %p222 = scmp.ne.s32.totalorder %s214, %s217
    %p223 = scmp.eq.s32.totalorder %s27, 0
    %p224 = por %p222, %p223
    %p225 = scmp.ne.s32.totalorder %s214, %s217
    %p226 = scmp.eq.s32.totalorder %s32, 3
    %p227 = por %p225, %p226
    %p228 = scmp.ne.s32.totalorder %s217, %s218
    %p229 = scmp.eq.s32.totalorder %s32, 0
    %p230 = por %p228, %p229
    %p231 = scmp.ne.s32.totalorder %s217, %s218
    %p232 = scmp.eq.s32.totalorder %s33, 3
    %p233 = por %p231, %p232
    %p235 = scmp.ne.s32.totalorder %s218, %s234
    %p236 = scmp.eq.s32.totalorder %s33, 0
    %p237 = por %p235, %p236
    %s238 = ssub.s32 %s27, %s34
    %p239 = scmp.eq.s32.totalorder %s238, 0
    %s241 = sadd.s32 %s240, 1
    %s242 = scalar_select %p239, %s240, %s241
    %p245 = pneg %p239
    %p246 = scmp.eq.s32.totalorder %s27, 3
    %p247 = por %p245, %p246
    %p248 = scmp.ne.s32.totalorder %s240, %s243
    %p249 = scmp.eq.s32.totalorder %s27, 0
    %p250 = por %p248, %p249
    %p251 = scmp.ne.s32.totalorder %s240, %s243
    %p252 = scmp.eq.s32.totalorder %s32, 3
    %p253 = por %p251, %p252
    %p254 = scmp.ne.s32.totalorder %s243, %s244
    %p255 = scmp.eq.s32.totalorder %s32, 0
    %p256 = por %p254, %p255
    %p257 = scmp.ne.s32.totalorder %s243, %s244
    %p258 = scmp.eq.s32.totalorder %s33, 3
    %p259 = por %p257, %p258
    %p261 = scmp.ne.s32.totalorder %s244, %s260
    %p262 = scmp.eq.s32.totalorder %s33, 0
    %p263 = por %p261, %p262
    %s264 = ssub.s32 %s27, %s34
    %p265 = scmp.eq.s32.totalorder %s264, 0
    %s267 = sadd.s32 %s266, 1
    %s268 = scalar_select %p265, %s266, %s267
    %p271 = pneg %p265
    %p272 = scmp.eq.s32.totalorder %s27, 3
    %p273 = por %p271, %p272
    %p274 = scmp.ne.s32.totalorder %s266, %s269
    %p275 = scmp.eq.s32.totalorder %s27, 0
    %p276 = por %p274, %p275
    %p277 = scmp.ne.s32.totalorder %s266, %s269
    %p278 = scmp.eq.s32.totalorder %s32, 3
    %p279 = por %p277, %p278
    %p280 = scmp.ne.s32.totalorder %s269, %s270
    %p281 = scmp.eq.s32.totalorder %s32, 0
    %p282 = por %p280, %p281
    %p283 = scmp.ne.s32.totalorder %s269, %s270
    %p284 = scmp.eq.s32.totalorder %s33, 3
    %p285 = por %p283, %p284
    %p287 = scmp.ne.s32.totalorder %s270, %s286
    %p288 = scmp.eq.s32.totalorder %s33, 0
    %p289 = por %p287, %p288
    %s290 = ssub.s32 %s27, %s34
    %p291 = scmp.eq.s32.totalorder %s290, 0
    %s293 = sadd.s32 %s292, 1
    %s294 = scalar_select %p291, %s292, %s293
    %p297 = pneg %p291
    %p298 = scmp.eq.s32.totalorder %s27, 3
    %p299 = por %p297, %p298
    %p300 = scmp.ne.s32.totalorder %s292, %s295
    %p301 = scmp.eq.s32.totalorder %s27, 0
    %p302 = por %p300, %p301
    %p303 = scmp.ne.s32.totalorder %s292, %s295
    %p304 = scmp.eq.s32.totalorder %s32, 3
    %p305 = por %p303, %p304
    %p306 = scmp.ne.s32.totalorder %s295, %s296
    %p307 = scmp.eq.s32.totalorder %s32, 0
    %p308 = por %p306, %p307
    %p309 = scmp.ne.s32.totalorder %s295, %s296
    %p310 = scmp.eq.s32.totalorder %s33, 3
    %p311 = por %p309, %p310
    %p313 = scmp.ne.s32.totalorder %s296, %s312
    %p314 = scmp.eq.s32.totalorder %s33, 0
    %p315 = por %p313, %p314
    %s316 = ssub.s32 %s27, %s34
    %p317 = scmp.eq.s32.totalorder %s316, 0
    %s319 = sadd.s32 %s318, 1
    %s320 = scalar_select %p317, %s318, %s319
    %p323 = pneg %p317
    %p324 = scmp.eq.s32.totalorder %s27, 3
    %p325 = por %p323, %p324
    %p326 = scmp.ne.s32.totalorder %s318, %s321
    %p327 = scmp.eq.s32.totalorder %s27, 0
    %p328 = por %p326, %p327
    %p329 = scmp.ne.s32.totalorder %s318, %s321
    %p330 = scmp.eq.s32.totalorder %s32, 3
    %p331 = por %p329, %p330
    %p332 = scmp.ne.s32.totalorder %s321, %s322
    %p333 = scmp.eq.s32.totalorder %s32, 0
    %p334 = por %p332, %p333
    %p335 = scmp.ne.s32.totalorder %s321, %s322
    %p336 = scmp.eq.s32.totalorder %s33, 3
    %p337 = por %p335, %p336
    %p339 = scmp.ne.s32.totalorder %s322, %s338
    %p340 = scmp.eq.s32.totalorder %s33, 0
    %p341 = por %p339, %p340
    %s342 = ssub.s32 %s27, %s34
    %p343 = scmp.eq.s32.totalorder %s342, 0
    %s345 = sadd.s32 %s344, 1
    %s346 = scalar_select %p343, %s344, %s345
    %p349 = pneg %p343
    %p350 = scmp.eq.s32.totalorder %s27, 3
    %p351 = por %p349, %p350
    %p352 = scmp.ne.s32.totalorder %s344, %s347
    %p353 = scmp.eq.s32.totalorder %s27, 0
    %p354 = por %p352, %p353
    %p355 = scmp.ne.s32.totalorder %s344, %s347
    %p356 = scmp.eq.s32.totalorder %s32, 3
    %p357 = por %p355, %p356
    %p358 = scmp.ne.s32.totalorder %s347, %s348
    %p359 = scmp.eq.s32.totalorder %s32, 0
    %p360 = por %p358, %p359
    %p361 = scmp.ne.s32.totalorder %s347, %s348
    %p362 = scmp.eq.s32.totalorder %s33, 3
    %p363 = por %p361, %p362
    %p365 = scmp.ne.s32.totalorder %s348, %s364
    %p366 = scmp.eq.s32.totalorder %s33, 0
    %p367 = por %p365, %p366
    %s368 = ssub.s32 %s27, %s34
    %p369 = scmp.eq.s32.totalorder %s368, 0
    %s371 = sadd.s32 %s370, 1
    %s372 = scalar_select %p369, %s370, %s371
    %p375 = pneg %p369
    %p376 = scmp.eq.s32.totalorder %s27, 3
    %p377 = por %p375, %p376
    %p378 = scmp.ne.s32.totalorder %s370, %s373
    %p379 = scmp.eq.s32.totalorder %s27, 0
    %p380 = por %p378, %p379
    %p381 = scmp.ne.s32.totalorder %s370, %s373
    %p382 = scmp.eq.s32.totalorder %s32, 3
    %p383 = por %p381, %p382
    %p384 = scmp.ne.s32.totalorder %s373, %s374
    %p385 = scmp.eq.s32.totalorder %s32, 0
    %p386 = por %p384, %p385
    %p387 = scmp.ne.s32.totalorder %s373, %s374
    %p388 = scmp.eq.s32.totalorder %s33, 3
    %p389 = por %p387, %p388
    %p391 = scmp.ne.s32.totalorder %s374, %s390
    %p392 = scmp.eq.s32.totalorder %s33, 0
    %p393 = por %p391, %p392
    %s394 = ssub.s32 %s27, %s34
    %p395 = scmp.eq.s32.totalorder %s394, 0
    %s397 = sadd.s32 %s396, 1
    %s398 = scalar_select %p395, %s396, %s397
    %p401 = pneg %p395
    %p402 = scmp.eq.s32.totalorder %s27, 3
    %p403 = por %p401, %p402
    %p404 = scmp.ne.s32.totalorder %s396, %s399
    %p405 = scmp.eq.s32.totalorder %s27, 0
    %p406 = por %p404, %p405
    %p407 = scmp.ne.s32.totalorder %s396, %s399
    %p408 = scmp.eq.s32.totalorder %s32, 3
    %p409 = por %p407, %p408
    %p410 = scmp.ne.s32.totalorder %s399, %s400
    %p411 = scmp.eq.s32.totalorder %s32, 0
    %p412 = por %p410, %p411
    %p413 = scmp.ne.s32.totalorder %s399, %s400
    %p414 = scmp.eq.s32.totalorder %s33, 3
    %p415 = por %p413, %p414
    %p417 = scmp.ne.s32.totalorder %s400, %s416
    %p418 = scmp.eq.s32.totalorder %s33, 0
    %p419 = por %p417, %p418
    %s420 = ssub.s32 %s27, %s34
    %p421 = scmp.eq.s32.totalorder %s420, 0
    %s423 = sadd.s32 %s422, 1
    %s424 = scalar_select %p421, %s422, %s423
    %p427 = pneg %p421
    %p428 = scmp.eq.s32.totalorder %s27, 3
    %p429 = por %p427, %p428
    %p430 = scmp.ne.s32.totalorder %s422, %s425
    %p431 = scmp.eq.s32.totalorder %s27, 0
    %p432 = por %p430, %p431
    %p433 = scmp.ne.s32.totalorder %s422, %s425
    %p434 = scmp.eq.s32.totalorder %s32, 3
    %p435 = por %p433, %p434
    %p436 = scmp.ne.s32.totalorder %s425, %s426
    %p437 = scmp.eq.s32.totalorder %s32, 0
    %p438 = por %p436, %p437
    %p439 = scmp.ne.s32.totalorder %s425, %s426
    %p440 = scmp.eq.s32.totalorder %s33, 3
    %p441 = por %p439, %p440
    %p443 = scmp.ne.s32.totalorder %s426, %s442
    %p444 = scmp.eq.s32.totalorder %s33, 0
    %p445 = por %p443, %p444
    %s446 = ssub.s32 %s27, %s34
    %p447 = scmp.eq.s32.totalorder %s446, 0
    %s449 = sadd.s32 %s448, 1
    %s450 = scalar_select %p447, %s448, %s449
    %p453 = pneg %p447
    %p454 = scmp.eq.s32.totalorder %s27, 3
    %p455 = por %p453, %p454
    %p456 = scmp.ne.s32.totalorder %s448, %s451
    %p457 = scmp.eq.s32.totalorder %s27, 0
    %p458 = por %p456, %p457
    %p459 = scmp.ne.s32.totalorder %s448, %s451
    %p460 = scmp.eq.s32.totalorder %s32, 3
    %p461 = por %p459, %p460
    %p462 = scmp.ne.s32.totalorder %s451, %s452
    %p463 = scmp.eq.s32.totalorder %s32, 0
    %p464 = por %p462, %p463
    %p465 = scmp.ne.s32.totalorder %s451, %s452
    %p466 = scmp.eq.s32.totalorder %s33, 3
    %p467 = por %p465, %p466
    %p469 = scmp.ne.s32.totalorder %s452, %s468
    %p470 = scmp.eq.s32.totalorder %s33, 0
    %p471 = por %p469, %p470
    %s472 = ssub.s32 %s27, %s34
    %p473 = scmp.eq.s32.totalorder %s472, 0
    %s475 = sadd.s32 %s474, 1
    %s476 = scalar_select %p473, %s474, %s475
    %p479 = pneg %p473
    %p480 = scmp.eq.s32.totalorder %s27, 3
    %p481 = por %p479, %p480
    %p482 = scmp.ne.s32.totalorder %s474, %s477
    %p483 = scmp.eq.s32.totalorder %s27, 0
    %p484 = por %p482, %p483
    %p485 = scmp.ne.s32.totalorder %s474, %s477
    %p486 = scmp.eq.s32.totalorder %s32, 3
    %p487 = por %p485, %p486
    %p488 = scmp.ne.s32.totalorder %s477, %s478
    %p489 = scmp.eq.s32.totalorder %s32, 0
    %p490 = por %p488, %p489
    %p491 = scmp.ne.s32.totalorder %s477, %s478
    %p492 = scmp.eq.s32.totalorder %s33, 3
    %p493 = por %p491, %p492
    %p495 = scmp.ne.s32.totalorder %s478, %s494
    %p496 = scmp.eq.s32.totalorder %s33, 0
    %p497 = por %p495, %p496
    %s498 = ssub.s32 %s27, %s34
    %p499 = scmp.eq.s32.totalorder %s498, 0
    %s501 = sadd.s32 %s500, 1
    %s502 = scalar_select %p499, %s500, %s501
    %p505 = pneg %p499
    %p506 = scmp.eq.s32.totalorder %s27, 3
    %p507 = por %p505, %p506
    %p508 = scmp.ne.s32.totalorder %s500, %s503
    %p509 = scmp.eq.s32.totalorder %s27, 0
    %p510 = por %p508, %p509
    %p511 = scmp.ne.s32.totalorder %s500, %s503
    %p512 = scmp.eq.s32.totalorder %s32, 3
    %p513 = por %p511, %p512
    %p514 = scmp.ne.s32.totalorder %s503, %s504
    %p515 = scmp.eq.s32.totalorder %s32, 0
    %p516 = por %p514, %p515
    %p517 = scmp.ne.s32.totalorder %s503, %s504
    %p518 = scmp.eq.s32.totalorder %s33, 3
    %p519 = por %p517, %p518
    %p521 = scmp.ne.s32.totalorder %s504, %s520
    %p522 = scmp.eq.s32.totalorder %s33, 0
    %p523 = por %p521, %p522
    %s524 = ssub.s32 %s27, %s34
    %p525 = scmp.eq.s32.totalorder %s524, 0
    %s527 = sadd.s32 %s526, 1
    %s528 = scalar_select %p525, %s526, %s527
    %p531 = pneg %p525
    %p532 = scmp.eq.s32.totalorder %s27, 3
    %p533 = por %p531, %p532
    %p534 = scmp.ne.s32.totalorder %s526, %s529
    %p535 = scmp.eq.s32.totalorder %s27, 0
    %p536 = por %p534, %p535
    %p537 = scmp.ne.s32.totalorder %s526, %s529
    %p538 = scmp.eq.s32.totalorder %s32, 3
    %p539 = por %p537, %p538
    %p540 = scmp.ne.s32.totalorder %s529, %s530
    %p541 = scmp.eq.s32.totalorder %s32, 0
    %p542 = por %p540, %p541
    %p543 = scmp.ne.s32.totalorder %s529, %s530
    %p544 = scmp.eq.s32.totalorder %s33, 3
    %p545 = por %p543, %p544
    %p547 = scmp.ne.s32.totalorder %s530, %s546
    %p548 = scmp.eq.s32.totalorder %s33, 0
    %p549 = por %p547, %p548
    %s550 = ssub.s32 %s27, %s34
    %p551 = scmp.eq.s32.totalorder %s550, 0
    %s553 = sadd.s32 %s552, 1
    %s554 = scalar_select %p551, %s552, %s553
    %p557 = pneg %p551
    %p558 = scmp.eq.s32.totalorder %s27, 3
    %p559 = por %p557, %p558
    %p560 = scmp.ne.s32.totalorder %s552, %s555
    %p561 = scmp.eq.s32.totalorder %s27, 0
    %p562 = por %p560, %p561
    %p563 = scmp.ne.s32.totalorder %s552, %s555
    %p564 = scmp.eq.s32.totalorder %s32, 3
    %p565 = por %p563, %p564
    %p566 = scmp.ne.s32.totalorder %s555, %s556
    %p567 = scmp.eq.s32.totalorder %s32, 0
    %p568 = por %p566, %p567
    %p569 = scmp.ne.s32.totalorder %s555, %s556
    %p570 = scmp.eq.s32.totalorder %s33, 3
    %p571 = por %p569, %p570
    %p573 = scmp.ne.s32.totalorder %s556, %s572
    %p574 = scmp.eq.s32.totalorder %s33, 0
    %p575 = por %p573, %p574
    %p576 = scmp.le.s32.totalorder 1, %s27
    %p577 = scmp.lt.s32.totalorder %s27, 5
    %p578 = pnand %p576, %p577
    %p579 = pneg %p578
    // Predicated region
    $region9: #{vit21k_forward.6} parent=5 // pred_check
      _
    $region10: #{vit21k_forward.6} parent=5 // pred_check_branch
      %581 = sbr.rel (%p578) target = $region12
    $region11: #{vit21k_forward.6} parent=5 // pred_region
      %s582 = ssub.s32 %s27, 1
      // Predicated region
      $region13: #{vit21k_forward.6} parent=11 // pred_check
        %p583 = pneg %p48
      $region14: #{vit21k_forward.6} parent=11 // pred_check_branch
        %585 = sbr.rel (%p583) target = $region16
      $region15: #{vit21k_forward.6} parent=11 // pred_region
        _
      $region16: #{vit21k_forward.6} parent=11 // pred_fallthru
        _
    $region12: #{vit21k_forward.6} parent=5 // pred_fallthru
      _
    %p586 = scmp.lt.s32.totalorder %s27, 4
    // Predicated region
    $region17: #{vit21k_forward.6} parent=5 // pred_check
      %p587 = pneg %p586
    $region18: #{vit21k_forward.6} parent=5 // pred_check_branch
      %589 = sbr.rel (%p587) target = $region20
    $region19: #{vit21k_forward.6} parent=5 // pred_region
      // Predicated region
      $region21: #{vit21k_forward.6} parent=19 // pred_check
        %p590 = pneg %p68
      $region22: #{vit21k_forward.6} parent=19 // pred_check_branch
        %592 = sbr.rel (%p590) target = $region24
      $region23: #{vit21k_forward.6} parent=19 // pred_region
        %p593 = scmp.lt.s32.totalorder %s27, 3
        %s594 = scalar_select %p593, %s27, 3
        %s595 = scalar_lea.vmem %s1, %s594
      $region24: #{vit21k_forward.6} parent=19 // pred_fallthru
        _
      // Predicated region
      $region25: #{vit21k_forward.6} parent=19 // pred_check
        %p596 = pneg %p94
      $region26: #{vit21k_forward.6} parent=19 // pred_check_branch
        %598 = sbr.rel (%p596) target = $region28
      $region27: #{vit21k_forward.6} parent=19 // pred_region
        %p599 = scmp.lt.s32.totalorder %s27, 3
        %s600 = scalar_select %p599, %s27, 3
        %s601 = scalar_lea.vmem %s2, %s600
      $region28: #{vit21k_forward.6} parent=19 // pred_fallthru
        _
      // Predicated region
      $region29: #{vit21k_forward.6} parent=19 // pred_check
        %p602 = pneg %p120
      $region30: #{vit21k_forward.6} parent=19 // pred_check_branch
        %604 = sbr.rel (%p602) target = $region32
      $region31: #{vit21k_forward.6} parent=19 // pred_region
        %p605 = scmp.lt.s32.totalorder %s27, 3
        %s606 = scalar_select %p605, %s27, 3
        %s607 = smul.addr %s606, 4
        %s608 = smul.addr %s607, 4
        %s609 = scalar_lea.vmem %s3, %s608
      $region32: #{vit21k_forward.6} parent=19 // pred_fallthru
        _
      // Predicated region
      $region33: #{vit21k_forward.6} parent=19 // pred_check
        %p610 = pneg %p146
      $region34: #{vit21k_forward.6} parent=19 // pred_check_branch
        %612 = sbr.rel (%p610) target = $region36
      $region35: #{vit21k_forward.6} parent=19 // pred_region
        %p613 = scmp.lt.s32.totalorder %s27, 3
        %s614 = scalar_select %p613, %s27, 3
        %s615 = scalar_lea.vmem %s4, %s614
      $region36: #{vit21k_forward.6} parent=19 // pred_fallthru
        _
      // Predicated region
      $region37: #{vit21k_forward.6} parent=19 // pred_check
        %p616 = pneg %p172
      $region38: #{vit21k_forward.6} parent=19 // pred_check_branch
        %618 = sbr.rel (%p616) target = $region40
      $region39: #{vit21k_forward.6} parent=19 // pred_region
        %p619 = scmp.lt.s32.totalorder %s27, 3
        %s620 = scalar_select %p619, %s27, 3
        %s621 = smul.addr %s620, 4
        %s622 = smul.addr %s621, 4
        %s623 = scalar_lea.vmem %s5, %s622
      $region40: #{vit21k_forward.6} parent=19 // pred_fallthru
        _
      // Predicated region
      $region41: #{vit21k_forward.6} parent=19 // pred_check
        %p624 = pneg %p198
      $region42: #{vit21k_forward.6} parent=19 // pred_check_branch
        %626 = sbr.rel (%p624) target = $region44
      $region43: #{vit21k_forward.6} parent=19 // pred_region
        %p627 = scmp.lt.s32.totalorder %s27, 3
        %s628 = scalar_select %p627, %s27, 3
        %s629 = scalar_lea.vmem %s6, %s628
      $region44: #{vit21k_forward.6} parent=19 // pred_fallthru
        _
      // Predicated region
      $region45: #{vit21k_forward.6} parent=19 // pred_check
        %p630 = pneg %p224
      $region46: #{vit21k_forward.6} parent=19 // pred_check_branch
        %632 = sbr.rel (%p630) target = $region48
      $region47: #{vit21k_forward.6} parent=19 // pred_region
        %p633 = scmp.lt.s32.totalorder %s27, 3
        %s634 = scalar_select %p633, %s27, 3
        %s635 = scalar_lea.vmem %s7, %s634
      $region48: #{vit21k_forward.6} parent=19 // pred_fallthru
        _
      // Predicated region
      $region49: #{vit21k_forward.6} parent=19 // pred_check
        %p636 = pneg %p250
      $region50: #{vit21k_forward.6} parent=19 // pred_check_branch
        %638 = sbr.rel (%p636) target = $region52
      $region51: #{vit21k_forward.6} parent=19 // pred_region
        %p639 = scmp.lt.s32.totalorder %s27, 3
        %s640 = scalar_select %p639, %s27, 3
        %s641 = scalar_lea.vmem %s8, %s640
      $region52: #{vit21k_forward.6} parent=19 // pred_fallthru
        _
      // Predicated region
      $region53: #{vit21k_forward.6} parent=19 // pred_check
        %p642 = pneg %p276
      $region54: #{vit21k_forward.6} parent=19 // pred_check_branch
        %644 = sbr.rel (%p642) target = $region56
      $region55: #{vit21k_forward.6} parent=19 // pred_region
        %p645 = scmp.lt.s32.totalorder %s27, 3
        %s646 = scalar_select %p645, %s27, 3
        %s647 = smul.addr %s646, 4
        %s648 = smul.addr %s647, 4
        %s649 = scalar_lea.vmem %s9, %s648
      $region56: #{vit21k_forward.6} parent=19 // pred_fallthru
        _
      // Predicated region
      $region57: #{vit21k_forward.6} parent=19 // pred_check
        %p650 = pneg %p302
      $region58: #{vit21k_forward.6} parent=19 // pred_check_branch
        %652 = sbr.rel (%p650) target = $region60
      $region59: #{vit21k_forward.6} parent=19 // pred_region
        %p653 = scmp.lt.s32.totalorder %s27, 3
        %s654 = scalar_select %p653, %s27, 3
        %s655 = scalar_lea.vmem %s10, %s654
      $region60: #{vit21k_forward.6} parent=19 // pred_fallthru
        _
      // Predicated region
      $region61: #{vit21k_forward.6} parent=19 // pred_check
        %p656 = pneg %p328
      $region62: #{vit21k_forward.6} parent=19 // pred_check_branch
        %658 = sbr.rel (%p656) target = $region64
      $region63: #{vit21k_forward.6} parent=19 // pred_region
        %p659 = scmp.lt.s32.totalorder %s27, 3
        %s660 = scalar_select %p659, %s27, 3
        %s661 = smul.addr %s660, 16
        %s662 = smul.addr %s661, 4
        %s663 = scalar_lea.vmem %s11, %s662
      $region64: #{vit21k_forward.6} parent=19 // pred_fallthru
        _
      // Predicated region
      $region65: #{vit21k_forward.6} parent=19 // pred_check
        %p664 = pneg %p354
      $region66: #{vit21k_forward.6} parent=19 // pred_check_branch
        %666 = sbr.rel (%p664) target = $region68
      $region67: #{vit21k_forward.6} parent=19 // pred_region
        %p667 = scmp.lt.s32.totalorder %s27, 3
        %s668 = scalar_select %p667, %s27, 3
        %s669 = scalar_lea.vmem %s12, %s668
      $region68: #{vit21k_forward.6} parent=19 // pred_fallthru
        _
      // Predicated region
      $region69: #{vit21k_forward.6} parent=19 // pred_check
        %p670 = pneg %p380
      $region70: #{vit21k_forward.6} parent=19 // pred_check_branch
        %672 = sbr.rel (%p670) target = $region72
      $region71: #{vit21k_forward.6} parent=19 // pred_region
        %p673 = scmp.lt.s32.totalorder %s27, 3
        %s674 = scalar_select %p673, %s27, 3
        %s675 = smul.addr %s674, 4
        %s676 = smul.addr %s675, 4
        %s677 = scalar_lea.vmem %s13, %s676
      $region72: #{vit21k_forward.6} parent=19 // pred_fallthru
        _
      // Predicated region
      $region73: #{vit21k_forward.6} parent=19 // pred_check
        %p678 = pneg %p406
      $region74: #{vit21k_forward.6} parent=19 // pred_check_branch
        %680 = sbr.rel (%p678) target = $region76
      $region75: #{vit21k_forward.6} parent=19 // pred_region
        %p681 = scmp.lt.s32.totalorder %s27, 3
        %s682 = scalar_select %p681, %s27, 3
        %s683 = scalar_lea.vmem %s14, %s682
      $region76: #{vit21k_forward.6} parent=19 // pred_fallthru
        _
      // Predicated region
      $region77: #{vit21k_forward.6} parent=19 // pred_check
        %p684 = pneg %p432
      $region78: #{vit21k_forward.6} parent=19 // pred_check_branch
        %686 = sbr.rel (%p684) target = $region80
      $region79: #{vit21k_forward.6} parent=19 // pred_region
        %p687 = scmp.lt.s32.totalorder %s27, 3
        %s688 = scalar_select %p687, %s27, 3
        %s689 = smul.addr %s688, 4
        %s690 = scalar_lea.vmem %s15, %s689
      $region80: #{vit21k_forward.6} parent=19 // pred_fallthru
        _
      // Predicated region
      $region81: #{vit21k_forward.6} parent=19 // pred_check
        %p691 = pneg %p458
      $region82: #{vit21k_forward.6} parent=19 // pred_check_branch
        %693 = sbr.rel (%p691) target = $region84
      $region83: #{vit21k_forward.6} parent=19 // pred_region
        %p694 = scmp.lt.s32.totalorder %s27, 3
        %s695 = scalar_select %p694, %s27, 3
        %s696 = scalar_lea.vmem %s16, %s695
      $region84: #{vit21k_forward.6} parent=19 // pred_fallthru
        _
      // Predicated region
      $region85: #{vit21k_forward.6} parent=19 // pred_check
        %p697 = pneg %p484
      $region86: #{vit21k_forward.6} parent=19 // pred_check_branch
        %699 = sbr.rel (%p697) target = $region88
      $region87: #{vit21k_forward.6} parent=19 // pred_region
        %p700 = scmp.lt.s32.totalorder %s27, 3
        %s701 = scalar_select %p700, %s27, 3
        %s702 = scalar_lea.vmem %s17, %s701
      $region88: #{vit21k_forward.6} parent=19 // pred_fallthru
        _
      // Predicated region
      $region89: #{vit21k_forward.6} parent=19 // pred_check
        %p703 = pneg %p510
      $region90: #{vit21k_forward.6} parent=19 // pred_check_branch
        %705 = sbr.rel (%p703) target = $region92
      $region91: #{vit21k_forward.6} parent=19 // pred_region
        %p706 = scmp.lt.s32.totalorder %s27, 3
        %s707 = scalar_select %p706, %s27, 3
        %s708 = scalar_lea.vmem %s18, %s707
      $region92: #{vit21k_forward.6} parent=19 // pred_fallthru
        _
    $region20: #{vit21k_forward.6} parent=5 // pred_fallthru
      _
    %p709 = scmp.le.s32.totalorder 1, %s27
    %p710 = scmp.lt.s32.totalorder %s27, 5
    %p711 = pnand %p709, %p710
    %p712 = pneg %p711
    // Predicated region
    $region93: #{vit21k_forward.6} parent=5 // pred_check
      _
    $region94: #{vit21k_forward.6} parent=5 // pred_check_branch
      %714 = sbr.rel (%p711) target = $region96
    $region95: #{vit21k_forward.6} parent=5 // pred_region
      %s715 = ssub.s32 %s27, 1
      %p716 = pneg %p48
      %p717 = pneg %p45
      %p718 = scmp.lt.s32.totalorder %s32, 3
      %s719 = scalar_select %p718, %s32, 3
      %s720 = scalar_lea.vmem %s1, %s719
      %p721 = pneg %p74
      %p722 = pneg %p71
      %p723 = scmp.lt.s32.totalorder %s32, 3
      %s724 = scalar_select %p723, %s32, 3
      %s725 = scalar_lea.vmem %s2, %s724
      %p726 = pneg %p100
      %p727 = pneg %p97
      %p728 = scmp.lt.s32.totalorder %s32, 3
      %s729 = scalar_select %p728, %s32, 3
      %s730 = smul.addr %s729, 4
      %s731 = smul.addr %s730, 4
      %s732 = scalar_lea.vmem %s3, %s731
      %p733 = pneg %p126
      %p734 = pneg %p123
      %p735 = scmp.lt.s32.totalorder %s32, 3
      %s736 = scalar_select %p735, %s32, 3
      %s737 = scalar_lea.vmem %s4, %s736
      %p738 = pneg %p152
      %p739 = pneg %p149
      %p740 = scmp.lt.s32.totalorder %s32, 3
      %s741 = scalar_select %p740, %s32, 3
      %s742 = smul.addr %s741, 4
      %s743 = smul.addr %s742, 4
      %s744 = scalar_lea.vmem %s5, %s743
      %p745 = pneg %p178
      %p746 = pneg %p175
      %p747 = scmp.lt.s32.totalorder %s32, 3
      %s748 = scalar_select %p747, %s32, 3
      %s749 = scalar_lea.vmem %s6, %s748
      %p750 = pneg %p204
      %p751 = pneg %p201
      %p752 = scmp.lt.s32.totalorder %s32, 3
      %s753 = scalar_select %p752, %s32, 3
      %s754 = scalar_lea.vmem %s7, %s753
      %p755 = pneg %p230
      %p756 = pneg %p227
      %p757 = scmp.lt.s32.totalorder %s32, 3
      %s758 = scalar_select %p757, %s32, 3
      %s759 = scalar_lea.vmem %s8, %s758
      %p760 = pneg %p256
      %p761 = pneg %p253
      %p762 = scmp.lt.s32.totalorder %s32, 3
      %s763 = scalar_select %p762, %s32, 3
      %s764 = smul.addr %s763, 4
      %s765 = smul.addr %s764, 4
      %s766 = scalar_lea.vmem %s9, %s765
      %p767 = pneg %p282
      %p768 = pneg %p279
      %p769 = scmp.lt.s32.totalorder %s32, 3
      %s770 = scalar_select %p769, %s32, 3
      %s771 = scalar_lea.vmem %s10, %s770
      %p772 = pneg %p308
      %p773 = pneg %p305
      %p774 = scmp.lt.s32.totalorder %s32, 3
      %s775 = scalar_select %p774, %s32, 3
      %s776 = smul.addr %s775, 16
      %s777 = smul.addr %s776, 4
      %s778 = scalar_lea.vmem %s11, %s777
      %p779 = pneg %p334
      %p780 = pneg %p331
      %p781 = scmp.lt.s32.totalorder %s32, 3
      %s782 = scalar_select %p781, %s32, 3
      %s783 = scalar_lea.vmem %s12, %s782
      %p784 = pneg %p360
      %p785 = pneg %p357
      %p786 = scmp.lt.s32.totalorder %s32, 3
      %s787 = scalar_select %p786, %s32, 3
      %s788 = smul.addr %s787, 4
      %s789 = smul.addr %s788, 4
      %s790 = scalar_lea.vmem %s13, %s789
      %p791 = pneg %p386
      %p792 = pneg %p383
      %p793 = scmp.lt.s32.totalorder %s32, 3
      %s794 = scalar_select %p793, %s32, 3
      %s795 = scalar_lea.vmem %s14, %s794
      %p796 = pneg %p412
      %p797 = pneg %p409
      %p798 = scmp.lt.s32.totalorder %s32, 3
      %s799 = scalar_select %p798, %s32, 3
      %s800 = smul.addr %s799, 4
      %s801 = scalar_lea.vmem %s15, %s800
      %p802 = pneg %p438
      %p803 = pneg %p435
      %p804 = scmp.lt.s32.totalorder %s32, 3
      %s805 = scalar_select %p804, %s32, 3
      %s806 = scalar_lea.vmem %s16, %s805
      %p807 = pneg %p464
      %p808 = pneg %p461
      %p809 = scmp.lt.s32.totalorder %s32, 3
      %s810 = scalar_select %p809, %s32, 3
      %s811 = scalar_lea.vmem %s17, %s810
      %p812 = pneg %p490
      %p813 = pneg %p487
      %p814 = scmp.lt.s32.totalorder %s32, 3
      %s815 = scalar_select %p814, %s32, 3
      %s816 = scalar_lea.vmem %s18, %s815
      %p817 = pneg %p516
      %p818 = pneg %p513
      %p819 = pneg %p542
      %p820 = pneg %p539
      %p821 = scmp.lt.s32.totalorder %s32, 3
      %s822 = scalar_select %p821, %s32, 3
      %s823 = smul.addr %s822, 2
      %s824 = smul.addr %s823, 8
      %s825 = scalar_lea.vmem %s19, %s824
      %p826 = pneg %p568
      %p827 = pneg %p565
      %p828 = scmp.lt.s32.totalorder %s32, 3
      %s829 = scalar_select %p828, %s32, 3
      %s830 = smul.addr %s829, 2
      %s831 = smul.addr %s830, 8
      %s832 = scalar_lea.vmem %s20, %s831
      %p833 = scmp.lt.s32.totalorder %s32, 3
      %s834 = scalar_select %p833, %s32, 3
      %s835 = scalar_lea.vmem %s1, %s834
      %p836 = scmp.lt.s32.totalorder %s32, 3
      %s837 = scalar_select %p836, %s32, 3
      %s838 = scalar_lea.vmem %s2, %s837
      %p839 = scmp.lt.s32.totalorder %s32, 3
      %s840 = scalar_select %p839, %s32, 3
      %s841 = smul.addr %s840, 4
      %s842 = smul.addr %s841, 4
      %s843 = scalar_lea.vmem %s3, %s842
      %p844 = scmp.lt.s32.totalorder %s32, 3
      %s845 = scalar_select %p844, %s32, 3
      %s846 = scalar_lea.vmem %s4, %s845
      %p847 = scmp.lt.s32.totalorder %s32, 3
      %s848 = scalar_select %p847, %s32, 3
      %s849 = smul.addr %s848, 4
      %s850 = smul.addr %s849, 4
      %s851 = scalar_lea.vmem %s5, %s850
      %p852 = scmp.lt.s32.totalorder %s32, 3
      %s853 = scalar_select %p852, %s32, 3
      %s854 = scalar_lea.vmem %s6, %s853
      %p855 = scmp.lt.s32.totalorder %s32, 3
      %s856 = scalar_select %p855, %s32, 3
      %s857 = scalar_lea.vmem %s7, %s856
      %p858 = scmp.lt.s32.totalorder %s32, 3
      %s859 = scalar_select %p858, %s32, 3
      %s860 = scalar_lea.vmem %s8, %s859
      %p861 = scmp.lt.s32.totalorder %s32, 3
      %s862 = scalar_select %p861, %s32, 3
      %s863 = smul.addr %s862, 4
      %s864 = smul.addr %s863, 4
      %s865 = scalar_lea.vmem %s9, %s864
      %p866 = scmp.lt.s32.totalorder %s32, 3
      %s867 = scalar_select %p866, %s32, 3
      %s868 = scalar_lea.vmem %s10, %s867
      %p869 = scmp.lt.s32.totalorder %s32, 3
      %s870 = scalar_select %p869, %s32, 3
      %s871 = smul.addr %s870, 16
      %s872 = smul.addr %s871, 4
      %s873 = scalar_lea.vmem %s11, %s872
      %p874 = scmp.lt.s32.totalorder %s32, 3
      %s875 = scalar_select %p874, %s32, 3
      %s876 = scalar_lea.vmem %s12, %s875
      %p877 = scmp.lt.s32.totalorder %s32, 3
      %s878 = scalar_select %p877, %s32, 3
      %s879 = smul.addr %s878, 4
      %s880 = smul.addr %s879, 4
      %s881 = scalar_lea.vmem %s13, %s880
      %p882 = scmp.lt.s32.totalorder %s32, 3
      %s883 = scalar_select %p882, %s32, 3
      %s884 = scalar_lea.vmem %s14, %s883
      %p885 = scmp.lt.s32.totalorder %s32, 3
      %s886 = scalar_select %p885, %s32, 3
      %s887 = smul.addr %s886, 4
      %s888 = scalar_lea.vmem %s15, %s887
      %p889 = scmp.lt.s32.totalorder %s32, 3
      %s890 = scalar_select %p889, %s32, 3
      %s891 = scalar_lea.vmem %s16, %s890
      %p892 = scmp.lt.s32.totalorder %s32, 3
      %s893 = scalar_select %p892, %s32, 3
      %s894 = scalar_lea.vmem %s17, %s893
      %p895 = scmp.lt.s32.totalorder %s32, 3
      %s896 = scalar_select %p895, %s32, 3
      %s897 = scalar_lea.vmem %s18, %s896
      %p898 = scmp.lt.s32.totalorder %s32, 3
      %s899 = scalar_select %p898, %s32, 3
      %s900 = smul.addr %s899, 2
      %s901 = smul.addr %s900, 8
      %s902 = scalar_lea.vmem %s19, %s901
      %p903 = scmp.lt.s32.totalorder %s32, 3
      %s904 = scalar_select %p903, %s32, 3
      %s905 = smul.addr %s904, 2
      %s906 = smul.addr %s905, 8
      %s907 = scalar_lea.vmem %s20, %s906
      %p909 = scmp.eq.s32.totalorder %s32, 0
      // Predicated region
      $region97: #{vit21k_forward.6} parent=95 // pred_check
        %p910 = pneg %p909
      $region98: #{vit21k_forward.6} parent=95 // pred_check_branch
        %912 = sbr.rel (%p910) target = $region100
      $region99: #{vit21k_forward.6} parent=95 // pred_region
        %v913 = vld [vmem:[%s0] sm:$0xff]
        %v914 = vld [vmem:[%s0 + $0x8] sm:$0x3]
        %vm915 = vcmask 261120
        %916 = vst.msk [vmem:[#allocation2] sm:$0xff] %vm915, %v913
        %vm917 = vcmask 254976
        %918 = vst.msk [vmem:[#allocation2 + $0x8] sm:$0x3] %vm917, %v914
      $region100: #{vit21k_forward.6} parent=95 // pred_fallthru
        _
      %v919 = vld [vmem:[#allocation2] sm:$0xff]
      %v920 = vld [vmem:[#allocation2 + $0x8] sm:$0x3]
      %v921 = vld [vmem:[%s835] sm:$0x1]
      %v922 = vld [vmem:[%s838] sm:$0x1]
      %vm923 = vcmask 261120
      %v924 = vsel %vm923, %v919, 0.0
      %925 = vadd.xlane.f32.xlu0 %v924
      %v926 = vpop.xlane.xlu0 %925
      %vm927 = vcmask 254976
      %v928 = vsel %vm927, %v920, 0.0
      %929 = vadd.xlane.f32.xlu0 %v928
      %v930 = vpop.xlane.xlu0 %929
      %v931 = vrcp.pop 32.0
      %v932 = vmul.f32 %v926, %v931
      %v933 = vmul.f32 %v930, %v931
      %v934 = vsub.f32 %v919, %v932
      %v935 = vsub.f32 %v920, %v933
      %v936 = vmul.f32 %v934, %v934
      %v937 = vmul.f32 %v935, %v935
      %v938 = vsel %vm923, %v936, 0.0
      %939 = vadd.xlane.f32.xlu0 %v938
      %v940 = vpop.xlane.xlu0 %939
      %v941 = vsel %vm927, %v937, 0.0
      %942 = vadd.xlane.f32.xlu0 %v941
      %v943 = vpop.xlane.xlu0 %942
      %v944 = vmul.f32 %v940, %v931
      %v945 = vmul.f32 %v943, %v931
      %v946 = vadd.f32 %v944, 1e-06
      %v947 = vadd.f32 %v945, 1e-06
      %v948 = vrsqrt.pop %v946
      %v949 = vrsqrt.pop %v947
      %v950 = vmul.f32 %v934, %v948
      %v951 = vmul.f32 %v935, %v949
      %v953 = vlaneseq
      %v954 = vshrl.u32 %v953, 7
      %v955 = vsub.s32 0, %v954
      %v956 = vrot.slane %v921, %v955
      %v958 = vmul.f32 %v950, %v956
      %v959 = vmul.f32 %v951, %v956
      %v961 = vlaneseq
      %v962 = vshrl.u32 %v961, 7
      %v963 = vsub.s32 0, %v962
      %v964 = vrot.slane %v922, %v963
      %v966 = vadd.f32 %v958, %v964
      %v967 = vadd.f32 %v959, %v964
      %v968 = vpack.c.bf16 %v967, %v966
      %v969 = vld [vmem:[%s843] sm:$0xf]
      %v970 = vld [vmem:[%s843 + $0x4] sm:$0xf]
      %v971 = vld [vmem:[%s843 + $0x8] sm:$0xf]
      %v972 = vld [vmem:[%s843 + $0xc] sm:$0xf]
      %v973 = vld [vmem:[%s846] sm:$0x1]
      %v975 = vlaneseq
      %v976 = vshrl.u32 %v975, 7
      %v977 = vsub.s32 0, %v976
      %v978 = vrot.slane %v973, %v977
      %v984 = vunpack.c.l.b16 %v969
      %v985 = vunpack.c.l.b16 %v970
      %v986 = vunpack.c.l.b16 %v971
      %v987 = vunpack.c.l.b16 %v972
      %v988 = vpack.c.b16 %v985, %v984
      %v989 = vpack.c.b16 %v987, %v986
      %v993 = vsel %vm923, %v968, 0
      %995 = vmatprep.subr.bf16.mxu0 0
      %996 = vmatpush1.bf16.msra.mxu0 %v988
      %997 = vmatprep.subr.bf16.mxu0 0
      %998 = vmatpush1.bf16.msra.mxu0 %v989
      %999 = vmatprep.subr.bf16.mxu0 0
      %1000 = vmatpush1.bf16.msra.mxu0 0
      %1001 = vmatprep.subr.bf16.mxu0 0
      %1002 = vmatpush1.bf16.msra.mxu0 0
      %1003 = vmatprep.subr.bf16.mxu0 0
      %1004 = vmatpush1.bf16.msra.mxu0 0
      %1005 = vmatprep.subr.bf16.mxu0 0
      %1006 = vmatpush1.bf16.msra.mxu0 0
      %1007 = vmatprep.subr.bf16.mxu0 0
      %1008 = vmatpush1.bf16.msra.mxu0 0
      %1009 = vmatprep.subr.bf16.mxu0 0
      %1010 = vmatpush1.bf16.msra.mxu0 0
      %1011 = vmatprep.subr.bf16.mxu0 0
      %1012 = vmatpush1.bf16.msra.mxu0 0
      %1013 = vmatprep.subr.bf16.mxu0 0
      %1014 = vmatpush1.bf16.msra.mxu0 0
      %1015 = vmatprep.subr.bf16.mxu0 0
      %1016 = vmatpush1.bf16.msra.mxu0 0
      %1017 = vmatprep.subr.bf16.mxu0 0
      %1018 = vmatpush1.bf16.msra.mxu0 0
      %1019 = vmatprep.subr.bf16.mxu0 0
      %1020 = vmatpush1.bf16.msra.mxu0 0
      %1021 = vmatprep.subr.bf16.mxu0 0
      %1022 = vmatpush1.bf16.msra.mxu0 0
      %1023 = vmatprep.subr.bf16.mxu0 0
      %1024 = vmatpush1.bf16.msra.mxu0 0
      %1025 = vmatprep.subr.bf16.mxu0 0
      %1026 = vmatpush1.bf16.msra.mxu0 0
      %1027 = vmatprep.mubr.bf16.mxu0 0
      %1028 = vmatmul.mubr.bf16.gmra.mrb[0].mxu0 %v993
      %v1029 = vpop.f32.mrb[0].mxu0
      %v1030 = vadd.f32 %v978, %v1029
      %v1031 = vpop.f32.mrb[0].mxu0
      %v1032 = vpop.f32.mrb[0].mxu0
      %v1033 = vadd.f32 %v978, %v1032
      %v1034 = vpop.f32.mrb[0].mxu0
      %1035 = vdwg.mxu0
      %v1036 = vmul.f32 %v1030, 0.35355338
      %1038 = vrot.lane.b32.xlu0 %v1030, 96
      %v1039 = vpop.permute.xlu0 %1038
      %vm1040 = vcmask 64512
      %v1042 = vsel %vm1040, %v1036, 0
      %v1044 = vsel %vm1040, %v1039, 0
      %1046 = vmatprep.subr.mxu0 0.0
      %1047 = vmatpush1.xpose.msra.mxu0 %v1044
      %1048 = vmatprep.subr.mxu0 0.0
      %1049 = vmatpush1.xpose.msra.mxu0 0.0
      %1050 = vmatprep.subr.mxu0 0.0
      %1051 = vmatpush1.xpose.msra.mxu0 0.0
      %1052 = vmatprep.subr.mxu0 0.0
      %1053 = vmatpush1.xpose.msra.mxu0 0.0
      %1054 = vmatprep.subr.mxu0 0.0
      %1055 = vmatpush1.xpose.msra.mxu0 0.0
      %1056 = vmatprep.subr.mxu0 0.0
      %1057 = vmatpush1.xpose.msra.mxu0 0.0
      %1058 = vmatprep.subr.mxu0 0.0
      %1059 = vmatpush1.xpose.msra.mxu0 0.0
      %1060 = vmatprep.subr.mxu0 0.0
      %1061 = vmatpush1.xpose.msra.mxu0 0.0
      %1062 = vmatprep.subr.mxu0 0.0
      %1063 = vmatpush1.xpose.msra.mxu0 0.0
      %1064 = vmatprep.subr.mxu0 0.0
      %1065 = vmatpush1.xpose.msra.mxu0 0.0
      %1066 = vmatprep.subr.mxu0 0.0
      %1067 = vmatpush1.xpose.msra.mxu0 0.0
      %1068 = vmatprep.subr.mxu0 0.0
      %1069 = vmatpush1.xpose.msra.mxu0 0.0
      %1070 = vmatprep.subr.mxu0 0.0
      %1071 = vmatpush1.xpose.msra.mxu0 0.0
      %1072 = vmatprep.subr.mxu0 0.0
      %1073 = vmatpush1.xpose.msra.mxu0 0.0
      %1074 = vmatprep.subr.mxu0 0.0
      %1075 = vmatpush1.xpose.msra.mxu0 0.0
      %1076 = vmatprep.subr.mxu0 0.0
      %1077 = vmatpush1.xpose.msra.mxu0 0.0
      %1078 = vmatprep.subr.mxu0 0.0
      %1079 = vmatpush1.xpose.msra.mxu0 0.0
      %1080 = vmatprep.subr.mxu0 0.0
      %1081 = vmatpush1.xpose.msra.mxu0 0.0
      %1082 = vmatprep.subr.mxu0 0.0
      %1083 = vmatpush1.xpose.msra.mxu0 0.0
      %1084 = vmatprep.subr.mxu0 0.0
      %1085 = vmatpush1.xpose.msra.mxu0 0.0
      %1086 = vmatprep.subr.mxu0 0.0
      %1087 = vmatpush1.xpose.msra.mxu0 0.0
      %1088 = vmatprep.subr.mxu0 0.0
      %1089 = vmatpush1.xpose.msra.mxu0 0.0
      %1090 = vmatprep.subr.mxu0 0.0
      %1091 = vmatpush1.xpose.msra.mxu0 0.0
      %1092 = vmatprep.subr.mxu0 0.0
      %1093 = vmatpush1.xpose.msra.mxu0 0.0
      %1094 = vmatprep.subr.mxu0 0.0
      %1095 = vmatpush1.xpose.msra.mxu0 0.0
      %1096 = vmatprep.subr.mxu0 0.0
      %1097 = vmatpush1.xpose.msra.mxu0 0.0
      %1098 = vmatprep.subr.mxu0 0.0
      %1099 = vmatpush1.xpose.msra.mxu0 0.0
      %1100 = vmatprep.subr.mxu0 0.0
      %1101 = vmatpush1.xpose.msra.mxu0 0.0
      %1102 = vmatprep.subr.mxu0 0.0
      %1103 = vmatpush1.xpose.msra.mxu0 0.0
      %1104 = vmatprep.subr.mxu0 0.0
      %1105 = vmatpush1.xpose.msra.mxu0 0.0
      %1106 = vmatprep.subr.mxu0 0.0
      %1107 = vmatpush1.xpose.msra.mxu0 0.0
      %1108 = vmatprep.subr.mxu0 0.0
      %1109 = vmatpush1.xpose.msra.mxu0 0.0
      %1110 = vmatprep.mubr.f32.mxu0 0.0
      %1111 = vmatmul.mubr.f32.gmra.mrb[0].mxu0 %v1042
      %v1112 = vpop.f32.mrb[0].mxu0
      %v1113 = vadd.f32 0.0, %v1112
      %v1114 = vpop.f32.mrb[0].mxu0
      %1115 = vdwg.mxu0
      %vm1116 = vcmask 36864
      %v1117 = vsel %vm1116, %v1113, -inf
      %1118 = vmax.xlane.f32.xlu0 %v1117
      %v1119 = vpop.xlane.xlu0 %1118
      %v1120 = vsub.f32 %v1113, %v1119
      %v1121 = vmul.f32 %v1120, 1.442695
      %v1122 = vpow.pop %v1121
      %v1123 = vsel %vm1116, %v1122, 0.0
      %1124 = vadd.xlane.f32.xlu0 %v1123
      %v1125 = vpop.xlane.xlu0 %1124
      %v1126 = vrcp.pop %v1125
      %v1127 = vmul.f32 %v1122, %v1126
      %1128 = vrot.lane.b32.xlu0 %v1030, 64
      %v1129 = vpop.permute.xlu0 %1128
      %vm1130 = vcmask 39936
      %v1132 = vsel %vm1130, %v1127, 0
      %vm1134 = vcmask 1044480
      %v1135 = vsel %vm1134, %v1129, 0
      %1137 = vmatprep.subr.mxu0 0.0
      %1138 = vmatpush1.msra.mxu0 %v1135
      %1139 = vmatprep.subr.mxu0 0.0
      %1140 = vmatpush1.msra.mxu0 0.0
      %1141 = vmatprep.subr.mxu0 0.0
      %1142 = vmatpush1.msra.mxu0 0.0
      %1143 = vmatprep.subr.mxu0 0.0
      %1144 = vmatpush1.msra.mxu0 0.0
      %1145 = vmatprep.subr.mxu0 0.0
      %1146 = vmatpush1.msra.mxu0 0.0
      %1147 = vmatprep.subr.mxu0 0.0
      %1148 = vmatpush1.msra.mxu0 0.0
      %1149 = vmatprep.subr.mxu0 0.0
      %1150 = vmatpush1.msra.mxu0 0.0
      %1151 = vmatprep.subr.mxu0 0.0
      %1152 = vmatpush1.msra.mxu0 0.0
      %1153 = vmatprep.subr.mxu0 0.0
      %1154 = vmatpush1.msra.mxu0 0.0
      %1155 = vmatprep.subr.mxu0 0.0
      %1156 = vmatpush1.msra.mxu0 0.0
      %1157 = vmatprep.subr.mxu0 0.0
      %1158 = vmatpush1.msra.mxu0 0.0
      %1159 = vmatprep.subr.mxu0 0.0
      %1160 = vmatpush1.msra.mxu0 0.0
      %1161 = vmatprep.subr.mxu0 0.0
      %1162 = vmatpush1.msra.mxu0 0.0
      %1163 = vmatprep.subr.mxu0 0.0
      %1164 = vmatpush1.msra.mxu0 0.0
      %1165 = vmatprep.subr.mxu0 0.0
      %1166 = vmatpush1.msra.mxu0 0.0
      %1167 = vmatprep.subr.mxu0 0.0
      %1168 = vmatpush1.msra.mxu0 0.0
      %1169 = vmatprep.subr.mxu0 0.0
      %1170 = vmatpush1.msra.mxu0 0.0
      %1171 = vmatprep.subr.mxu0 0.0
      %1172 = vmatpush1.msra.mxu0 0.0
      %1173 = vmatprep.subr.mxu0 0.0
      %1174 = vmatpush1.msra.mxu0 0.0
      %1175 = vmatprep.subr.mxu0 0.0
      %1176 = vmatpush1.msra.mxu0 0.0
      %1177 = vmatprep.subr.mxu0 0.0
      %1178 = vmatpush1.msra.mxu0 0.0
      %1179 = vmatprep.subr.mxu0 0.0
      %1180 = vmatpush1.msra.mxu0 0.0
      %1181 = vmatprep.subr.mxu0 0.0
      %1182 = vmatpush1.msra.mxu0 0.0
      %1183 = vmatprep.subr.mxu0 0.0
      %1184 = vmatpush1.msra.mxu0 0.0
      %1185 = vmatprep.subr.mxu0 0.0
      %1186 = vmatpush1.msra.mxu0 0.0
      %1187 = vmatprep.subr.mxu0 0.0
      %1188 = vmatpush1.msra.mxu0 0.0
      %1189 = vmatprep.subr.mxu0 0.0
      %1190 = vmatpush1.msra.mxu0 0.0
      %1191 = vmatprep.subr.mxu0 0.0
      %1192 = vmatpush1.msra.mxu0 0.0
      %1193 = vmatprep.subr.mxu0 0.0
      %1194 = vmatpush1.msra.mxu0 0.0
      %1195 = vmatprep.subr.mxu0 0.0
      %1196 = vmatpush1.msra.mxu0 0.0
      %1197 = vmatprep.subr.mxu0 0.0
      %1198 = vmatpush1.msra.mxu0 0.0
      %1199 = vmatprep.subr.mxu0 0.0
      %1200 = vmatpush1.msra.mxu0 0.0
      %1201 = vmatprep.mubr.f32.mxu0 0.0
      %1202 = vmatmul.mubr.f32.gmra.mrb[0].mxu0 %v1132
      %v1203 = vpop.f32.mrb[0].mxu0
      %v1204 = vadd.f32 0.0, %v1203
      %v1205 = vpop.f32.mrb[0].mxu0
      %1206 = vdwg.mxu0
      %1207 = vrot.lane.b32.xlu0 %v1036, 120
      %v1208 = vpop.permute.xlu0 %1207
      %1209 = vrot.lane.b32.xlu0 %v1030, 88
      %v1210 = vpop.permute.xlu0 %1209
      %v1211 = vsel %vm1040, %v1208, 0
      %v1213 = vsel %vm1040, %v1210, 0
      %1215 = vmatprep.subr.mxu0 0.0
      %1216 = vmatpush1.xpose.msra.mxu0 %v1213
      %1217 = vmatprep.subr.mxu0 0.0
      %1218 = vmatpush1.xpose.msra.mxu0 0.0
      %1219 = vmatprep.subr.mxu0 0.0
      %1220 = vmatpush1.xpose.msra.mxu0 0.0
      %1221 = vmatprep.subr.mxu0 0.0
      %1222 = vmatpush1.xpose.msra.mxu0 0.0
      %1223 = vmatprep.subr.mxu0 0.0
      %1224 = vmatpush1.xpose.msra.mxu0 0.0
      %1225 = vmatprep.subr.mxu0 0.0
      %1226 = vmatpush1.xpose.msra.mxu0 0.0
      %1227 = vmatprep.subr.mxu0 0.0
      %1228 = vmatpush1.xpose.msra.mxu0 0.0
      %1229 = vmatprep.subr.mxu0 0.0
      %1230 = vmatpush1.xpose.msra.mxu0 0.0
      %1231 = vmatprep.subr.mxu0 0.0
      %1232 = vmatpush1.xpose.msra.mxu0 0.0
      %1233 = vmatprep.subr.mxu0 0.0
      %1234 = vmatpush1.xpose.msra.mxu0 0.0
      %1235 = vmatprep.subr.mxu0 0.0
      %1236 = vmatpush1.xpose.msra.mxu0 0.0
      %1237 = vmatprep.subr.mxu0 0.0
      %1238 = vmatpush1.xpose.msra.mxu0 0.0
      %1239 = vmatprep.subr.mxu0 0.0
      %1240 = vmatpush1.xpose.msra.mxu0 0.0
      %1241 = vmatprep.subr.mxu0 0.0
      %1242 = vmatpush1.xpose.msra.mxu0 0.0
      %1243 = vmatprep.subr.mxu0 0.0
      %1244 = vmatpush1.xpose.msra.mxu0 0.0
      %1245 = vmatprep.subr.mxu0 0.0
      %1246 = vmatpush1.xpose.msra.mxu0 0.0
      %1247 = vmatprep.subr.mxu0 0.0
      %1248 = vmatpush1.xpose.msra.mxu0 0.0
      %1249 = vmatprep.subr.mxu0 0.0
      %1250 = vmatpush1.xpose.msra.mxu0 0.0
      %1251 = vmatprep.subr.mxu0 0.0
      %1252 = vmatpush1.xpose.msra.mxu0 0.0
      %1253 = vmatprep.subr.mxu0 0.0
      %1254 = vmatpush1.xpose.msra.mxu0 0.0
      %1255 = vmatprep.subr.mxu0 0.0
      %1256 = vmatpush1.xpose.msra.mxu0 0.0
      %1257 = vmatprep.subr.mxu0 0.0
      %1258 = vmatpush1.xpose.msra.mxu0 0.0
      %1259 = vmatprep.subr.mxu0 0.0
      %1260 = vmatpush1.xpose.msra.mxu0 0.0
      %1261 = vmatprep.subr.mxu0 0.0
      %1262 = vmatpush1.xpose.msra.mxu0 0.0
      %1263 = vmatprep.subr.mxu0 0.0
      %1264 = vmatpush1.xpose.msra.mxu0 0.0
      %1265 = vmatprep.subr.mxu0 0.0
      %1266 = vmatpush1.xpose.msra.mxu0 0.0
      %1267 = vmatprep.subr.mxu0 0.0
      %1268 = vmatpush1.xpose.msra.mxu0 0.0
      %1269 = vmatprep.subr.mxu0 0.0
      %1270 = vmatpush1.xpose.msra.mxu0 0.0
      %1271 = vmatprep.subr.mxu0 0.0
      %1272 = vmatpush1.xpose.msra.mxu0 0.0
      %1273 = vmatprep.subr.mxu0 0.0
      %1274 = vmatpush1.xpose.msra.mxu0 0.0
      %1275 = vmatprep.subr.mxu0 0.0
      %1276 = vmatpush1.xpose.msra.mxu0 0.0
      %1277 = vmatprep.subr.mxu0 0.0
      %1278 = vmatpush1.xpose.msra.mxu0 0.0
      %1279 = vmatprep.mubr.f32.mxu0 0.0
      %1280 = vmatmul.mubr.f32.gmra.mrb[0].mxu0 %v1211
      %v1281 = vpop.f32.mrb[0].mxu0
      %v1282 = vadd.f32 0.0, %v1281
      %v1283 = vpop.f32.mrb[0].mxu0
      %1284 = vdwg.mxu0
      %v1285 = vsel %vm1116, %v1282, -inf
      %1286 = vmax.xlane.f32.xlu0 %v1285
      %v1287 = vpop.xlane.xlu0 %1286
      %v1288 = vsub.f32 %v1282, %v1287
      %v1289 = vmul.f32 %v1288, 1.442695
      %v1290 = vpow.pop %v1289
      %v1291 = vsel %vm1116, %v1290, 0.0
      %1292 = vadd.xlane.f32.xlu0 %v1291
      %v1293 = vpop.xlane.xlu0 %1292
      %v1294 = vrcp.pop %v1293
      %v1295 = vmul.f32 %v1290, %v1294
      %1296 = vrot.lane.b32.xlu0 %v1030, 56
      %v1297 = vpop.permute.xlu0 %1296
      %v1299 = vsel %vm1130, %v1295, 0
      %v1301 = vsel %vm1134, %v1297, 0
      %1303 = vmatprep.subr.mxu0 0.0
      %1304 = vmatpush1.msra.mxu0 %v1301
      %1305 = vmatprep.subr.mxu0 0.0
      %1306 = vmatpush1.msra.mxu0 0.0
      %1307 = vmatprep.subr.mxu0 0.0
      %1308 = vmatpush1.msra.mxu0 0.0
      %1309 = vmatprep.subr.mxu0 0.0
      %1310 = vmatpush1.msra.mxu0 0.0
      %1311 = vmatprep.subr.mxu0 0.0
      %1312 = vmatpush1.msra.mxu0 0.0
      %1313 = vmatprep.subr.mxu0 0.0
      %1314 = vmatpush1.msra.mxu0 0.0
      %1315 = vmatprep.subr.mxu0 0.0
      %1316 = vmatpush1.msra.mxu0 0.0
      %1317 = vmatprep.subr.mxu0 0.0
      %1318 = vmatpush1.msra.mxu0 0.0
      %1319 = vmatprep.subr.mxu0 0.0
      %1320 = vmatpush1.msra.mxu0 0.0
      %1321 = vmatprep.subr.mxu0 0.0
      %1322 = vmatpush1.msra.mxu0 0.0
      %1323 = vmatprep.subr.mxu0 0.0
      %1324 = vmatpush1.msra.mxu0 0.0
      %1325 = vmatprep.subr.mxu0 0.0
      %1326 = vmatpush1.msra.mxu0 0.0
      %1327 = vmatprep.subr.mxu0 0.0
      %1328 = vmatpush1.msra.mxu0 0.0
      %1329 = vmatprep.subr.mxu0 0.0
      %1330 = vmatpush1.msra.mxu0 0.0
      %1331 = vmatprep.subr.mxu0 0.0
      %1332 = vmatpush1.msra.mxu0 0.0
      %1333 = vmatprep.subr.mxu0 0.0
      %1334 = vmatpush1.msra.mxu0 0.0
      %1335 = vmatprep.subr.mxu0 0.0
      %1336 = vmatpush1.msra.mxu0 0.0
      %1337 = vmatprep.subr.mxu0 0.0
      %1338 = vmatpush1.msra.mxu0 0.0
      %1339 = vmatprep.subr.mxu0 0.0
      %1340 = vmatpush1.msra.mxu0 0.0
      %1341 = vmatprep.subr.mxu0 0.0
      %1342 = vmatpush1.msra.mxu0 0.0
      %1343 = vmatprep.subr.mxu0 0.0
      %1344 = vmatpush1.msra.mxu0 0.0
      %1345 = vmatprep.subr.mxu0 0.0
      %1346 = vmatpush1.msra.mxu0 0.0
      %1347 = vmatprep.subr.mxu0 0.0
      %1348 = vmatpush1.msra.mxu0 0.0
      %1349 = vmatprep.subr.mxu0 0.0
      %1350 = vmatpush1.msra.mxu0 0.0
      %1351 = vmatprep.subr.mxu0 0.0
      %1352 = vmatpush1.msra.mxu0 0.0
      %1353 = vmatprep.subr.mxu0 0.0
      %1354 = vmatpush1.msra.mxu0 0.0
      %1355 = vmatprep.subr.mxu0 0.0
      %1356 = vmatpush1.msra.mxu0 0.0
      %1357 = vmatprep.subr.mxu0 0.0
      %1358 = vmatpush1.msra.mxu0 0.0
      %1359 = vmatprep.subr.mxu0 0.0
      %1360 = vmatpush1.msra.mxu0 0.0
      %1361 = vmatprep.subr.mxu0 0.0
      %1362 = vmatpush1.msra.mxu0 0.0
      %1363 = vmatprep.subr.mxu0 0.0
      %1364 = vmatpush1.msra.mxu0 0.0
      %1365 = vmatprep.subr.mxu0 0.0
      %1366 = vmatpush1.msra.mxu0 0.0
      %1367 = vmatprep.mubr.f32.mxu0 0.0
      %1368 = vmatmul.mubr.f32.gmra.mrb[0].mxu0 %v1299
      %v1369 = vpop.f32.mrb[0].mxu0
      %v1370 = vadd.f32 0.0, %v1369
      %v1371 = vpop.f32.mrb[0].mxu0
      %1372 = vdwg.mxu0
      %1373 = vrot.lane.b32.xlu0 %v1036, 112
      %v1374 = vpop.permute.xlu0 %1373
      %1375 = vrot.lane.b32.xlu0 %v1030, 80
      %v1376 = vpop.permute.xlu0 %1375
      %v1377 = vsel %vm1040, %v1374, 0
      %v1379 = vsel %vm1040, %v1376, 0
      %1381 = vmatprep.subr.mxu0 0.0
      %1382 = vmatpush1.xpose.msra.mxu0 %v1379
      %1383 = vmatprep.subr.mxu0 0.0
      %1384 = vmatpush1.xpose.msra.mxu0 0.0
      %1385 = vmatprep.subr.mxu0 0.0
      %1386 = vmatpush1.xpose.msra.mxu0 0.0
      %1387 = vmatprep.subr.mxu0 0.0
      %1388 = vmatpush1.xpose.msra.mxu0 0.0
      %1389 = vmatprep.subr.mxu0 0.0
      %1390 = vmatpush1.xpose.msra.mxu0 0.0
      %1391 = vmatprep.subr.mxu0 0.0
      %1392 = vmatpush1.xpose.msra.mxu0 0.0
      %1393 = vmatprep.subr.mxu0 0.0
      %1394 = vmatpush1.xpose.msra.mxu0 0.0
      %1395 = vmatprep.subr.mxu0 0.0
      %1396 = vmatpush1.xpose.msra.mxu0 0.0
      %1397 = vmatprep.subr.mxu0 0.0
      %1398 = vmatpush1.xpose.msra.mxu0 0.0
      %1399 = vmatprep.subr.mxu0 0.0
      %1400 = vmatpush1.xpose.msra.mxu0 0.0
      %1401 = vmatprep.subr.mxu0 0.0
      %1402 = vmatpush1.xpose.msra.mxu0 0.0
      %1403 = vmatprep.subr.mxu0 0.0
      %1404 = vmatpush1.xpose.msra.mxu0 0.0
      %1405 = vmatprep.subr.mxu0 0.0
      %1406 = vmatpush1.xpose.msra.mxu0 0.0
      %1407 = vmatprep.subr.mxu0 0.0
      %1408 = vmatpush1.xpose.msra.mxu0 0.0
      %1409 = vmatprep.subr.mxu0 0.0
      %1410 = vmatpush1.xpose.msra.mxu0 0.0
      %1411 = vmatprep.subr.mxu0 0.0
      %1412 = vmatpush1.xpose.msra.mxu0 0.0
      %1413 = vmatprep.subr.mxu0 0.0
      %1414 = vmatpush1.xpose.msra.mxu0 0.0
      %1415 = vmatprep.subr.mxu0 0.0
      %1416 = vmatpush1.xpose.msra.mxu0 0.0
      %1417 = vmatprep.subr.mxu0 0.0
      %1418 = vmatpush1.xpose.msra.mxu0 0.0
      %1419 = vmatprep.subr.mxu0 0.0
      %1420 = vmatpush1.xpose.msra.mxu0 0.0
      %1421 = vmatprep.subr.mxu0 0.0
      %1422 = vmatpush1.xpose.msra.mxu0 0.0
      %1423 = vmatprep.subr.mxu0 0.0
      %1424 = vmatpush1.xpose.msra.mxu0 0.0
      %1425 = vmatprep.subr.mxu0 0.0
      %1426 = vmatpush1.xpose.msra.mxu0 0.0
      %1427 = vmatprep.subr.mxu0 0.0
      %1428 = vmatpush1.xpose.msra.mxu0 0.0
      %1429 = vmatprep.subr.mxu0 0.0
      %1430 = vmatpush1.xpose.msra.mxu0 0.0
      %1431 = vmatprep.subr.mxu0 0.0
      %1432 = vmatpush1.xpose.msra.mxu0 0.0
      %1433 = vmatprep.subr.mxu0 0.0
      %1434 = vmatpush1.xpose.msra.mxu0 0.0
      %1435 = vmatprep.subr.mxu0 0.0
      %1436 = vmatpush1.xpose.msra.mxu0 0.0
      %1437 = vmatprep.subr.mxu0 0.0
      %1438 = vmatpush1.xpose.msra.mxu0 0.0
      %1439 = vmatprep.subr.mxu0 0.0
      %1440 = vmatpush1.xpose.msra.mxu0 0.0
      %1441 = vmatprep.subr.mxu0 0.0
      %1442 = vmatpush1.xpose.msra.mxu0 0.0
      %1443 = vmatprep.subr.mxu0 0.0
      %1444 = vmatpush1.xpose.msra.mxu0 0.0
      %1445 = vmatprep.mubr.f32.mxu0 0.0
      %1446 = vmatmul.mubr.f32.gmra.mrb[0].mxu0 %v1377
      %v1447 = vpop.f32.mrb[0].mxu0
      %v1448 = vadd.f32 0.0, %v1447
      %v1449 = vpop.f32.mrb[0].mxu0
      %1450 = vdwg.mxu0
      %v1451 = vsel %vm1116, %v1448, -inf
      %1452 = vmax.xlane.f32.xlu0 %v1451
      %v1453 = vpop.xlane.xlu0 %1452
      %v1454 = vsub.f32 %v1448, %v1453
      %v1455 = vmul.f32 %v1454, 1.442695
      %v1456 = vpow.pop %v1455
      %v1457 = vsel %vm1116, %v1456, 0.0
      %1458 = vadd.xlane.f32.xlu0 %v1457
      %v1459 = vpop.xlane.xlu0 %1458
      %v1460 = vrcp.pop %v1459
      %v1461 = vmul.f32 %v1456, %v1460
      %1462 = vrot.lane.b32.xlu0 %v1030, 48
      %v1463 = vpop.permute.xlu0 %1462
      %v1465 = vsel %vm1130, %v1461, 0
      %v1467 = vsel %vm1134, %v1463, 0
      %1469 = vmatprep.subr.mxu0 0.0
      %1470 = vmatpush1.msra.mxu0 %v1467
      %1471 = vmatprep.subr.mxu0 0.0
      %1472 = vmatpush1.msra.mxu0 0.0
      %1473 = vmatprep.subr.mxu0 0.0
      %1474 = vmatpush1.msra.mxu0 0.0
      %1475 = vmatprep.subr.mxu0 0.0
      %1476 = vmatpush1.msra.mxu0 0.0
      %1477 = vmatprep.subr.mxu0 0.0
      %1478 = vmatpush1.msra.mxu0 0.0
      %1479 = vmatprep.subr.mxu0 0.0
      %1480 = vmatpush1.msra.mxu0 0.0
      %1481 = vmatprep.subr.mxu0 0.0
      %1482 = vmatpush1.msra.mxu0 0.0
      %1483 = vmatprep.subr.mxu0 0.0
      %1484 = vmatpush1.msra.mxu0 0.0
      %1485 = vmatprep.subr.mxu0 0.0
      %1486 = vmatpush1.msra.mxu0 0.0
      %1487 = vmatprep.subr.mxu0 0.0
      %1488 = vmatpush1.msra.mxu0 0.0
      %1489 = vmatprep.subr.mxu0 0.0
      %1490 = vmatpush1.msra.mxu0 0.0
      %1491 = vmatprep.subr.mxu0 0.0
      %1492 = vmatpush1.msra.mxu0 0.0
      %1493 = vmatprep.subr.mxu0 0.0
      %1494 = vmatpush1.msra.mxu0 0.0
      %1495 = vmatprep.subr.mxu0 0.0
      %1496 = vmatpush1.msra.mxu0 0.0
      %1497 = vmatprep.subr.mxu0 0.0
      %1498 = vmatpush1.msra.mxu0 0.0
      %1499 = vmatprep.subr.mxu0 0.0
      %1500 = vmatpush1.msra.mxu0 0.0
      %1501 = vmatprep.subr.mxu0 0.0
      %1502 = vmatpush1.msra.mxu0 0.0
      %1503 = vmatprep.subr.mxu0 0.0
      %1504 = vmatpush1.msra.mxu0 0.0
      %1505 = vmatprep.subr.mxu0 0.0
      %1506 = vmatpush1.msra.mxu0 0.0
      %1507 = vmatprep.subr.mxu0 0.0
      %1508 = vmatpush1.msra.mxu0 0.0
      %1509 = vmatprep.subr.mxu0 0.0
      %1510 = vmatpush1.msra.mxu0 0.0
      %1511 = vmatprep.subr.mxu0 0.0
      %1512 = vmatpush1.msra.mxu0 0.0
      %1513 = vmatprep.subr.mxu0 0.0
      %1514 = vmatpush1.msra.mxu0 0.0
      %1515 = vmatprep.subr.mxu0 0.0
      %1516 = vmatpush1.msra.mxu0 0.0
      %1517 = vmatprep.subr.mxu0 0.0
      %1518 = vmatpush1.msra.mxu0 0.0
      %1519 = vmatprep.subr.mxu0 0.0
      %1520 = vmatpush1.msra.mxu0 0.0
      %1521 = vmatprep.subr.mxu0 0.0
      %1522 = vmatpush1.msra.mxu0 0.0
      %1523 = vmatprep.subr.mxu0 0.0
      %1524 = vmatpush1.msra.mxu0 0.0
      %1525 = vmatprep.subr.mxu0 0.0
      %1526 = vmatpush1.msra.mxu0 0.0
      %1527 = vmatprep.subr.mxu0 0.0
      %1528 = vmatpush1.msra.mxu0 0.0
      %1529 = vmatprep.subr.mxu0 0.0
      %1530 = vmatpush1.msra.mxu0 0.0
      %1531 = vmatprep.subr.mxu0 0.0
      %1532 = vmatpush1.msra.mxu0 0.0
      %1533 = vmatprep.mubr.f32.mxu0 0.0
      %1534 = vmatmul.mubr.f32.gmra.mrb[0].mxu0 %v1465
      %v1535 = vpop.f32.mrb[0].mxu0
      %v1536 = vadd.f32 0.0, %v1535
      %v1537 = vpop.f32.mrb[0].mxu0
      %1538 = vdwg.mxu0
      %1539 = vrot.lane.b32.xlu0 %v1036, 104
      %v1540 = vpop.permute.xlu0 %1539
      %1541 = vrot.lane.b32.xlu0 %v1030, 72
      %v1542 = vpop.permute.xlu0 %1541
      %v1543 = vsel %vm1040, %v1540, 0
      %v1545 = vsel %vm1040, %v1542, 0
      %1547 = vmatprep.subr.mxu0 0.0
      %1548 = vmatpush1.xpose.msra.mxu0 %v1545
      %1549 = vmatprep.subr.mxu0 0.0
      %1550 = vmatpush1.xpose.msra.mxu0 0.0
      %1551 = vmatprep.subr.mxu0 0.0
      %1552 = vmatpush1.xpose.msra.mxu0 0.0
      %1553 = vmatprep.subr.mxu0 0.0
      %1554 = vmatpush1.xpose.msra.mxu0 0.0
      %1555 = vmatprep.subr.mxu0 0.0
      %1556 = vmatpush1.xpose.msra.mxu0 0.0
      %1557 = vmatprep.subr.mxu0 0.0
      %1558 = vmatpush1.xpose.msra.mxu0 0.0
      %1559 = vmatprep.subr.mxu0 0.0
      %1560 = vmatpush1.xpose.msra.mxu0 0.0
      %1561 = vmatprep.subr.mxu0 0.0
      %1562 = vmatpush1.xpose.msra.mxu0 0.0
      %1563 = vmatprep.subr.mxu0 0.0
      %1564 = vmatpush1.xpose.msra.mxu0 0.0
      %1565 = vmatprep.subr.mxu0 0.0
      %1566 = vmatpush1.xpose.msra.mxu0 0.0
      %1567 = vmatprep.subr.mxu0 0.0
      %1568 = vmatpush1.xpose.msra.mxu0 0.0
      %1569 = vmatprep.subr.mxu0 0.0
      %1570 = vmatpush1.xpose.msra.mxu0 0.0
      %1571 = vmatprep.subr.mxu0 0.0
      %1572 = vmatpush1.xpose.msra.mxu0 0.0
      %1573 = vmatprep.subr.mxu0 0.0
      %1574 = vmatpush1.xpose.msra.mxu0 0.0
      %1575 = vmatprep.subr.mxu0 0.0
      %1576 = vmatpush1.xpose.msra.mxu0 0.0
      %1577 = vmatprep.subr.mxu0 0.0
      %1578 = vmatpush1.xpose.msra.mxu0 0.0
      %1579 = vmatprep.subr.mxu0 0.0
      %1580 = vmatpush1.xpose.msra.mxu0 0.0
      %1581 = vmatprep.subr.mxu0 0.0
      %1582 = vmatpush1.xpose.msra.mxu0 0.0
      %1583 = vmatprep.subr.mxu0 0.0
      %1584 = vmatpush1.xpose.msra.mxu0 0.0
      %1585 = vmatprep.subr.mxu0 0.0
      %1586 = vmatpush1.xpose.msra.mxu0 0.0
      %1587 = vmatprep.subr.mxu0 0.0
      %1588 = vmatpush1.xpose.msra.mxu0 0.0
      %1589 = vmatprep.subr.mxu0 0.0
      %1590 = vmatpush1.xpose.msra.mxu0 0.0
      %1591 = vmatprep.subr.mxu0 0.0
      %1592 = vmatpush1.xpose.msra.mxu0 0.0
      %1593 = vmatprep.subr.mxu0 0.0
      %1594 = vmatpush1.xpose.msra.mxu0 0.0
      %1595 = vmatprep.subr.mxu0 0.0
      %1596 = vmatpush1.xpose.msra.mxu0 0.0
      %1597 = vmatprep.subr.mxu0 0.0
      %1598 = vmatpush1.xpose.msra.mxu0 0.0
      %1599 = vmatprep.subr.mxu0 0.0
      %1600 = vmatpush1.xpose.msra.mxu0 0.0
      %1601 = vmatprep.subr.mxu0 0.0
      %1602 = vmatpush1.xpose.msra.mxu0 0.0
      %1603 = vmatprep.subr.mxu0 0.0
      %1604 = vmatpush1.xpose.msra.mxu0 0.0
      %1605 = vmatprep.subr.mxu0 0.0
      %1606 = vmatpush1.xpose.msra.mxu0 0.0
      %1607 = vmatprep.subr.mxu0 0.0
      %1608 = vmatpush1.xpose.msra.mxu0 0.0
      %1609 = vmatprep.subr.mxu0 0.0
      %1610 = vmatpush1.xpose.msra.mxu0 0.0
      %1611 = vmatprep.mubr.f32.mxu0 0.0
      %1612 = vmatmul.mubr.f32.gmra.mrb[0].mxu0 %v1543
      %v1613 = vpop.f32.mrb[0].mxu0
      %v1614 = vadd.f32 0.0, %v1613
      %v1615 = vpop.f32.mrb[0].mxu0
      %1616 = vdwg.mxu0
      %v1617 = vsel %vm1116, %v1614, -inf
      %1618 = vmax.xlane.f32.xlu0 %v1617
      %v1619 = vpop.xlane.xlu0 %1618
      %v1620 = vsub.f32 %v1614, %v1619
      %v1621 = vmul.f32 %v1620, 1.442695
      %v1622 = vpow.pop %v1621
      %v1623 = vsel %vm1116, %v1622, 0.0
      %1624 = vadd.xlane.f32.xlu0 %v1623
      %v1625 = vpop.xlane.xlu0 %1624
      %v1626 = vrcp.pop %v1625
      %v1627 = vmul.f32 %v1622, %v1626
      %1628 = vrot.lane.b32.xlu0 %v1030, 40
      %v1629 = vpop.permute.xlu0 %1628
      %v1631 = vsel %vm1130, %v1627, 0
      %v1633 = vsel %vm1134, %v1629, 0
      %1635 = vmatprep.subr.mxu0 0.0
      %1636 = vmatpush1.msra.mxu0 %v1633
      %1637 = vmatprep.subr.mxu0 0.0
      %1638 = vmatpush1.msra.mxu0 0.0
      %1639 = vmatprep.subr.mxu0 0.0
      %1640 = vmatpush1.msra.mxu0 0.0
      %1641 = vmatprep.subr.mxu0 0.0
      %1642 = vmatpush1.msra.mxu0 0.0
      %1643 = vmatprep.subr.mxu0 0.0
      %1644 = vmatpush1.msra.mxu0 0.0
      %1645 = vmatprep.subr.mxu0 0.0
      %1646 = vmatpush1.msra.mxu0 0.0
      %1647 = vmatprep.subr.mxu0 0.0
      %1648 = vmatpush1.msra.mxu0 0.0
      %1649 = vmatprep.subr.mxu0 0.0
      %1650 = vmatpush1.msra.mxu0 0.0
      %1651 = vmatprep.subr.mxu0 0.0
      %1652 = vmatpush1.msra.mxu0 0.0
      %1653 = vmatprep.subr.mxu0 0.0
      %1654 = vmatpush1.msra.mxu0 0.0
      %1655 = vmatprep.subr.mxu0 0.0
      %1656 = vmatpush1.msra.mxu0 0.0
      %1657 = vmatprep.subr.mxu0 0.0
      %1658 = vmatpush1.msra.mxu0 0.0
      %1659 = vmatprep.subr.mxu0 0.0
      %1660 = vmatpush1.msra.mxu0 0.0
      %1661 = vmatprep.subr.mxu0 0.0
      %1662 = vmatpush1.msra.mxu0 0.0
      %1663 = vmatprep.subr.mxu0 0.0
      %1664 = vmatpush1.msra.mxu0 0.0
      %1665 = vmatprep.subr.mxu0 0.0
      %1666 = vmatpush1.msra.mxu0 0.0
      %1667 = vmatprep.subr.mxu0 0.0
      %1668 = vmatpush1.msra.mxu0 0.0
      %1669 = vmatprep.subr.mxu0 0.0
      %1670 = vmatpush1.msra.mxu0 0.0
      %1671 = vmatprep.subr.mxu0 0.0
      %1672 = vmatpush1.msra.mxu0 0.0
      %1673 = vmatprep.subr.mxu0 0.0
      %1674 = vmatpush1.msra.mxu0 0.0
      %1675 = vmatprep.subr.mxu0 0.0
      %1676 = vmatpush1.msra.mxu0 0.0
      %1677 = vmatprep.subr.mxu0 0.0
      %1678 = vmatpush1.msra.mxu0 0.0
      %1679 = vmatprep.subr.mxu0 0.0
      %1680 = vmatpush1.msra.mxu0 0.0
      %1681 = vmatprep.subr.mxu0 0.0
      %1682 = vmatpush1.msra.mxu0 0.0
      %1683 = vmatprep.subr.mxu0 0.0
      %1684 = vmatpush1.msra.mxu0 0.0
      %1685 = vmatprep.subr.mxu0 0.0
      %1686 = vmatpush1.msra.mxu0 0.0
      %1687 = vmatprep.subr.mxu0 0.0
      %1688 = vmatpush1.msra.mxu0 0.0
      %1689 = vmatprep.subr.mxu0 0.0
      %1690 = vmatpush1.msra.mxu0 0.0
      %1691 = vmatprep.subr.mxu0 0.0
      %1692 = vmatpush1.msra.mxu0 0.0
      %1693 = vmatprep.subr.mxu0 0.0
      %1694 = vmatpush1.msra.mxu0 0.0
      %1695 = vmatprep.subr.mxu0 0.0
      %1696 = vmatpush1.msra.mxu0 0.0
      %1697 = vmatprep.subr.mxu0 0.0
      %1698 = vmatpush1.msra.mxu0 0.0
      %1699 = vmatprep.mubr.f32.mxu0 0.0
      %1700 = vmatmul.mubr.f32.gmra.mrb[0].mxu0 %v1631
      %v1701 = vpop.f32.mrb[0].mxu0
      %v1702 = vadd.f32 0.0, %v1701
      %v1703 = vpop.f32.mrb[0].mxu0
      %1704 = vdwg.mxu0
      %1706 = vrot.lane.b32.xlu0 %v1370, 8
      %v1707 = vpop.permute.xlu0 %1706
      %1710 = vrot.lane.b32.xlu0 %v1536, 16
      %v1711 = vpop.permute.xlu0 %1710
      %1714 = vrot.lane.b32.xlu0 %v1702, 24
      %v1715 = vpop.permute.xlu0 %1714
      %v1717 = vsel %vm1040, %v1204, %v1707
      %vm1718 = vcmask 130048
      %v1719 = vsel %vm1718, %v1717, %v1711
      %vm1720 = vcmask 195584
      %v1721 = vsel %vm1720, %v1719, %v1715
      %v1722 = vmul.f32 %v1033, 0.35355338
      %vm1724 = vcmask 1042432
      %v1725 = vrot.slane %v1036, 5
      %v1726 = vrot.slane %v1722, 5
      %v1727 = vsel %vm1724, %v1725, %v1726
      %v1729 = vrot.slane %v1030, 5
      %v1730 = vrot.slane %v1033, 5
      %v1731 = vsel %vm1724, %v1729, %v1730
      %1732 = vrot.lane.b32.xlu0 %v1731, 96
      %v1733 = vpop.permute.xlu0 %1732
      %v1734 = vsel %vm1040, %v1727, 0
      %v1736 = vsel %vm1040, %v1733, 0
      %1738 = vmatprep.subr.mxu0 0.0
      %1739 = vmatpush1.xpose.msra.mxu0 %v1736
      %1740 = vmatprep.subr.mxu0 0.0
      %1741 = vmatpush1.xpose.msra.mxu0 0.0
      %1742 = vmatprep.subr.mxu0 0.0
      %1743 = vmatpush1.xpose.msra.mxu0 0.0
      %1744 = vmatprep.subr.mxu0 0.0
      %1745 = vmatpush1.xpose.msra.mxu0 0.0
      %1746 = vmatprep.subr.mxu0 0.0
      %1747 = vmatpush1.xpose.msra.mxu0 0.0
      %1748 = vmatprep.subr.mxu0 0.0
      %1749 = vmatpush1.xpose.msra.mxu0 0.0
      %1750 = vmatprep.subr.mxu0 0.0
      %1751 = vmatpush1.xpose.msra.mxu0 0.0
      %1752 = vmatprep.subr.mxu0 0.0
      %1753 = vmatpush1.xpose.msra.mxu0 0.0
      %1754 = vmatprep.subr.mxu0 0.0
      %1755 = vmatpush1.xpose.msra.mxu0 0.0
      %1756 = vmatprep.subr.mxu0 0.0
      %1757 = vmatpush1.xpose.msra.mxu0 0.0
      %1758 = vmatprep.subr.mxu0 0.0
      %1759 = vmatpush1.xpose.msra.mxu0 0.0
      %1760 = vmatprep.subr.mxu0 0.0
      %1761 = vmatpush1.xpose.msra.mxu0 0.0
      %1762 = vmatprep.subr.mxu0 0.0
      %1763 = vmatpush1.xpose.msra.mxu0 0.0
      %1764 = vmatprep.subr.mxu0 0.0
      %1765 = vmatpush1.xpose.msra.mxu0 0.0
      %1766 = vmatprep.subr.mxu0 0.0
      %1767 = vmatpush1.xpose.msra.mxu0 0.0
      %1768 = vmatprep.subr.mxu0 0.0
      %1769 = vmatpush1.xpose.msra.mxu0 0.0
      %1770 = vmatprep.subr.mxu0 0.0
      %1771 = vmatpush1.xpose.msra.mxu0 0.0
      %1772 = vmatprep.subr.mxu0 0.0
      %1773 = vmatpush1.xpose.msra.mxu0 0.0
      %1774 = vmatprep.subr.mxu0 0.0
      %1775 = vmatpush1.xpose.msra.mxu0 0.0
      %1776 = vmatprep.subr.mxu0 0.0
      %1777 = vmatpush1.xpose.msra.mxu0 0.0
      %1778 = vmatprep.subr.mxu0 0.0
      %1779 = vmatpush1.xpose.msra.mxu0 0.0
      %1780 = vmatprep.subr.mxu0 0.0
      %1781 = vmatpush1.xpose.msra.mxu0 0.0
      %1782 = vmatprep.subr.mxu0 0.0
      %1783 = vmatpush1.xpose.msra.mxu0 0.0
      %1784 = vmatprep.subr.mxu0 0.0
      %1785 = vmatpush1.xpose.msra.mxu0 0.0
      %1786 = vmatprep.subr.mxu0 0.0
      %1787 = vmatpush1.xpose.msra.mxu0 0.0
      %1788 = vmatprep.subr.mxu0 0.0
      %1789 = vmatpush1.xpose.msra.mxu0 0.0
      %1790 = vmatprep.subr.mxu0 0.0
      %1791 = vmatpush1.xpose.msra.mxu0 0.0
      %1792 = vmatprep.subr.mxu0 0.0
      %1793 = vmatpush1.xpose.msra.mxu0 0.0
      %1794 = vmatprep.subr.mxu0 0.0
      %1795 = vmatpush1.xpose.msra.mxu0 0.0
      %1796 = vmatprep.subr.mxu0 0.0
      %1797 = vmatpush1.xpose.msra.mxu0 0.0
      %1798 = vmatprep.subr.mxu0 0.0
      %1799 = vmatpush1.xpose.msra.mxu0 0.0
      %1800 = vmatprep.subr.mxu0 0.0
      %1801 = vmatpush1.xpose.msra.mxu0 0.0
      %1802 = vmatprep.mubr.f32.mxu0 0.0
      %1803 = vmatmul.mubr.f32.gmra.mrb[0].mxu0 %v1734
      %v1804 = vpop.f32.mrb[0].mxu0
      %v1805 = vadd.f32 0.0, %v1804
      %v1806 = vpop.f32.mrb[0].mxu0
      %1807 = vdwg.mxu0
      %v1808 = vsel %vm1116, %v1805, -inf
      %1809 = vmax.xlane.f32.xlu0 %v1808
      %v1810 = vpop.xlane.xlu0 %1809
      %v1811 = vsub.f32 %v1805, %v1810
      %v1812 = vmul.f32 %v1811, 1.442695
      %v1813 = vpow.pop %v1812
      %v1814 = vsel %vm1116, %v1813, 0.0
      %1815 = vadd.xlane.f32.xlu0 %v1814
      %v1816 = vpop.xlane.xlu0 %1815
      %v1817 = vrcp.pop %v1816
      %v1818 = vmul.f32 %v1813, %v1817
      %1819 = vrot.lane.b32.xlu0 %v1731, 64
      %v1820 = vpop.permute.xlu0 %1819
      %v1822 = vsel %vm1130, %v1818, 0
      %v1824 = vsel %vm1134, %v1820, 0
      %1826 = vmatprep.subr.mxu0 0.0
      %1827 = vmatpush1.msra.mxu0 %v1824
      %1828 = vmatprep.subr.mxu0 0.0
      %1829 = vmatpush1.msra.mxu0 0.0
      %1830 = vmatprep.subr.mxu0 0.0
      %1831 = vmatpush1.msra.mxu0 0.0
      %1832 = vmatprep.subr.mxu0 0.0
      %1833 = vmatpush1.msra.mxu0 0.0
      %1834 = vmatprep.subr.mxu0 0.0
      %1835 = vmatpush1.msra.mxu0 0.0
      %1836 = vmatprep.subr.mxu0 0.0
      %1837 = vmatpush1.msra.mxu0 0.0
      %1838 = vmatprep.subr.mxu0 0.0
      %1839 = vmatpush1.msra.mxu0 0.0
      %1840 = vmatprep.subr.mxu0 0.0
      %1841 = vmatpush1.msra.mxu0 0.0
      %1842 = vmatprep.subr.mxu0 0.0
      %1843 = vmatpush1.msra.mxu0 0.0
      %1844 = vmatprep.subr.mxu0 0.0
      %1845 = vmatpush1.msra.mxu0 0.0
      %1846 = vmatprep.subr.mxu0 0.0
      %1847 = vmatpush1.msra.mxu0 0.0
      %1848 = vmatprep.subr.mxu0 0.0
      %1849 = vmatpush1.msra.mxu0 0.0
      %1850 = vmatprep.subr.mxu0 0.0
      %1851 = vmatpush1.msra.mxu0 0.0
      %1852 = vmatprep.subr.mxu0 0.0
      %1853 = vmatpush1.msra.mxu0 0.0
      %1854 = vmatprep.subr.mxu0 0.0
      %1855 = vmatpush1.msra.mxu0 0.0
      %1856 = vmatprep.subr.mxu0 0.0
      %1857 = vmatpush1.msra.mxu0 0.0
      %1858 = vmatprep.subr.mxu0 0.0
      %1859 = vmatpush1.msra.mxu0 0.0
      %1860 = vmatprep.subr.mxu0 0.0
      %1861 = vmatpush1.msra.mxu0 0.0
      %1862 = vmatprep.subr.mxu0 0.0
      %1863 = vmatpush1.msra.mxu0 0.0
      %1864 = vmatprep.subr.mxu0 0.0
      %1865 = vmatpush1.msra.mxu0 0.0
      %1866 = vmatprep.subr.mxu0 0.0
      %1867 = vmatpush1.msra.mxu0 0.0
      %1868 = vmatprep.subr.mxu0 0.0
      %1869 = vmatpush1.msra.mxu0 0.0
      %1870 = vmatprep.subr.mxu0 0.0
      %1871 = vmatpush1.msra.mxu0 0.0
      %1872 = vmatprep.subr.mxu0 0.0
      %1873 = vmatpush1.msra.mxu0 0.0
      %1874 = vmatprep.subr.mxu0 0.0
      %1875 = vmatpush1.msra.mxu0 0.0
      %1876 = vmatprep.subr.mxu0 0.0
      %1877 = vmatpush1.msra.mxu0 0.0
      %1878 = vmatprep.subr.mxu0 0.0
      %1879 = vmatpush1.msra.mxu0 0.0
      %1880 = vmatprep.subr.mxu0 0.0
      %1881 = vmatpush1.msra.mxu0 0.0
      %1882 = vmatprep.subr.mxu0 0.0
      %1883 = vmatpush1.msra.mxu0 0.0
      %1884 = vmatprep.subr.mxu0 0.0
      %1885 = vmatpush1.msra.mxu0 0.0
      %1886 = vmatprep.subr.mxu0 0.0
      %1887 = vmatpush1.msra.mxu0 0.0
      %1888 = vmatprep.subr.mxu0 0.0
      %1889 = vmatpush1.msra.mxu0 0.0
      %1890 = vmatprep.mubr.f32.mxu0 0.0
      %1891 = vmatmul.mubr.f32.gmra.mrb[0].mxu0 %v1822
      %v1892 = vpop.f32.mrb[0].mxu0
      %v1893 = vadd.f32 0.0, %v1892
      %v1894 = vpop.f32.mrb[0].mxu0
      %1895 = vdwg.mxu0
      %1896 = vrot.lane.b32.xlu0 %v1727, 120
      %v1897 = vpop.permute.xlu0 %1896
      %1898 = vrot.lane.b32.xlu0 %v1731, 88
      %v1899 = vpop.permute.xlu0 %1898
      %v1900 = vsel %vm1040, %v1897, 0
      %v1902 = vsel %vm1040, %v1899, 0
      %1904 = vmatprep.subr.mxu0 0.0
      %1905 = vmatpush1.xpose.msra.mxu0 %v1902
      %1906 = vmatprep.subr.mxu0 0.0
      %1907 = vmatpush1.xpose.msra.mxu0 0.0
      %1908 = vmatprep.subr.mxu0 0.0
      %1909 = vmatpush1.xpose.msra.mxu0 0.0
      %1910 = vmatprep.subr.mxu0 0.0
      %1911 = vmatpush1.xpose.msra.mxu0 0.0
      %1912 = vmatprep.subr.mxu0 0.0
      %1913 = vmatpush1.xpose.msra.mxu0 0.0
      %1914 = vmatprep.subr.mxu0 0.0
      %1915 = vmatpush1.xpose.msra.mxu0 0.0
      %1916 = vmatprep.subr.mxu0 0.0
      %1917 = vmatpush1.xpose.msra.mxu0 0.0
      %1918 = vmatprep.subr.mxu0 0.0
      %1919 = vmatpush1.xpose.msra.mxu0 0.0
      %1920 = vmatprep.subr.mxu0 0.0
      %1921 = vmatpush1.xpose.msra.mxu0 0.0
      %1922 = vmatprep.subr.mxu0 0.0
      %1923 = vmatpush1.xpose.msra.mxu0 0.0
      %1924 = vmatprep.subr.mxu0 0.0
      %1925 = vmatpush1.xpose.msra.mxu0 0.0
      %1926 = vmatprep.subr.mxu0 0.0
      %1927 = vmatpush1.xpose.msra.mxu0 0.0
      %1928 = vmatprep.subr.mxu0 0.0
      %1929 = vmatpush1.xpose.msra.mxu0 0.0
      %1930 = vmatprep.subr.mxu0 0.0
      %1931 = vmatpush1.xpose.msra.mxu0 0.0
      %1932 = vmatprep.subr.mxu0 0.0
      %1933 = vmatpush1.xpose.msra.mxu0 0.0
      %1934 = vmatprep.subr.mxu0 0.0
      %1935 = vmatpush1.xpose.msra.mxu0 0.0
      %1936 = vmatprep.subr.mxu0 0.0
      %1937 = vmatpush1.xpose.msra.mxu0 0.0
      %1938 = vmatprep.subr.mxu0 0.0
      %1939 = vmatpush1.xpose.msra.mxu0 0.0
      %1940 = vmatprep.subr.mxu0 0.0
      %1941 = vmatpush1.xpose.msra.mxu0 0.0
      %1942 = vmatprep.subr.mxu0 0.0
      %1943 = vmatpush1.xpose.msra.mxu0 0.0
      %1944 = vmatprep.subr.mxu0 0.0
      %1945 = vmatpush1.xpose.msra.mxu0 0.0
      %1946 = vmatprep.subr.mxu0 0.0
      %1947 = vmatpush1.xpose.msra.mxu0 0.0
      %1948 = vmatprep.subr.mxu0 0.0
      %1949 = vmatpush1.xpose.msra.mxu0 0.0
      %1950 = vmatprep.subr.mxu0 0.0
      %1951 = vmatpush1.xpose.msra.mxu0 0.0
      %1952 = vmatprep.subr.mxu0 0.0
      %1953 = vmatpush1.xpose.msra.mxu0 0.0
      %1954 = vmatprep.subr.mxu0 0.0
      %1955 = vmatpush1.xpose.msra.mxu0 0.0
      %1956 = vmatprep.subr.mxu0 0.0
      %1957 = vmatpush1.xpose.msra.mxu0 0.0
      %1958 = vmatprep.subr.mxu0 0.0
      %1959 = vmatpush1.xpose.msra.mxu0 0.0
      %1960 = vmatprep.subr.mxu0 0.0
      %1961 = vmatpush1.xpose.msra.mxu0 0.0
      %1962 = vmatprep.subr.mxu0 0.0
      %1963 = vmatpush1.xpose.msra.mxu0 0.0
      %1964 = vmatprep.subr.mxu0 0.0
      %1965 = vmatpush1.xpose.msra.mxu0 0.0
      %1966 = vmatprep.subr.mxu0 0.0
      %1967 = vmatpush1.xpose.msra.mxu0 0.0
      %1968 = vmatprep.mubr.f32.mxu0 0.0
      %1969 = vmatmul.mubr.f32.gmra.mrb[0].mxu0 %v1900
      %v1970 = vpop.f32.mrb[0].mxu0
      %v1971 = vadd.f32 0.0, %v1970
      %v1972 = vpop.f32.mrb[0].mxu0
      %1973 = vdwg.mxu0
      %v1974 = vsel %vm1116, %v1971, -inf
      %1975 = vmax.xlane.f32.xlu0 %v1974
      %v1976 = vpop.xlane.xlu0 %1975
      %v1977 = vsub.f32 %v1971, %v1976
      %v1978 = vmul.f32 %v1977, 1.442695
      %v1979 = vpow.pop %v1978
      %v1980 = vsel %vm1116, %v1979, 0.0
      %1981 = vadd.xlane.f32.xlu0 %v1980
      %v1982 = vpop.xlane.xlu0 %1981
      %v1983 = vrcp.pop %v1982
      %v1984 = vmul.f32 %v1979, %v1983
      %1985 = vrot.lane.b32.xlu0 %v1731, 56
      %v1986 = vpop.permute.xlu0 %1985
      %v1988 = vsel %vm1130, %v1984, 0
      %v1990 = vsel %vm1134, %v1986, 0
      %1992 = vmatprep.subr.mxu0 0.0
      %1993 = vmatpush1.msra.mxu0 %v1990
      %1994 = vmatprep.subr.mxu0 0.0
      %1995 = vmatpush1.msra.mxu0 0.0
      %1996 = vmatprep.subr.mxu0 0.0
      %1997 = vmatpush1.msra.mxu0 0.0
      %1998 = vmatprep.subr.mxu0 0.0
      %1999 = vmatpush1.msra.mxu0 0.0
      %2000 = vmatprep.subr.mxu0 0.0
      %2001 = vmatpush1.msra.mxu0 0.0
      %2002 = vmatprep.subr.mxu0 0.0
      %2003 = vmatpush1.msra.mxu0 0.0
      %2004 = vmatprep.subr.mxu0 0.0
      %2005 = vmatpush1.msra.mxu0 0.0
      %2006 = vmatprep.subr.mxu0 0.0
      %2007 = vmatpush1.msra.mxu0 0.0
      %2008 = vmatprep.subr.mxu0 0.0
      %2009 = vmatpush1.msra.mxu0 0.0
      %2010 = vmatprep.subr.mxu0 0.0
      %2011 = vmatpush1.msra.mxu0 0.0
      %2012 = vmatprep.subr.mxu0 0.0
      %2013 = vmatpush1.msra.mxu0 0.0
      %2014 = vmatprep.subr.mxu0 0.0
      %2015 = vmatpush1.msra.mxu0 0.0
      %2016 = vmatprep.subr.mxu0 0.0
      %2017 = vmatpush1.msra.mxu0 0.0
      %2018 = vmatprep.subr.mxu0 0.0
      %2019 = vmatpush1.msra.mxu0 0.0
      %2020 = vmatprep.subr.mxu0 0.0
      %2021 = vmatpush1.msra.mxu0 0.0
      %2022 = vmatprep.subr.mxu0 0.0
      %2023 = vmatpush1.msra.mxu0 0.0
      %2024 = vmatprep.subr.mxu0 0.0
      %2025 = vmatpush1.msra.mxu0 0.0
      %2026 = vmatprep.subr.mxu0 0.0
      %2027 = vmatpush1.msra.mxu0 0.0
      %2028 = vmatprep.subr.mxu0 0.0
      %2029 = vmatpush1.msra.mxu0 0.0
      %2030 = vmatprep.subr.mxu0 0.0
      %2031 = vmatpush1.msra.mxu0 0.0
      %2032 = vmatprep.subr.mxu0 0.0
      %2033 = vmatpush1.msra.mxu0 0.0
      %2034 = vmatprep.subr.mxu0 0.0
      %2035 = vmatpush1.msra.mxu0 0.0
      %2036 = vmatprep.subr.mxu0 0.0
      %2037 = vmatpush1.msra.mxu0 0.0
      %2038 = vmatprep.subr.mxu0 0.0
      %2039 = vmatpush1.msra.mxu0 0.0
      %2040 = vmatprep.subr.mxu0 0.0
      %2041 = vmatpush1.msra.mxu0 0.0
      %2042 = vmatprep.subr.mxu0 0.0
      %2043 = vmatpush1.msra.mxu0 0.0
      %2044 = vmatprep.subr.mxu0 0.0
      %2045 = vmatpush1.msra.mxu0 0.0
      %2046 = vmatprep.subr.mxu0 0.0
      %2047 = vmatpush1.msra.mxu0 0.0
      %2048 = vmatprep.subr.mxu0 0.0
      %2049 = vmatpush1.msra.mxu0 0.0
      %2050 = vmatprep.subr.mxu0 0.0
      %2051 = vmatpush1.msra.mxu0 0.0
      %2052 = vmatprep.subr.mxu0 0.0
      %2053 = vmatpush1.msra.mxu0 0.0
      %2054 = vmatprep.subr.mxu0 0.0
      %2055 = vmatpush1.msra.mxu0 0.0
      %2056 = vmatprep.mubr.f32.mxu0 0.0
      %2057 = vmatmul.mubr.f32.gmra.mrb[0].mxu0 %v1988
      %v2058 = vpop.f32.mrb[0].mxu0
      %v2059 = vadd.f32 0.0, %v2058
      %v2060 = vpop.f32.mrb[0].mxu0
      %2061 = vdwg.mxu0
      %2062 = vrot.lane.b32.xlu0 %v1727, 112
      %v2063 = vpop.permute.xlu0 %2062
      %2064 = vrot.lane.b32.xlu0 %v1731, 80
      %v2065 = vpop.permute.xlu0 %2064
      %v2066 = vsel %vm1040, %v2063, 0
      %v2068 = vsel %vm1040, %v2065, 0
      %2070 = vmatprep.subr.mxu0 0.0
      %2071 = vmatpush1.xpose.msra.mxu0 %v2068
      %2072 = vmatprep.subr.mxu0 0.0
      %2073 = vmatpush1.xpose.msra.mxu0 0.0
      %2074 = vmatprep.subr.mxu0 0.0
      %2075 = vmatpush1.xpose.msra.mxu0 0.0
      %2076 = vmatprep.subr.mxu0 0.0
      %2077 = vmatpush1.xpose.msra.mxu0 0.0
      %2078 = vmatprep.subr.mxu0 0.0
      %2079 = vmatpush1.xpose.msra.mxu0 0.0
      %2080 = vmatprep.subr.mxu0 0.0
      %2081 = vmatpush1.xpose.msra.mxu0 0.0
      %2082 = vmatprep.subr.mxu0 0.0
      %2083 = vmatpush1.xpose.msra.mxu0 0.0
      %2084 = vmatprep.subr.mxu0 0.0
      %2085 = vmatpush1.xpose.msra.mxu0 0.0
      %2086 = vmatprep.subr.mxu0 0.0
      %2087 = vmatpush1.xpose.msra.mxu0 0.0
      %2088 = vmatprep.subr.mxu0 0.0
      %2089 = vmatpush1.xpose.msra.mxu0 0.0
      %2090 = vmatprep.subr.mxu0 0.0
      %2091 = vmatpush1.xpose.msra.mxu0 0.0
      %2092 = vmatprep.subr.mxu0 0.0
      %2093 = vmatpush1.xpose.msra.mxu0 0.0
      %2094 = vmatprep.subr.mxu0 0.0
      %2095 = vmatpush1.xpose.msra.mxu0 0.0
      %2096 = vmatprep.subr.mxu0 0.0
      %2097 = vmatpush1.xpose.msra.mxu0 0.0
      %2098 = vmatprep.subr.mxu0 0.0
      %2099 = vmatpush1.xpose.msra.mxu0 0.0
      %2100 = vmatprep.subr.mxu0 0.0
      %2101 = vmatpush1.xpose.msra.mxu0 0.0
      %2102 = vmatprep.subr.mxu0 0.0
      %2103 = vmatpush1.xpose.msra.mxu0 0.0
      %2104 = vmatprep.subr.mxu0 0.0
      %2105 = vmatpush1.xpose.msra.mxu0 0.0
      %2106 = vmatprep.subr.mxu0 0.0
      %2107 = vmatpush1.xpose.msra.mxu0 0.0
      %2108 = vmatprep.subr.mxu0 0.0
      %2109 = vmatpush1.xpose.msra.mxu0 0.0
      %2110 = vmatprep.subr.mxu0 0.0
      %2111 = vmatpush1.xpose.msra.mxu0 0.0
      %2112 = vmatprep.subr.mxu0 0.0
      %2113 = vmatpush1.xpose.msra.mxu0 0.0
      %2114 = vmatprep.subr.mxu0 0.0
      %2115 = vmatpush1.xpose.msra.mxu0 0.0
      %2116 = vmatprep.subr.mxu0 0.0
      %2117 = vmatpush1.xpose.msra.mxu0 0.0
      %2118 = vmatprep.subr.mxu0 0.0
      %2119 = vmatpush1.xpose.msra.mxu0 0.0
      %2120 = vmatprep.subr.mxu0 0.0
      %2121 = vmatpush1.xpose.msra.mxu0 0.0
      %2122 = vmatprep.subr.mxu0 0.0
      %2123 = vmatpush1.xpose.msra.mxu0 0.0
      %2124 = vmatprep.subr.mxu0 0.0
      %2125 = vmatpush1.xpose.msra.mxu0 0.0
      %2126 = vmatprep.subr.mxu0 0.0
      %2127 = vmatpush1.xpose.msra.mxu0 0.0
      %2128 = vmatprep.subr.mxu0 0.0
      %2129 = vmatpush1.xpose.msra.mxu0 0.0
      %2130 = vmatprep.subr.mxu0 0.0
      %2131 = vmatpush1.xpose.msra.mxu0 0.0
      %2132 = vmatprep.subr.mxu0 0.0
      %2133 = vmatpush1.xpose.msra.mxu0 0.0
      %2134 = vmatprep.mubr.f32.mxu0 0.0
      %2135 = vmatmul.mubr.f32.gmra.mrb[0].mxu0 %v2066
      %v2136 = vpop.f32.mrb[0].mxu0
      %v2137 = vadd.f32 0.0, %v2136
      %v2138 = vpop.f32.mrb[0].mxu0
      %2139 = vdwg.mxu0
      %v2140 = vsel %vm1116, %v2137, -inf
      %2141 = vmax.xlane.f32.xlu0 %v2140
      %v2142 = vpop.xlane.xlu0 %2141
      %v2143 = vsub.f32 %v2137, %v2142
      %v2144 = vmul.f32 %v2143, 1.442695
      %v2145 = vpow.pop %v2144
      %v2146 = vsel %vm1116, %v2145, 0.0
      %2147 = vadd.xlane.f32.xlu0 %v2146
      %v2148 = vpop.xlane.xlu0 %2147
      %v2149 = vrcp.pop %v2148
      %v2150 = vmul.f32 %v2145, %v2149
      %2151 = vrot.lane.b32.xlu0 %v1731, 48
      %v2152 = vpop.permute.xlu0 %2151
      %v2154 = vsel %vm1130, %v2150, 0
      %v2156 = vsel %vm1134, %v2152, 0
      %2158 = vmatprep.subr.mxu0 0.0
      %2159 = vmatpush1.msra.mxu0 %v2156
      %2160 = vmatprep.subr.mxu0 0.0
      %2161 = vmatpush1.msra.mxu0 0.0
      %2162 = vmatprep.subr.mxu0 0.0
      %2163 = vmatpush1.msra.mxu0 0.0
      %2164 = vmatprep.subr.mxu0 0.0
      %2165 = vmatpush1.msra.mxu0 0.0
      %2166 = vmatprep.subr.mxu0 0.0
      %2167 = vmatpush1.msra.mxu0 0.0
      %2168 = vmatprep.subr.mxu0 0.0
      %2169 = vmatpush1.msra.mxu0 0.0
      %2170 = vmatprep.subr.mxu0 0.0
      %2171 = vmatpush1.msra.mxu0 0.0
      %2172 = vmatprep.subr.mxu0 0.0
      %2173 = vmatpush1.msra.mxu0 0.0
      %2174 = vmatprep.subr.mxu0 0.0
      %2175 = vmatpush1.msra.mxu0 0.0
      %2176 = vmatprep.subr.mxu0 0.0
      %2177 = vmatpush1.msra.mxu0 0.0
      %2178 = vmatprep.subr.mxu0 0.0
      %2179 = vmatpush1.msra.mxu0 0.0
      %2180 = vmatprep.subr.mxu0 0.0
      %2181 = vmatpush1.msra.mxu0 0.0
      %2182 = vmatprep.subr.mxu0 0.0
      %2183 = vmatpush1.msra.mxu0 0.0
      %2184 = vmatprep.subr.mxu0 0.0
      %2185 = vmatpush1.msra.mxu0 0.0
      %2186 = vmatprep.subr.mxu0 0.0
      %2187 = vmatpush1.msra.mxu0 0.0
      %2188 = vmatprep.subr.mxu0 0.0
      %2189 = vmatpush1.msra.mxu0 0.0
      %2190 = vmatprep.subr.mxu0 0.0
      %2191 = vmatpush1.msra.mxu0 0.0
      %2192 = vmatprep.subr.mxu0 0.0
      %2193 = vmatpush1.msra.mxu0 0.0
      %2194 = vmatprep.subr.mxu0 0.0
      %2195 = vmatpush1.msra.mxu0 0.0
      %2196 = vmatprep.subr.mxu0 0.0
      %2197 = vmatpush1.msra.mxu0 0.0
      %2198 = vmatprep.subr.mxu0 0.0
      %2199 = vmatpush1.msra.mxu0 0.0
      %2200 = vmatprep.subr.mxu0 0.0
      %2201 = vmatpush1.msra.mxu0 0.0
      %2202 = vmatprep.subr.mxu0 0.0
      %2203 = vmatpush1.msra.mxu0 0.0
      %2204 = vmatprep.subr.mxu0 0.0
      %2205 = vmatpush1.msra.mxu0 0.0
      %2206 = vmatprep.subr.mxu0 0.0
      %2207 = vmatpush1.msra.mxu0 0.0
      %2208 = vmatprep.subr.mxu0 0.0
      %2209 = vmatpush1.msra.mxu0 0.0
      %2210 = vmatprep.subr.mxu0 0.0
      %2211 = vmatpush1.msra.mxu0 0.0
      %2212 = vmatprep.subr.mxu0 0.0
      %2213 = vmatpush1.msra.mxu0 0.0
      %2214 = vmatprep.subr.mxu0 0.0
      %2215 = vmatpush1.msra.mxu0 0.0
      %2216 = vmatprep.subr.mxu0 0.0
      %2217 = vmatpush1.msra.mxu0 0.0
      %2218 = vmatprep.subr.mxu0 0.0
      %2219 = vmatpush1.msra.mxu0 0.0
      %2220 = vmatprep.subr.mxu0 0.0
      %2221 = vmatpush1.msra.mxu0 0.0
      %2222 = vmatprep.mubr.f32.mxu0 0.0
      %2223 = vmatmul.mubr.f32.gmra.mrb[0].mxu0 %v2154
      %v2224 = vpop.f32.mrb[0].mxu0
      %v2225 = vadd.f32 0.0, %v2224
      %v2226 = vpop.f32.mrb[0].mxu0
      %2227 = vdwg.mxu0
      %2228 = vrot.lane.b32.xlu0 %v1727, 104
      %v2229 = vpop.permute.xlu0 %2228
      %2230 = vrot.lane.b32.xlu0 %v1731, 72
      %v2231 = vpop.permute.xlu0 %2230
      %v2232 = vsel %vm1040, %v2229, 0
      %v2234 = vsel %vm1040, %v2231, 0
      %2236 = vmatprep.subr.mxu0 0.0
      %2237 = vmatpush1.xpose.msra.mxu0 %v2234
      %2238 = vmatprep.subr.mxu0 0.0
      %2239 = vmatpush1.xpose.msra.mxu0 0.0
      %2240 = vmatprep.subr.mxu0 0.0
      %2241 = vmatpush1.xpose.msra.mxu0 0.0
      %2242 = vmatprep.subr.mxu0 0.0
      %2243 = vmatpush1.xpose.msra.mxu0 0.0
      %2244 = vmatprep.subr.mxu0 0.0
      %2245 = vmatpush1.xpose.msra.mxu0 0.0
      %2246 = vmatprep.subr.mxu0 0.0
      %2247 = vmatpush1.xpose.msra.mxu0 0.0
      %2248 = vmatprep.subr.mxu0 0.0
      %2249 = vmatpush1.xpose.msra.mxu0 0.0
      %2250 = vmatprep.subr.mxu0 0.0
      %2251 = vmatpush1.xpose.msra.mxu0 0.0
      %2252 = vmatprep.subr.mxu0 0.0
      %2253 = vmatpush1.xpose.msra.mxu0 0.0
      %2254 = vmatprep.subr.mxu0 0.0
      %2255 = vmatpush1.xpose.msra.mxu0 0.0
      %2256 = vmatprep.subr.mxu0 0.0
      %2257 = vmatpush1.xpose.msra.mxu0 0.0
      %2258 = vmatprep.subr.mxu0 0.0
      %2259 = vmatpush1.xpose.msra.mxu0 0.0
      %2260 = vmatprep.subr.mxu0 0.0
      %2261 = vmatpush1.xpose.msra.mxu0 0.0
      %2262 = vmatprep.subr.mxu0 0.0
      %2263 = vmatpush1.xpose.msra.mxu0 0.0
      %2264 = vmatprep.subr.mxu0 0.0
      %2265 = vmatpush1.xpose.msra.mxu0 0.0
      %2266 = vmatprep.subr.mxu0 0.0
      %2267 = vmatpush1.xpose.msra.mxu0 0.0
      %2268 = vmatprep.subr.mxu0 0.0
      %2269 = vmatpush1.xpose.msra.mxu0 0.0
      %2270 = vmatprep.subr.mxu0 0.0
      %2271 = vmatpush1.xpose.msra.mxu0 0.0
      %2272 = vmatprep.subr.mxu0 0.0
      %2273 = vmatpush1.xpose.msra.mxu0 0.0
      %2274 = vmatprep.subr.mxu0 0.0
      %2275 = vmatpush1.xpose.msra.mxu0 0.0
      %2276 = vmatprep.subr.mxu0 0.0
      %2277 = vmatpush1.xpose.msra.mxu0 0.0
      %2278 = vmatprep.subr.mxu0 0.0
      %2279 = vmatpush1.xpose.msra.mxu0 0.0
      %2280 = vmatprep.subr.mxu0 0.0
      %2281 = vmatpush1.xpose.msra.mxu0 0.0
      %2282 = vmatprep.subr.mxu0 0.0
      %2283 = vmatpush1.xpose.msra.mxu0 0.0
      %2284 = vmatprep.subr.mxu0 0.0
      %2285 = vmatpush1.xpose.msra.mxu0 0.0
      %2286 = vmatprep.subr.mxu0 0.0
      %2287 = vmatpush1.xpose.msra.mxu0 0.0
      %2288 = vmatprep.subr.mxu0 0.0
      %2289 = vmatpush1.xpose.msra.mxu0 0.0
      %2290 = vmatprep.subr.mxu0 0.0
      %2291 = vmatpush1.xpose.msra.mxu0 0.0
      %2292 = vmatprep.subr.mxu0 0.0
      %2293 = vmatpush1.xpose.msra.mxu0 0.0
      %2294 = vmatprep.subr.mxu0 0.0
      %2295 = vmatpush1.xpose.msra.mxu0 0.0
      %2296 = vmatprep.subr.mxu0 0.0
      %2297 = vmatpush1.xpose.msra.mxu0 0.0
      %2298 = vmatprep.subr.mxu0 0.0
      %2299 = vmatpush1.xpose.msra.mxu0 0.0
      %2300 = vmatprep.mubr.f32.mxu0 0.0
      %2301 = vmatmul.mubr.f32.gmra.mrb[0].mxu0 %v2232
      %v2302 = vpop.f32.mrb[0].mxu0
      %v2303 = vadd.f32 0.0, %v2302
      %v2304 = vpop.f32.mrb[0].mxu0
      %2305 = vdwg.mxu0
      %v2306 = vsel %vm1116, %v2303, -inf
      %2307 = vmax.xlane.f32.xlu0 %v2306
      %v2308 = vpop.xlane.xlu0 %2307
      %v2309 = vsub.f32 %v2303, %v2308
      %v2310 = vmul.f32 %v2309, 1.442695
      %v2311 = vpow.pop %v2310
      %v2312 = vsel %vm1116, %v2311, 0.0
      %2313 = vadd.xlane.f32.xlu0 %v2312
      %v2314 = vpop.xlane.xlu0 %2313
      %v2315 = vrcp.pop %v2314
      %v2316 = vmul.f32 %v2311, %v2315
      %2317 = vrot.lane.b32.xlu0 %v1731, 40
      %v2318 = vpop.permute.xlu0 %2317
      %v2320 = vsel %vm1130, %v2316, 0
      %v2322 = vsel %vm1134, %v2318, 0
      %2324 = vmatprep.subr.mxu0 0.0
      %2325 = vmatpush1.msra.mxu0 %v2322
      %2326 = vmatprep.subr.mxu0 0.0
      %2327 = vmatpush1.msra.mxu0 0.0
      %2328 = vmatprep.subr.mxu0 0.0
      %2329 = vmatpush1.msra.mxu0 0.0
      %2330 = vmatprep.subr.mxu0 0.0
      %2331 = vmatpush1.msra.mxu0 0.0
      %2332 = vmatprep.subr.mxu0 0.0
      %2333 = vmatpush1.msra.mxu0 0.0
      %2334 = vmatprep.subr.mxu0 0.0
      %2335 = vmatpush1.msra.mxu0 0.0
      %2336 = vmatprep.subr.mxu0 0.0
      %2337 = vmatpush1.msra.mxu0 0.0
      %2338 = vmatprep.subr.mxu0 0.0
      %2339 = vmatpush1.msra.mxu0 0.0
      %2340 = vmatprep.subr.mxu0 0.0
      %2341 = vmatpush1.msra.mxu0 0.0
      %2342 = vmatprep.subr.mxu0 0.0
      %2343 = vmatpush1.msra.mxu0 0.0
      %2344 = vmatprep.subr.mxu0 0.0
      %2345 = vmatpush1.msra.mxu0 0.0
      %2346 = vmatprep.subr.mxu0 0.0
      %2347 = vmatpush1.msra.mxu0 0.0
      %2348 = vmatprep.subr.mxu0 0.0
      %2349 = vmatpush1.msra.mxu0 0.0
      %2350 = vmatprep.subr.mxu0 0.0
      %2351 = vmatpush1.msra.mxu0 0.0
      %2352 = vmatprep.subr.mxu0 0.0
      %2353 = vmatpush1.msra.mxu0 0.0
      %2354 = vmatprep.subr.mxu0 0.0
      %2355 = vmatpush1.msra.mxu0 0.0
      %2356 = vmatprep.subr.mxu0 0.0
      %2357 = vmatpush1.msra.mxu0 0.0
      %2358 = vmatprep.subr.mxu0 0.0
      %2359 = vmatpush1.msra.mxu0 0.0
      %2360 = vmatprep.subr.mxu0 0.0
      %2361 = vmatpush1.msra.mxu0 0.0
      %2362 = vmatprep.subr.mxu0 0.0
      %2363 = vmatpush1.msra.mxu0 0.0
      %2364 = vmatprep.subr.mxu0 0.0
      %2365 = vmatpush1.msra.mxu0 0.0
      %2366 = vmatprep.subr.mxu0 0.0
      %2367 = vmatpush1.msra.mxu0 0.0
      %2368 = vmatprep.subr.mxu0 0.0
      %2369 = vmatpush1.msra.mxu0 0.0
      %2370 = vmatprep.subr.mxu0 0.0
      %2371 = vmatpush1.msra.mxu0 0.0
      %2372 = vmatprep.subr.mxu0 0.0
      %2373 = vmatpush1.msra.mxu0 0.0
      %2374 = vmatprep.subr.mxu0 0.0
      %2375 = vmatpush1.msra.mxu0 0.0
      %2376 = vmatprep.subr.mxu0 0.0
      %2377 = vmatpush1.msra.mxu0 0.0
      %2378 = vmatprep.subr.mxu0 0.0
      %2379 = vmatpush1.msra.mxu0 0.0
      %2380 = vmatprep.subr.mxu0 0.0
      %2381 = vmatpush1.msra.mxu0 0.0
      %2382 = vmatprep.subr.mxu0 0.0
      %2383 = vmatpush1.msra.mxu0 0.0
      %2384 = vmatprep.subr.mxu0 0.0
      %2385 = vmatpush1.msra.mxu0 0.0
      %2386 = vmatprep.subr.mxu0 0.0
      %2387 = vmatpush1.msra.mxu0 0.0
      %2388 = vmatprep.mubr.f32.mxu0 0.0
      %2389 = vmatmul.mubr.f32.gmra.mrb[0].mxu0 %v2320
      %v2390 = vpop.f32.mrb[0].mxu0
      %v2391 = vadd.f32 0.0, %v2390
      %v2392 = vpop.f32.mrb[0].mxu0
      %2393 = vdwg.mxu0
      %2395 = vrot.lane.b32.xlu0 %v2059, 8
      %v2396 = vpop.permute.xlu0 %2395
      %2399 = vrot.lane.b32.xlu0 %v2225, 16
      %v2400 = vpop.permute.xlu0 %2399
      %2403 = vrot.lane.b32.xlu0 %v2391, 24
      %v2404 = vpop.permute.xlu0 %2403
      %v2406 = vsel %vm1040, %v1893, %v2396
      %v2407 = vsel %vm1718, %v2406, %v2400
      %v2408 = vsel %vm1720, %v2407, %v2404
      %v2410 = vrot.slane %v2408, 3
      %v2412 = vsel %vm1134, %v1721, %v2410
      %v2413 = vpack.c.bf16 %v2410, %v2412
      %v2414 = vld [vmem:[%s851] sm:$0xf]
      %v2415 = vld [vmem:[%s851 + $0x4] sm:$0xf]
      %v2416 = vld [vmem:[%s851 + $0x8] sm:$0xf]
      %v2417 = vld [vmem:[%s851 + $0xc] sm:$0xf]
      %v2418 = vld [vmem:[%s854] sm:$0x1]
      %v2420 = vlaneseq
      %v2421 = vshrl.u32 %v2420, 7
      %v2422 = vsub.s32 0, %v2421
      %v2423 = vrot.slane %v2418, %v2422
      %v2429 = vunpack.c.l.b16 %v2414
      %v2430 = vunpack.c.l.b16 %v2415
      %v2431 = vunpack.c.l.b16 %v2416
      %v2432 = vunpack.c.l.b16 %v2417
      %v2433 = vpack.c.b16 %v2430, %v2429
      %v2434 = vpack.c.b16 %v2432, %v2431
      %v2438 = vsel %vm923, %v2413, 0
      %2440 = vmatprep.subr.bf16.mxu0 0
      %2441 = vmatpush1.bf16.msra.mxu0 %v2433
      %2442 = vmatprep.subr.bf16.mxu0 0
      %2443 = vmatpush1.bf16.msra.mxu0 %v2434
      %2444 = vmatprep.subr.bf16.mxu0 0
      %2445 = vmatpush1.bf16.msra.mxu0 0
      %2446 = vmatprep.subr.bf16.mxu0 0
      %2447 = vmatpush1.bf16.msra.mxu0 0
      %2448 = vmatprep.subr.bf16.mxu0 0
      %2449 = vmatpush1.bf16.msra.mxu0 0
      %2450 = vmatprep.subr.bf16.mxu0 0
      %2451 = vmatpush1.bf16.msra.mxu0 0
      %2452 = vmatprep.subr.bf16.mxu0 0
      %2453 = vmatpush1.bf16.msra.mxu0 0
      %2454 = vmatprep.subr.bf16.mxu0 0
      %2455 = vmatpush1.bf16.msra.mxu0 0
      %2456 = vmatprep.subr.bf16.mxu0 0
      %2457 = vmatpush1.bf16.msra.mxu0 0
      %2458 = vmatprep.subr.bf16.mxu0 0
      %2459 = vmatpush1.bf16.msra.mxu0 0
      %2460 = vmatprep.subr.bf16.mxu0 0
      %2461 = vmatpush1.bf16.msra.mxu0 0
      %2462 = vmatprep.subr.bf16.mxu0 0
      %2463 = vmatpush1.bf16.msra.mxu0 0
      %2464 = vmatprep.subr.bf16.mxu0 0
      %2465 = vmatpush1.bf16.msra.mxu0 0
      %2466 = vmatprep.subr.bf16.mxu0 0
      %2467 = vmatpush1.bf16.msra.mxu0 0
      %2468 = vmatprep.subr.bf16.mxu0 0
      %2469 = vmatpush1.bf16.msra.mxu0 0
      %2470 = vmatprep.subr.bf16.mxu0 0
      %2471 = vmatpush1.bf16.msra.mxu0 0
      %2472 = vmatprep.mubr.bf16.mxu0 0
      %2473 = vmatmul.mubr.bf16.gmra.mrb[0].mxu0 %v2438
      %v2474 = vpop.f32.mrb[0].mxu0
      %v2475 = vadd.f32 %v2423, %v2474
      %v2476 = vpop.f32.mrb[0].mxu0
      %v2477 = vpop.f32.mrb[0].mxu0
      %v2478 = vadd.f32 %v2423, %v2477
      %v2479 = vpop.f32.mrb[0].mxu0
      %2480 = vdwg.mxu0
      %v2481 = vadd.f32 %v919, %v2475
      %v2482 = vadd.f32 %v920, %v2478
      %v2483 = vld [vmem:[%s894] sm:$0x1]
      %v2485 = vlaneseq
      %v2486 = vshrl.u32 %v2485, 7
      %v2487 = vsub.s32 0, %v2486
      %v2488 = vrot.slane %v2483, %v2487
      %v2490 = vmul.f32 %v2481, %v2488
      %v2491 = vmul.f32 %v2482, %v2488
      %v2492 = vsel %vm923, %v2490, 0.0
      %2493 = vadd.xlane.f32.xlu0 %v2492
      %v2494 = vpop.xlane.xlu0 %2493
      %v2495 = vsel %vm927, %v2491, 0.0
      %2496 = vadd.xlane.f32.xlu0 %v2495
      %v2497 = vpop.xlane.xlu0 %2496
      %v2498 = vld [vmem:[%s897] sm:$0x1]
      %v2500 = vlaneseq
      %v2501 = vshrl.u32 %v2500, 7
      %v2502 = vsub.s32 0, %v2501
      %v2503 = vrot.slane %v2498, %v2502
      %v2505 = vadd.f32 %v2494, %v2503
      %v2506 = vadd.f32 %v2497, %v2503
      %vm2507 = vcmp.ge.f32.partialorder %v2505, 0.0
      %vm2508 = vcmp.ge.f32.partialorder %v2506, 0.0
      %v2509 = vsel %vm2507, 1, 0
      %v2510 = vsel %vm2508, 1, 0
      %v2511 = vcvt.s32.f32 %v2509
      %v2512 = vcvt.s32.f32 %v2510
      %p2513 = scmp.ge.s32.totalorder %s32, 2
      %s2514 = scalar_select %p2513, 1, 0
      %s2515 = scvt.s32.f32 %s2514
      %v2516 = vstv %s2515
      %v2517 = vmul.f32 %v2516, %v2511
      %v2518 = vmul.f32 %v2516, %v2512
      %s2519 = ssub.f32 1.0, %s2515
      %v2520 = vstv %s2519
      %v2521 = vadd.f32 %v2517, %v2520
      %v2522 = vadd.f32 %v2518, %v2520
      %v2523 = vpack.c.bf16 %v2482, %v2481
      %v2524 = vld [vmem:[%s881] sm:$0xf]
      %v2525 = vld [vmem:[%s881 + $0x4] sm:$0xf]
      %v2526 = vld [vmem:[%s881 + $0x8] sm:$0xf]
      %v2527 = vld [vmem:[%s881 + $0xc] sm:$0xf]
      %v2528 = vld [vmem:[%s884] sm:$0x1]
      %v2530 = vlaneseq
      %v2531 = vshrl.u32 %v2530, 7
      %v2532 = vsub.s32 0, %v2531
      %v2533 = vrot.slane %v2528, %v2532
      %v2539 = vunpack.c.l.b16 %v2524
      %v2540 = vunpack.c.l.b16 %v2525
      %v2541 = vunpack.c.l.b16 %v2526
      %v2542 = vunpack.c.l.b16 %v2527
      %v2543 = vpack.c.b16 %v2540, %v2539
      %v2544 = vpack.c.b16 %v2542, %v2541
      %v2548 = vsel %vm923, %v2523, 0
      %2550 = vmatprep.subr.bf16.mxu0 0
      %2551 = vmatpush1.bf16.msra.mxu0 %v2543
      %2552 = vmatprep.subr.bf16.mxu0 0
      %2553 = vmatpush1.bf16.msra.mxu0 %v2544
      %2554 = vmatprep.subr.bf16.mxu0 0
      %2555 = vmatpush1.bf16.msra.mxu0 0
      %2556 = vmatprep.subr.bf16.mxu0 0
      %2557 = vmatpush1.bf16.msra.mxu0 0
      %2558 = vmatprep.subr.bf16.mxu0 0
      %2559 = vmatpush1.bf16.msra.mxu0 0
      %2560 = vmatprep.subr.bf16.mxu0 0
      %2561 = vmatpush1.bf16.msra.mxu0 0
      %2562 = vmatprep.subr.bf16.mxu0 0
      %2563 = vmatpush1.bf16.msra.mxu0 0
      %2564 = vmatprep.subr.bf16.mxu0 0
      %2565 = vmatpush1.bf16.msra.mxu0 0
      %2566 = vmatprep.subr.bf16.mxu0 0
      %2567 = vmatpush1.bf16.msra.mxu0 0
      %2568 = vmatprep.subr.bf16.mxu0 0
      %2569 = vmatpush1.bf16.msra.mxu0 0
      %2570 = vmatprep.subr.bf16.mxu0 0
      %2571 = vmatpush1.bf16.msra.mxu0 0
      %2572 = vmatprep.subr.bf16.mxu0 0
      %2573 = vmatpush1.bf16.msra.mxu0 0
      %2574 = vmatprep.subr.bf16.mxu0 0
      %2575 = vmatpush1.bf16.msra.mxu0 0
      %2576 = vmatprep.subr.bf16.mxu0 0
      %2577 = vmatpush1.bf16.msra.mxu0 0
      %2578 = vmatprep.subr.bf16.mxu0 0
      %2579 = vmatpush1.bf16.msra.mxu0 0
      %2580 = vmatprep.subr.bf16.mxu0 0
      %2581 = vmatpush1.bf16.msra.mxu0 0
      %2582 = vmatprep.mubr.bf16.mxu0 0
      %2583 = vmatmul.mubr.bf16.gmra.mrb[0].mxu0 %v2548
      %v2584 = vpop.f32.mrb[0].mxu0
      %v2585 = vadd.f32 %v2533, %v2584
      %v2586 = vpop.f32.mrb[0].mxu0
      %v2587 = vpop.f32.mrb[0].mxu0
      %v2588 = vadd.f32 %v2533, %v2587
      %v2589 = vpop.f32.mrb[0].mxu0
      %2590 = vdwg.mxu0
      %v2591 = vmax.f32 %v2585, 0.0
      %v2592 = vmax.f32 %v2588, 0.0
      %v2593 = vpack.c.bf16 %v2592, %v2591
      %v2594 = vld [vmem:[%s888] sm:$0xf]
      %v2595 = vld [vmem:[%s891] sm:$0x1]
      %v2597 = vlaneseq
      %v2598 = vshrl.u32 %v2597, 7
      %v2599 = vsub.s32 0, %v2598
      %v2600 = vrot.slane %v2595, %v2599
      %v2603 = vsel %vm1040, %v2593, 0
      %vm2605 = vcmask 1043456
      %v2607 = vsel %vm2605, %v2594, 0
      %2609 = vmatprep.subr.bf16.mxu0 0
      %2610 = vmatpush1.bf16.msra.mxu0 %v2607
      %2611 = vmatprep.subr.bf16.mxu0 0
      %2612 = vmatpush1.bf16.msra.mxu0 0
      %2613 = vmatprep.subr.bf16.mxu0 0
      %2614 = vmatpush1.bf16.msra.mxu0 0
      %2615 = vmatprep.subr.bf16.mxu0 0
      %2616 = vmatpush1.bf16.msra.mxu0 0
      %2617 = vmatprep.subr.bf16.mxu0 0
      %2618 = vmatpush1.bf16.msra.mxu0 0
      %2619 = vmatprep.subr.bf16.mxu0 0
      %2620 = vmatpush1.bf16.msra.mxu0 0
      %2621 = vmatprep.subr.bf16.mxu0 0
      %2622 = vmatpush1.bf16.msra.mxu0 0
      %2623 = vmatprep.subr.bf16.mxu0 0
      %2624 = vmatpush1.bf16.msra.mxu0 0
      %2625 = vmatprep.subr.bf16.mxu0 0
      %2626 = vmatpush1.bf16.msra.mxu0 0
      %2627 = vmatprep.subr.bf16.mxu0 0
      %2628 = vmatpush1.bf16.msra.mxu0 0
      %2629 = vmatprep.subr.bf16.mxu0 0
      %2630 = vmatpush1.bf16.msra.mxu0 0
      %2631 = vmatprep.subr.bf16.mxu0 0
      %2632 = vmatpush1.bf16.msra.mxu0 0
      %2633 = vmatprep.subr.bf16.mxu0 0
      %2634 = vmatpush1.bf16.msra.mxu0 0
      %2635 = vmatprep.subr.bf16.mxu0 0
      %2636 = vmatpush1.bf16.msra.mxu0 0
      %2637 = vmatprep.subr.bf16.mxu0 0
      %2638 = vmatpush1.bf16.msra.mxu0 0
      %2639 = vmatprep.subr.bf16.mxu0 0
      %2640 = vmatpush1.bf16.msra.mxu0 0
      %2641 = vmatprep.mubr.bf16.mxu0 0
      %2642 = vmatmul.mubr.bf16.gmra.mrb[0].mxu0 %v2603
      %v2643 = vpop.f32.mrb[0].mxu0
      %v2644 = vadd.f32 %v2600, %v2643
      %v2645 = vpop.f32.mrb[0].mxu0
      %v2646 = vpop.f32.mrb[0].mxu0
      %v2647 = vadd.f32 %v2600, %v2646
      %v2648 = vpop.f32.mrb[0].mxu0
      %2649 = vdwg.mxu0
      %v2650 = vmul.f32 %v2644, 0.1
      %v2651 = vmul.f32 %v2647, 0.1
      %v2652 = vld [vmem:[%s857] sm:$0x1]
      %v2653 = vld [vmem:[%s860] sm:$0x1]
      %v2654 = vsel %vm923, %v2481, 0.0
      %2655 = vadd.xlane.f32.xlu0 %v2654
      %v2656 = vpop.xlane.xlu0 %2655
      %v2657 = vsel %vm927, %v2482, 0.0
      %2658 = vadd.xlane.f32.xlu0 %v2657
      %v2659 = vpop.xlane.xlu0 %2658
      %v2660 = vmul.f32 %v2656, %v931
      %v2661 = vmul.f32 %v2659, %v931
      %v2662 = vsub.f32 %v2481, %v2660
      %v2663 = vsub.f32 %v2482, %v2661
      %v2664 = vmul.f32 %v2662, %v2662
      %v2665 = vmul.f32 %v2663, %v2663
      %v2666 = vsel %vm923, %v2664, 0.0
      %2667 = vadd.xlane.f32.xlu0 %v2666
      %v2668 = vpop.xlane.xlu0 %2667
      %v2669 = vsel %vm927, %v2665, 0.0
      %2670 = vadd.xlane.f32.xlu0 %v2669
      %v2671 = vpop.xlane.xlu0 %2670
      %v2672 = vmul.f32 %v2668, %v931
      %v2673 = vmul.f32 %v2671, %v931
      %v2674 = vadd.f32 %v2672, 1e-06
      %v2675 = vadd.f32 %v2673, 1e-06
      %v2676 = vrsqrt.pop %v2674
      %v2677 = vrsqrt.pop %v2675
      %v2678 = vmul.f32 %v2662, %v2676
      %v2679 = vmul.f32 %v2663, %v2677
      %v2681 = vlaneseq
      %v2682 = vshrl.u32 %v2681, 7
      %v2683 = vsub.s32 0, %v2682
      %v2684 = vrot.slane %v2652, %v2683
      %v2686 = vmul.f32 %v2678, %v2684
      %v2687 = vmul.f32 %v2679, %v2684
      %v2689 = vlaneseq
      %v2690 = vshrl.u32 %v2689, 7
      %v2691 = vsub.s32 0, %v2690
      %v2692 = vrot.slane %v2653, %v2691
      %v2694 = vadd.f32 %v2686, %v2692
      %v2695 = vadd.f32 %v2687, %v2692
      %v2696 = vpack.c.bf16 %v2695, %v2694
      %v2697 = vld [vmem:[%s865] sm:$0xf]
      %v2698 = vld [vmem:[%s865 + $0x4] sm:$0xf]
      %v2699 = vld [vmem:[%s865 + $0x8] sm:$0xf]
      %v2700 = vld [vmem:[%s865 + $0xc] sm:$0xf]
      %v2701 = vld [vmem:[%s868] sm:$0x1]
      %v2703 = vlaneseq
      %v2704 = vshrl.u32 %v2703, 7
      %v2705 = vsub.s32 0, %v2704
      %v2706 = vrot.slane %v2701, %v2705
      %v2712 = vunpack.c.l.b16 %v2697
      %v2713 = vunpack.c.l.b16 %v2698
      %v2714 = vunpack.c.l.b16 %v2699
      %v2715 = vunpack.c.l.b16 %v2700
      %v2716 = vpack.c.b16 %v2713, %v2712
      %v2717 = vpack.c.b16 %v2715, %v2714
      %v2721 = vsel %vm923, %v2696, 0
      %2723 = vmatprep.subr.bf16.mxu0 0
      %2724 = vmatpush1.bf16.msra.mxu0 %v2716
      %2725 = vmatprep.subr.bf16.mxu0 0
      %2726 = vmatpush1.bf16.msra.mxu0 %v2717
      %2727 = vmatprep.subr.bf16.mxu0 0
      %2728 = vmatpush1.bf16.msra.mxu0 0
      %2729 = vmatprep.subr.bf16.mxu0 0
      %2730 = vmatpush1.bf16.msra.mxu0 0
      %2731 = vmatprep.subr.bf16.mxu0 0
      %2732 = vmatpush1.bf16.msra.mxu0 0
      %2733 = vmatprep.subr.bf16.mxu0 0
      %2734 = vmatpush1.bf16.msra.mxu0 0
      %2735 = vmatprep.subr.bf16.mxu0 0
      %2736 = vmatpush1.bf16.msra.mxu0 0
      %2737 = vmatprep.subr.bf16.mxu0 0
      %2738 = vmatpush1.bf16.msra.mxu0 0
      %2739 = vmatprep.subr.bf16.mxu0 0
      %2740 = vmatpush1.bf16.msra.mxu0 0
      %2741 = vmatprep.subr.bf16.mxu0 0
      %2742 = vmatpush1.bf16.msra.mxu0 0
      %2743 = vmatprep.subr.bf16.mxu0 0
      %2744 = vmatpush1.bf16.msra.mxu0 0
      %2745 = vmatprep.subr.bf16.mxu0 0
      %2746 = vmatpush1.bf16.msra.mxu0 0
      %2747 = vmatprep.subr.bf16.mxu0 0
      %2748 = vmatpush1.bf16.msra.mxu0 0
      %2749 = vmatprep.subr.bf16.mxu0 0
      %2750 = vmatpush1.bf16.msra.mxu0 0
      %2751 = vmatprep.subr.bf16.mxu0 0
      %2752 = vmatpush1.bf16.msra.mxu0 0
      %2753 = vmatprep.subr.bf16.mxu0 0
      %2754 = vmatpush1.bf16.msra.mxu0 0
      %2755 = vmatprep.mubr.bf16.mxu0 0
      %2756 = vmatmul.mubr.bf16.gmra.mrb[0].mxu0 %v2721
      %v2757 = vpop.f32.mrb[0].mxu0
      %v2758 = vadd.f32 %v2706, %v2757
      %v2759 = vpop.f32.mrb[0].mxu0
      %v2760 = vpop.f32.mrb[0].mxu0
      %v2761 = vadd.f32 %v2706, %v2760
      %v2762 = vpop.f32.mrb[0].mxu0
      %2763 = vdwg.mxu0
      %v2764 = vmul.f32 %v2758, %v2758
      %v2765 = vmul.f32 %v2761, %v2761
      %v2766 = vmul.f32 %v2758, %v2764
      %v2767 = vmul.f32 %v2761, %v2765
      %v2768 = vmul.f32 %v2766, 0.044715
      %v2769 = vmul.f32 %v2767, 0.044715
      %v2770 = vadd.f32 %v2758, %v2768
      %v2771 = vadd.f32 %v2761, %v2769
      %v2772 = vmul.f32 %v2770, 0.7978846
      %v2773 = vmul.f32 %v2771, 0.7978846
      %v2774 = vtanh.pop %v2772
      %v2775 = vtanh.pop %v2773
      %v2776 = vadd.f32 %v2774, 1.0
      %v2777 = vadd.f32 %v2775, 1.0
      %v2778 = vmul.f32 %v2776, 0.5
      %v2779 = vmul.f32 %v2777, 0.5
      %v2780 = vmul.f32 %v2758, %v2778
      %v2781 = vmul.f32 %v2761, %v2779
      %v2782 = vpack.c.bf16 %v2781, %v2780
      %v2783 = vld [vmem:[%s873] sm:$0xf]
      %v2784 = vld [vmem:[%s873 + $0x4] sm:$0xf]
      %v2785 = vld [vmem:[%s873 + $0x8] sm:$0xf]
      %v2786 = vld [vmem:[%s873 + $0xc] sm:$0xf]
      %v2787 = vld [vmem:[%s873 + $0x10] sm:$0xf]
      %v2788 = vld [vmem:[%s873 + $0x14] sm:$0xf]
      %v2789 = vld [vmem:[%s873 + $0x18] sm:$0xf]
      %v2790 = vld [vmem:[%s873 + $0x1c] sm:$0xf]
      %v2791 = vld [vmem:[%s873 + $0x20] sm:$0xf]
      %v2792 = vld [vmem:[%s873 + $0x24] sm:$0xf]
      %v2793 = vld [vmem:[%s873 + $0x28] sm:$0xf]
      %v2794 = vld [vmem:[%s873 + $0x2c] sm:$0xf]
      %v2795 = vld [vmem:[%s873 + $0x30] sm:$0xf]
      %v2796 = vld [vmem:[%s873 + $0x34] sm:$0xf]
      %v2797 = vld [vmem:[%s873 + $0x38] sm:$0xf]
      %v2798 = vld [vmem:[%s873 + $0x3c] sm:$0xf]
      %v2799 = vld [vmem:[%s876] sm:$0x1]
      %v2801 = vlaneseq
      %v2802 = vshrl.u32 %v2801, 7
      %v2803 = vsub.s32 0, %v2802
      %v2804 = vrot.slane %v2799, %v2803
      %v2822 = vunpack.c.l.b16 %v2783
      %v2823 = vunpack.c.l.b16 %v2784
      %v2824 = vunpack.c.l.b16 %v2785
      %v2825 = vunpack.c.l.b16 %v2786
      %v2826 = vunpack.c.l.b16 %v2787
      %v2827 = vunpack.c.l.b16 %v2788
      %v2828 = vunpack.c.l.b16 %v2789
      %v2829 = vunpack.c.l.b16 %v2790
      %v2830 = vunpack.c.l.b16 %v2791
      %v2831 = vunpack.c.l.b16 %v2792
      %v2832 = vunpack.c.l.b16 %v2793
      %v2833 = vunpack.c.l.b16 %v2794
      %v2834 = vunpack.c.l.b16 %v2795
      %v2835 = vunpack.c.l.b16 %v2796
      %v2836 = vunpack.c.l.b16 %v2797
      %v2837 = vunpack.c.l.b16 %v2798
      %v2838 = vpack.c.b16 %v2823, %v2822
      %v2839 = vpack.c.b16 %v2825, %v2824
      %v2840 = vpack.c.b16 %v2827, %v2826
      %v2841 = vpack.c.b16 %v2829, %v2828
      %v2842 = vpack.c.b16 %v2831, %v2830
      %v2843 = vpack.c.b16 %v2833, %v2832
      %v2844 = vpack.c.b16 %v2835, %v2834
      %v2845 = vpack.c.b16 %v2837, %v2836
      %2854 = vmatprep.subr.bf16.mxu0 0
      %2855 = vmatpush1.bf16.msra.mxu0 %v2838
      %2856 = vmatprep.subr.bf16.mxu0 0
      %2857 = vmatpush1.bf16.msra.mxu0 %v2839
      %2858 = vmatprep.subr.bf16.mxu0 0
      %2859 = vmatpush1.bf16.msra.mxu0 %v2840
      %2860 = vmatprep.subr.bf16.mxu0 0
      %2861 = vmatpush1.bf16.msra.mxu0 %v2841
      %2862 = vmatprep.subr.bf16.mxu0 0
      %2863 = vmatpush1.bf16.msra.mxu0 %v2842
      %2864 = vmatprep.subr.bf16.mxu0 0
      %2865 = vmatpush1.bf16.msra.mxu0 %v2843
      %2866 = vmatprep.subr.bf16.mxu0 0
      %2867 = vmatpush1.bf16.msra.mxu0 %v2844
      %2868 = vmatprep.subr.bf16.mxu0 0
      %2869 = vmatpush1.bf16.msra.mxu0 %v2845
      %2870 = vmatprep.subr.bf16.mxu0 0
      %2871 = vmatpush1.bf16.msra.mxu0 0
      %2872 = vmatprep.subr.bf16.mxu0 0
      %2873 = vmatpush1.bf16.msra.mxu0 0
      %2874 = vmatprep.subr.bf16.mxu0 0
      %2875 = vmatpush1.bf16.msra.mxu0 0
      %2876 = vmatprep.subr.bf16.mxu0 0
      %2877 = vmatpush1.bf16.msra.mxu0 0
      %2878 = vmatprep.subr.bf16.mxu0 0
      %2879 = vmatpush1.bf16.msra.mxu0 0
      %2880 = vmatprep.subr.bf16.mxu0 0
      %2881 = vmatpush1.bf16.msra.mxu0 0
      %2882 = vmatprep.subr.bf16.mxu0 0
      %2883 = vmatpush1.bf16.msra.mxu0 0
      %2884 = vmatprep.subr.bf16.mxu0 0
      %2885 = vmatpush1.bf16.msra.mxu0 0
      %2886 = vmatprep.mubr.bf16.mxu0 0
      %2887 = vmatmul.mubr.bf16.gmra.mrb[0].mxu0 %v2782
      %v2888 = vpop.f32.mrb[0].mxu0
      %v2889 = vadd.f32 %v2804, %v2888
      %v2890 = vpop.f32.mrb[0].mxu0
      %v2891 = vpop.f32.mrb[0].mxu0
      %v2892 = vadd.f32 %v2804, %v2891
      %v2893 = vpop.f32.mrb[0].mxu0
      %2894 = vdwg.mxu0
      %2896 = vset.pattern.permute.xlu0 0
      %2897 = vperm.xlu0 %2896, %v2521
      %v2898 = vpop.permute.xlu0 %2897
      %2901 = vset.pattern.permute.xlu0 0
      %2902 = vperm.xlu0 %2901, %v2522
      %v2903 = vpop.permute.xlu0 %2902
      %v2905 = vmul.f32 %v2898, %v2889
      %v2906 = vmul.f32 %v2903, %v2892
      %v2907 = vadd.f32 %v2481, %v2905
      %v2908 = vadd.f32 %v2482, %v2906
      %v2909 = vadd.f32 %v2907, %v2650
      %v2910 = vadd.f32 %v2908, %v2651
      %2911 = vst.msk [vmem:[#allocation2] sm:$0xff] %vm923, %v2909
      %2912 = vst.msk [vmem:[#allocation2 + $0x8] sm:$0x3] %vm927, %v2910
      %2913 = vst.msk [vmem:[%s902] sm:$0xff] %vm923, %v2909
      %2914 = vst.msk [vmem:[%s902 + $0x8] sm:$0x3] %vm927, %v2910
      %v2915 = vlaneseq
      %v2916 = vand.u32 %v2915, 127
      %vm2917 = vcmp.eq.s32.totalorder %v2916, 0
      %2919 = vset.pattern.permute.xlu0 0
      %2920 = vperm.xlu0 %2919, %v2505
      %v2921 = vpop.permute.xlu0 %2920
      %2924 = vset.pattern.permute.xlu0 0
      %2925 = vperm.xlu0 %2924, %v2506
      %v2926 = vpop.permute.xlu0 %2925
      %v2928 = vsel %vm2917, %v2921, 0.0
      %v2929 = vsel %vm2917, %v2926, 0.0
      %vm2930 = vcmp.eq.s32.totalorder %v2916, 1
      %2932 = vset.pattern.permute.xlu0 0
      %2933 = vperm.xlu0 %2932, %v2511
      %v2934 = vpop.permute.xlu0 %2933
      %2937 = vset.pattern.permute.xlu0 0
      %2938 = vperm.xlu0 %2937, %v2512
      %v2939 = vpop.permute.xlu0 %2938
      %v2941 = vsel %vm2930, %v2934, 0.0
      %v2942 = vsel %vm2930, %v2939, 0.0
      %v2943 = vadd.f32 %v2928, %v2941
      %v2944 = vadd.f32 %v2929, %v2942
      %2945 = vst [vmem:[%s907] sm:$0xff] %v2943
      %2946 = vst [vmem:[%s907 + $0x8] sm:$0x3] %v2944
      %p2947 = scmp.lt.s32.totalorder %s32, 3
      %s2948 = scalar_select %p2947, %s32, 3
      %s2949 = smul.addr %s2948, 2
      %s2950 = smul.addr %s2949, 8
      %s2951 = scalar_lea.vmem %s19, %s2950
      %p2952 = scmp.lt.s32.totalorder %s32, 3
      %s2953 = scalar_select %p2952, %s32, 3
      %s2954 = smul.addr %s2953, 2
      %s2955 = smul.addr %s2954, 8
      %s2956 = scalar_lea.vmem %s20, %s2955
      // Predicated region
      $region101: #{vit21k_forward.6} parent=95 // pred_check
        %p2957 = pneg %p539
      $region102: #{vit21k_forward.6} parent=95 // pred_check_branch
        %2959 = sbr.rel (%p2957) target = $region104
      $region103: #{vit21k_forward.6} parent=95 // pred_region
        _
      $region104: #{vit21k_forward.6} parent=95 // pred_fallthru
        _
      // Predicated region
      $region105: #{vit21k_forward.6} parent=95 // pred_check
        %p2960 = pneg %p565
      $region106: #{vit21k_forward.6} parent=95 // pred_check_branch
        %2962 = sbr.rel (%p2960) target = $region108
      $region107: #{vit21k_forward.6} parent=95 // pred_region
        _
      $region108: #{vit21k_forward.6} parent=95 // pred_fallthru
        _
    $region96: #{vit21k_forward.6} parent=5 // pred_fallthru
      _
    %p2963 = scmp.le.s32.totalorder 2, %s27
    // Predicated region
    $region109: #{vit21k_forward.6} parent=5 // pred_check
      %p2964 = pneg %p2963
    $region110: #{vit21k_forward.6} parent=5 // pred_check_branch
      %2966 = sbr.rel (%p2964) target = $region112
    $region111: #{vit21k_forward.6} parent=5 // pred_region
      %s2967 = ssub.s32 %s27, 2
      // Predicated region
      $region113: #{vit21k_forward.6} parent=111 // pred_check
        %p2968 = pneg %p545
      $region114: #{vit21k_forward.6} parent=111 // pred_check_branch
        %2970 = sbr.rel (%p2968) target = $region116
      $region115: #{vit21k_forward.6} parent=111 // pred_region
        %p2971 = scmp.lt.s32.totalorder %s33, 3
        %s2972 = scalar_select %p2971, %s33, 3
        %s2973 = smul.addr %s2972, 2
        %s2974 = smul.addr %s2973, 8
        %s2975 = scalar_lea.vmem %s19, %s2974
      $region116: #{vit21k_forward.6} parent=111 // pred_fallthru
        _
      // Predicated region
      $region117: #{vit21k_forward.6} parent=111 // pred_check
        %p2976 = pneg %p571
      $region118: #{vit21k_forward.6} parent=111 // pred_check_branch
        %2978 = sbr.rel (%p2976) target = $region120
      $region119: #{vit21k_forward.6} parent=111 // pred_region
        %p2979 = scmp.lt.s32.totalorder %s33, 3
        %s2980 = scalar_select %p2979, %s33, 3
        %s2981 = smul.addr %s2980, 2
        %s2982 = smul.addr %s2981, 8
        %s2983 = scalar_lea.vmem %s20, %s2982
      $region120: #{vit21k_forward.6} parent=111 // pred_fallthru
        _
    $region112: #{vit21k_forward.6} parent=5 // pred_fallthru
      _
  $region6: #{vit21k_forward.6} parent=0 // loop_footer
    %s31 = sadd.s32 1, %s27
  $region7: #{vit21k_forward.6} parent=0 // loop_footer_branch
    %26 = sbr.rel target = $region3
  $region8: #{vit21k_forward.6} parent=0 // loop_exit
    _

</llo_original>
